<compile_context>
chip_gen: v5e
topology: v5e:2x2
jax: 0.10.0
libtpu: 0.0.40
codegen_flags: <defaults>
</compile_context>

<pallas_src>
import math
from functools import partial

import jax
import jax.numpy as jnp
from jax.experimental import pallas as pl
from jax.experimental.pallas import tpu as pltpu


# ---------------------------------------------------------------------------
# BlockSpec helpers
# ---------------------------------------------------------------------------
def _batch_spec(shape):
    """Block over the leading (batch) dim, full extent on the rest."""
    nd = len(shape)
    return pl.BlockSpec((None,) + tuple(shape[1:]),
                        lambda i, _n=nd: (i,) + (0,) * (_n - 1))


def _shared_spec(shape):
    """Full-array block, identical for every grid step (weights / biases)."""
    nd = len(shape)
    return pl.BlockSpec(tuple(shape), lambda i, _n=nd: (0,) * _n)


_COMPILER_PARAMS = pltpu.CompilerParams(dimension_semantics=("parallel",))


# ---------------------------------------------------------------------------
# Single fused kernel: patch-embed matmul + depth x TwoWayAttentionBlock + fc
# ---------------------------------------------------------------------------
def _fused_kernel(traj_ref, patch_ref,
                  img_w_ref, img_bias_ref, qtok_ref,
                  wq_ref, bq_ref, wkv_ref, bkv_ref, wo_ref, bo_ref,
                  ln_g_ref, ln_b_ref,
                  w1_ref, b1_ref, w2_ref, b2_ref,
                  fc_w_ref, fc_b_ref,
                  out_ref):
    f32 = jnp.float32
    E = wq_ref.shape[-1]

    def attention(idx, q, kv_srcs):
        # idx selects one Attention module.  wq / bq are pre-scaled by 1/sqrt(E)
        # at pack time, which matches torch's `scores / sqrt(embedding_dim)`
        # (num_heads is stored but unused by the reference Attention).
        wq = wq_ref[idx]; bq = bq_ref[idx]            # (E, E), (1, E)
        wkv = wkv_ref[idx]; bkv = bkv_ref[idx]        # (E, 2E), (1, 2E)
        wo = wo_ref[idx]; bo = bo_ref[idx]            # (E, E), (1, E)

        qp = jnp.dot(q, wq, preferred_element_type=f32) + bq        # (Sq, E)
        parts = []
        for src in kv_srcs:
            # Fused K/V projection: one wide matmul, split along lanes.
            kvp = jnp.dot(src, wkv, preferred_element_type=f32) + bkv   # (Nk, 2E)
            kp = kvp[:, :E]
            vp = kvp[:, E:]
            # scores = qp @ kp^T without materializing a transpose.
            s = jax.lax.dot_general(qp, kp, (((1,), (1,)), ((), ())),
                                    preferred_element_type=f32)      # (Sq, Nk)
            parts.append((s, vp))

        # Multi-source softmax (equivalent to softmax over the concatenation of all
        # key/value sources) — avoids an in-kernel concatenate along the sublane dim.
        m = jnp.max(parts[0][0], axis=-1, keepdims=True)
        for s, _ in parts[1:]:
            m = jnp.maximum(m, jnp.max(s, axis=-1, keepdims=True))
        num = None
        den = None
        for s, vp in parts:
            e = jnp.exp(s - m)
            d = jnp.sum(e, axis=-1, keepdims=True)
            c = jnp.dot(e, vp, preferred_element_type=f32)
            num = c if num is None else num + c
            den = d if den is None else den + d
        out = num * pl.reciprocal(den, approx=True)
        return jnp.dot(out, wo, preferred_element_type=f32) + bo

    def layernorm(idx, x):
        mean = jnp.mean(x, axis=-1, keepdims=True)
        c = x - mean
        var = jnp.mean(c * c, axis=-1, keepdims=True)
        return c * jax.lax.rsqrt(var + 1e-5) * ln_g_ref[idx] + ln_b_ref[idx]

    def mlp(l, x):
        h = jnp.dot(x, w1_ref[l], preferred_element_type=f32) + b1_ref[l]
        h = jnp.maximum(h, 0.0)
        return jnp.dot(h, w2_ref[l], preferred_element_type=f32) + b2_ref[l]

    # Conv3d patch embedding (im2col matmul) + (conv bias + image positional embedding)
    # pre-summed on the host into img_bias.
    keys = (jnp.dot(patch_ref[...], img_w_ref[...], preferred_element_type=f32)
            + img_bias_ref[...])                                     # (Nimg, E)
    queries = traj_ref[...]                                          # (S, E)
    query_token = qtok_ref[...]                                      # (1, E)

    depth = w1_ref.shape[0]
    for l in range(depth):                       # static unroll (depth is small)
        a = 4 * l                                # attention modules: self, t2i, i2t, q
        n = 5 * l                                # layernorms: norm1..norm5
        # self-attention (no residual in the reference) + norm1
        queries = layernorm(n + 0, attention(a + 0, queries, [queries]))
        # cross token->image + residual + norm2
        queries = layernorm(n + 1, queries + attention(a + 1, queries, [keys]))
        # MLP + residual + norm3
        queries = layernorm(n + 2, queries + mlp(l, queries))
        # cross image->token + residual + norm4
        keys = layernorm(n + 3, keys + attention(a + 2, keys, [queries]))
        # query-token attention over concat([queries, keys]) (split softmax) + norm5
        query_token = layernorm(n + 4, attention(a + 3, query_token, [queries, keys]))

    out_ref[...] = (jnp.dot(query_token, fc_w_ref[...], preferred_element_type=f32)
                    + fc_b_ref[...])                                  # (1, 3)


# ---------------------------------------------------------------------------
# Parameter initialization (deterministic, synthetic) + packing for the kernel
# ---------------------------------------------------------------------------
def init_params(key, traj_input_dim, img_channels, E, mlp_dim, depth, patch_size):
    keys = iter(jax.random.split(key, 512))

    def nrm(shape, scale=0.02):
        return (scale * jax.random.normal(next(keys), shape)).astype(jnp.float32)

    def attn_p():
        d = {n: nrm((E, E)) for n in ("wq", "wk", "wv", "wo")}
        d.update({n: nrm((1, E)) for n in ("bq", "bk", "bv", "bo")})
        return d

    def ln_p():
        return {"g": jnp.ones((1, E), jnp.float32), "b": jnp.zeros((1, E), jnp.float32)}

    params = {
        "query_token": nrm((1, 1, E), 1.0),
        "pe_gauss": nrm((3, E // 2), 1.0),          # PositionEmbeddingRandom3D buffer
        "order_embed": nrm((5, E), 1.0),            # nn.Embedding(5, E)
        # Conv3d(img_channels, E, k=p, stride=p, pad=p//2) as an im2col matmul:
        # weight reshaped from (E, C, p, p, p) -> (C*p^3, E)
        "img_w": nrm((img_channels * patch_size ** 3, E)),
        "img_b": nrm((1, E)),
        "fc_w": nrm((E, 3)),
        "fc_b": nrm((1, 3)),
        "layers": [],
    }
    # TODO(synk): self.traj_embed (Linear(traj_input_dim, E)) exists in __init__ but is
    # never used in the reference forward(), so it is omitted here.
    for _ in range(depth):
        params["layers"].append({
            "self_attn": attn_p(),
            "cross_t2i": attn_p(),
            "cross_i2t": attn_p(),
            "cross_q": attn_p(),
            "norm1": ln_p(), "norm2": ln_p(), "norm3": ln_p(),
            "norm4": ln_p(), "norm5": ln_p(),
            "mlp": {"w1": nrm((E, mlp_dim)), "b1": nrm((1, mlp_dim)),
                    "w2": nrm((mlp_dim, E)), "b2": nrm((1, E))},
        })
    return params


def pack_params(params):
    """Stack per-layer weights along a leading axis for the fused kernel."""
    E = params["fc_w"].shape[0]
    inv_scale = 1.0 / math.sqrt(E)                 # folded into q projection
    wq, bq, wkv, bkv, wo, bo = [], [], [], [], [], []
    ln_g, ln_b = [], []
    w1, b1, w2, b2 = [], [], [], []
    for lp in params["layers"]:
        for name in ("self_attn", "cross_t2i", "cross_i2t", "cross_q"):
            a = lp[name]
            wq.append(a["wq"] * inv_scale)
            bq.append(a["bq"] * inv_scale)
            wkv.append(jnp.concatenate([a["wk"], a["wv"]], axis=1))   # (E, 2E)
            bkv.append(jnp.concatenate([a["bk"], a["bv"]], axis=1))   # (1, 2E)
            wo.append(a["wo"]); bo.append(a["bo"])
        for name in ("norm1", "norm2", "norm3", "norm4", "norm5"):
            ln_g.append(lp[name]["g"])
            ln_b.append(lp[name]["b"])
        w1.append(lp["mlp"]["w1"]); b1.append(lp["mlp"]["b1"])
        w2.append(lp["mlp"]["w2"]); b2.append(lp["mlp"]["b2"])
    return {
        "wq": jnp.stack(wq),               # (depth*4, E, E)
        "bq": jnp.stack(bq),               # (depth*4, 1, E)
        "wkv": jnp.stack(wkv),             # (depth*4, E, 2E)
        "bkv": jnp.stack(bkv),             # (depth*4, 1, 2E)
        "wo": jnp.stack(wo),               # (depth*4, E, E)
        "bo": jnp.stack(bo),               # (depth*4, 1, E)
        "ln_g": jnp.stack(ln_g),           # (depth*5, 1, E)
        "ln_b": jnp.stack(ln_b),           # (depth*5, 1, E)
        "mlp_w1": jnp.stack(w1),           # (depth, E, H)
        "mlp_b1": jnp.stack(b1),           # (depth, 1, H)
        "mlp_w2": jnp.stack(w2),           # (depth, H, E)
        "mlp_b2": jnp.stack(b2),           # (depth, 1, E)
        "img_w": params["img_w"],
        "img_b": params["img_b"],
        "query_token": params["query_token"].reshape(1, E),
        "fc_w": params["fc_w"],
        "fc_b": params["fc_b"],
        "pe_gauss": params["pe_gauss"],
        "order_embed": params["order_embed"],
    }


# ---------------------------------------------------------------------------
# Forward pass: tiny glue in plain JAX, everything else in one fused Pallas call
# ---------------------------------------------------------------------------
def _pe_encoding(coords, gauss):
    c = 2.0 * coords - 1.0
    proj = 2.0 * math.pi * (c @ gauss)
    return jnp.concatenate([jnp.sin(proj), jnp.cos(proj)], axis=-1)


@partial(jax.jit, static_argnames=("patch_size",))
def two_way_transformer(packed, traj_seq, img, *, patch_size):
    B, C, Dz, Wy, Hx = img.shape                  # torch: b, c, d, w, h = img.shape
    E = packed["fc_w"].shape[0]

    # --- trajectory positional embedding (tiny elementwise glue) ---
    # torch: coords[...,0]/=w  coords[...,1]/=h  coords[...,2]/=d  with (d,h,w)=(Dz,Hx,Wy)
    div = jnp.array([Wy, Hx, Dz], dtype=jnp.float32)
    traj_pos = _pe_encoding(traj_seq.astype(jnp.float32) / div, packed["pe_gauss"])
    S = traj_seq.shape[1]
    traj_embeds = traj_pos + packed["order_embed"][:S][None, :, :]    # (B, S, E)

    # --- Conv3d patch embedding: im2col here, matmul fused into the kernel ---
    p = patch_size
    pad = p // 2
    imgp = jnp.pad(img, ((0, 0), (0, 0), (pad, pad), (pad, pad), (pad, pad)))
    Do = (Dz + 2 * pad - p) // p + 1
    Wo = (Wy + 2 * pad - p) // p + 1
    Ho = (Hx + 2 * pad - p) // p + 1
    assert imgp.shape[2] == Do * p and imgp.shape[3] == Wo * p and imgp.shape[4] == Ho * p, \
        "chosen sizes must tile exactly for the im2col reshape"
    patches = imgp.reshape(B, C, Do, p, Wo, p, Ho, p)
    patches = patches.transpose(0, 2, 4, 6, 1, 3, 5, 7).reshape(B, Do * Wo * Ho, C * p ** 3)

    # --- image positional embedding on the output grid, fused with the conv bias ---
    # torch forward(size): z=(i+0.5)/d, y=(j+0.5)/h, x=(k+0.5)/w on the conv-out grid.
    z = (jnp.arange(Do, dtype=jnp.float32) + 0.5) / Do
    y = (jnp.arange(Wo, dtype=jnp.float32) + 0.5) / Wo
    x = (jnp.arange(Ho, dtype=jnp.float32) + 0.5) / Ho
    grid_coords = jnp.stack(jnp.meshgrid(z, y, x, indexing="ij"), axis=-1)  # (Do,Wo,Ho,3)
    img_pos = _pe_encoding(grid_coords, packed["pe_gauss"]).reshape(-1, E)  # (Nimg, E)
    img_bias = img_pos + packed["img_b"]                                    # (Nimg, E)

    args = (traj_embeds, patches,
            packed["img_w"], img_bias, packed["query_token"],
            packed["wq"], packed["bq"], packed["wkv"], packed["bkv"],
            packed["wo"], packed["bo"],
            packed["ln_g"], packed["ln_b"],
            packed["mlp_w1"], packed["mlp_b1"], packed["mlp_w2"], packed["mlp_b2"],
            packed["fc_w"], packed["fc_b"])

    in_specs = ([_batch_spec(traj_embeds.shape), _batch_spec(patches.shape)]
                + [_shared_spec(a.shape) for a in args[2:]])

    out = pl.pallas_call(
        _fused_kernel,
        grid=(B,),
        in_specs=in_specs,
        out_specs=_batch_spec((B, 1, 3)),
        out_shape=jax.ShapeDtypeStruct((B, 1, 3), jnp.float32),
        compiler_params=_COMPILER_PARAMS,
    )(*args)
    return out[:, 0, :]                                            # (B, 3)


# ---------------------------------------------------------------------------
if __name__ == "__main__":
    # Small shapes consistent with the module
    B = 2            # batch
    C = 2            # img_input_channels
    D = 8            # cubic volume side (d = w = h = 8)
    E = 32           # embedding_dim
    NUM_HEADS = 2    # stored but unused by the reference Attention
    MLP_DIM = 64
    DEPTH = 2
    PATCH = 4        # patch_size -> 3x3x3 = 27 image tokens
    S = 5            # trajectory length (<= 5 for nn.Embedding(5, E))
    TRAJ_DIM = 3

    key = jax.random.PRNGKey(0)
    k_traj, k_img, k_par = jax.random.split(key, 3)
    traj_seq = jax.random.uniform(k_traj, (B, S, TRAJ_DIM), jnp.float32) * D
    img = jax.random.normal(k_img, (B, C, D, D, D), jnp.float32)

    params = init_params(k_par, TRAJ_DIM, C, E, MLP_DIM, DEPTH, PATCH)
    packed = pack_params(params)

    out = two_way_transformer(packed, traj_seq, img, patch_size=PATCH)
    out = jax.block_until_ready(out)
    assert out.shape == (B, 3) and out.dtype == jnp.float32
    assert bool(jnp.all(jnp.isfinite(out)))
    print("KERNEL_OK")
</pallas_src>

<mosaic_0001>
module attributes {stable_mosaic.version = 11 : i64} {
  func.func @_fused_kernel(%arg0: i32, %arg1: memref<1x5x32xf32, #tpu.memory_space<vmem>>, %arg2: memref<1x27x128xf32, #tpu.memory_space<vmem>>, %arg3: memref<128x32xf32, #tpu.memory_space<vmem>>, %arg4: memref<27x32xf32, #tpu.memory_space<vmem>>, %arg5: memref<1x32xf32, #tpu.memory_space<vmem>>, %arg6: memref<8x32x32xf32, #tpu.memory_space<vmem>>, %arg7: memref<8x1x32xf32, #tpu.memory_space<vmem>>, %arg8: memref<8x32x64xf32, #tpu.memory_space<vmem>>, %arg9: memref<8x1x64xf32, #tpu.memory_space<vmem>>, %arg10: memref<8x32x32xf32, #tpu.memory_space<vmem>>, %arg11: memref<8x1x32xf32, #tpu.memory_space<vmem>>, %arg12: memref<10x1x32xf32, #tpu.memory_space<vmem>>, %arg13: memref<10x1x32xf32, #tpu.memory_space<vmem>>, %arg14: memref<2x32x64xf32, #tpu.memory_space<vmem>>, %arg15: memref<2x1x64xf32, #tpu.memory_space<vmem>>, %arg16: memref<2x64x32xf32, #tpu.memory_space<vmem>>, %arg17: memref<2x1x32xf32, #tpu.memory_space<vmem>>, %arg18: memref<32x3xf32, #tpu.memory_space<vmem>>, %arg19: memref<1x3xf32, #tpu.memory_space<vmem>>, %arg20: memref<1x1x3xf32, #tpu.memory_space<vmem>>) attributes {dimension_semantics = [#tpu.dimension_semantics<parallel>], iteration_bounds = array<i64: 2>, scalar_prefetch = 0 : i64, scratch_operands = 0 : i64, tpu.core_type = #tpu.core_type<tc>, window_params = [{transform_indices = @transform_0, window_bounds = array<i64: 1, 5, 32>}, {transform_indices = @transform_1, window_bounds = array<i64: 1, 27, 128>}, {pipeline_mode = #tpu.pipeline_mode<synchronous>, transform_indices = @transform_2, window_bounds = array<i64: 128, 32>}, {pipeline_mode = #tpu.pipeline_mode<synchronous>, transform_indices = @transform_3, window_bounds = array<i64: 27, 32>}, {pipeline_mode = #tpu.pipeline_mode<synchronous>, transform_indices = @transform_4, window_bounds = array<i64: 1, 32>}, {pipeline_mode = #tpu.pipeline_mode<synchronous>, transform_indices = @transform_5, window_bounds = array<i64: 8, 32, 32>}, {pipeline_mode = #tpu.pipeline_mode<synchronous>, transform_indices = @transform_6, window_bounds = array<i64: 8, 1, 32>}, {pipeline_mode = #tpu.pipeline_mode<synchronous>, transform_indices = @transform_7, window_bounds = array<i64: 8, 32, 64>}, {pipeline_mode = #tpu.pipeline_mode<synchronous>, transform_indices = @transform_8, window_bounds = array<i64: 8, 1, 64>}, {pipeline_mode = #tpu.pipeline_mode<synchronous>, transform_indices = @transform_9, window_bounds = array<i64: 8, 32, 32>}, {pipeline_mode = #tpu.pipeline_mode<synchronous>, transform_indices = @transform_10, window_bounds = array<i64: 8, 1, 32>}, {pipeline_mode = #tpu.pipeline_mode<synchronous>, transform_indices = @transform_11, window_bounds = array<i64: 10, 1, 32>}, {pipeline_mode = #tpu.pipeline_mode<synchronous>, transform_indices = @transform_12, window_bounds = array<i64: 10, 1, 32>}, {pipeline_mode = #tpu.pipeline_mode<synchronous>, transform_indices = @transform_13, window_bounds = array<i64: 2, 32, 64>}, {pipeline_mode = #tpu.pipeline_mode<synchronous>, transform_indices = @transform_14, window_bounds = array<i64: 2, 1, 64>}, {pipeline_mode = #tpu.pipeline_mode<synchronous>, transform_indices = @transform_15, window_bounds = array<i64: 2, 64, 32>}, {pipeline_mode = #tpu.pipeline_mode<synchronous>, transform_indices = @transform_16, window_bounds = array<i64: 2, 1, 32>}, {pipeline_mode = #tpu.pipeline_mode<synchronous>, transform_indices = @transform_17, window_bounds = array<i64: 32, 3>}, {pipeline_mode = #tpu.pipeline_mode<synchronous>, transform_indices = @transform_18, window_bounds = array<i64: 1, 3>}, {transform_indices = @transform_19, window_bounds = array<i64: 1, 1, 3>}]} {
    %c0 = arith.constant 0 : index
    %c0_0 = arith.constant 0 : index
    %c0_1 = arith.constant 0 : index
    %0 = vector.load %arg2[%c0, %c0_0, %c0_1] : memref<1x27x128xf32, #tpu.memory_space<vmem>>, vector<1x27x128xf32>
    %1 = vector.shape_cast %0 : vector<1x27x128xf32> to vector<27x128xf32>
    %c0_2 = arith.constant 0 : index
    %c0_3 = arith.constant 0 : index
    %2 = vector.load %arg3[%c0_2, %c0_3] : memref<128x32xf32, #tpu.memory_space<vmem>>, vector<128x32xf32>
    %cst = arith.constant dense<0.000000e+00> : vector<27x32xf32>
    %3 = tpu.matmul %1, %2, %cst {dimension_numbers = #tpu.dot_dimension_numbers<[1], [0], [0], [1], [0, 0, 1, 1], [], []>} : vector<27x128xf32>, vector<128x32xf32>, vector<27x32xf32> -> vector<27x32xf32>
    %c0_4 = arith.constant 0 : index
    %c0_5 = arith.constant 0 : index
    %4 = vector.load %arg4[%c0_4, %c0_5] : memref<27x32xf32, #tpu.memory_space<vmem>>, vector<27x32xf32>
    %5 = arith.addf %3, %4 : vector<27x32xf32>
    %c0_6 = arith.constant 0 : index
    %c0_7 = arith.constant 0 : index
    %c0_8 = arith.constant 0 : index
    %6 = vector.load %arg1[%c0_6, %c0_7, %c0_8] : memref<1x5x32xf32, #tpu.memory_space<vmem>>, vector<1x5x32xf32>
    %7 = vector.shape_cast %6 : vector<1x5x32xf32> to vector<5x32xf32>
    %c0_9 = arith.constant 0 : index
    %c0_10 = arith.constant 0 : index
    %8 = vector.load %arg5[%c0_9, %c0_10] : memref<1x32xf32, #tpu.memory_space<vmem>>, vector<1x32xf32>
    %c0_11 = arith.constant 0 : index
    %c0_12 = arith.constant 0 : index
    %c0_13 = arith.constant 0 : index
    %9 = vector.load %arg6[%c0_11, %c0_12, %c0_13] : memref<8x32x32xf32, #tpu.memory_space<vmem>>, vector<1x32x32xf32>
    %10 = vector.shape_cast %9 : vector<1x32x32xf32> to vector<32x32xf32>
    %c0_14 = arith.constant 0 : index
    %c0_15 = arith.constant 0 : index
    %c0_16 = arith.constant 0 : index
    %11 = vector.load %arg7[%c0_14, %c0_15, %c0_16] : memref<8x1x32xf32, #tpu.memory_space<vmem>>, vector<1x1x32xf32>
    %12 = vector.shape_cast %11 : vector<1x1x32xf32> to vector<1x32xf32>
    %c0_17 = arith.constant 0 : index
    %c0_18 = arith.constant 0 : index
    %c0_19 = arith.constant 0 : index
    %13 = vector.load %arg8[%c0_17, %c0_18, %c0_19] : memref<8x32x64xf32, #tpu.memory_space<vmem>>, vector<1x32x64xf32>
    %14 = vector.shape_cast %13 : vector<1x32x64xf32> to vector<32x64xf32>
    %c0_20 = arith.constant 0 : index
    %c0_21 = arith.constant 0 : index
    %c0_22 = arith.constant 0 : index
    %15 = vector.load %arg9[%c0_20, %c0_21, %c0_22] : memref<8x1x64xf32, #tpu.memory_space<vmem>>, vector<1x1x64xf32>
    %16 = vector.shape_cast %15 : vector<1x1x64xf32> to vector<1x64xf32>
    %c0_23 = arith.constant 0 : index
    %c0_24 = arith.constant 0 : index
    %c0_25 = arith.constant 0 : index
    %17 = vector.load %arg10[%c0_23, %c0_24, %c0_25] : memref<8x32x32xf32, #tpu.memory_space<vmem>>, vector<1x32x32xf32>
    %18 = vector.shape_cast %17 : vector<1x32x32xf32> to vector<32x32xf32>
    %c0_26 = arith.constant 0 : index
    %c0_27 = arith.constant 0 : index
    %c0_28 = arith.constant 0 : index
    %19 = vector.load %arg11[%c0_26, %c0_27, %c0_28] : memref<8x1x32xf32, #tpu.memory_space<vmem>>, vector<1x1x32xf32>
    %20 = vector.shape_cast %19 : vector<1x1x32xf32> to vector<1x32xf32>
    %cst_29 = arith.constant dense<0.000000e+00> : vector<5x32xf32>
    %21 = tpu.matmul %7, %10, %cst_29 {dimension_numbers = #tpu.dot_dimension_numbers<[1], [0], [0], [1], [0, 0, 1, 1], [], []>} : vector<5x32xf32>, vector<32x32xf32>, vector<5x32xf32> -> vector<5x32xf32>
    %22 = vector.broadcast %12 : vector<1x32xf32> to vector<5x32xf32>
    %23 = arith.addf %21, %22 : vector<5x32xf32>
    %cst_30 = arith.constant dense<0.000000e+00> : vector<5x64xf32>
    %24 = tpu.matmul %7, %14, %cst_30 {dimension_numbers = #tpu.dot_dimension_numbers<[1], [0], [0], [1], [0, 0, 1, 1], [], []>} : vector<5x32xf32>, vector<32x64xf32>, vector<5x64xf32> -> vector<5x64xf32>
    %25 = vector.broadcast %16 : vector<1x64xf32> to vector<5x64xf32>
    %26 = arith.addf %24, %25 : vector<5x64xf32>
    %27 = vector.extract_strided_slice %26 {offsets = [0, 0], sizes = [5, 32], strides = [1, 1]} : vector<5x64xf32> to vector<5x32xf32>
    %28 = vector.extract_strided_slice %26 {offsets = [0, 32], sizes = [5, 32], strides = [1, 1]} : vector<5x64xf32> to vector<5x32xf32>
    %cst_31 = arith.constant dense<0.000000e+00> : vector<5x5xf32>
    %29 = tpu.matmul %23, %27, %cst_31 {dimension_numbers = #tpu.dot_dimension_numbers<[1], [1], [0], [0], [0, 0, 1, 0], [], []>} : vector<5x32xf32>, vector<5x32xf32>, vector<5x5xf32> -> vector<5x5xf32>
    %cst_32 = arith.constant dense<0xFF800000> : vector<5xf32>
    %30 = vector.multi_reduction <maximumf>, %29, %cst_32 [1] : vector<5x5xf32> to vector<5xf32>
    %31 = vector.shape_cast %30 : vector<5xf32> to vector<5x1xf32>
    %32 = vector.broadcast %31 : vector<5x1xf32> to vector<5x5xf32>
    %33 = arith.subf %29, %32 : vector<5x5xf32>
    %34 = math.exp %33 : vector<5x5xf32>
    %cst_33 = arith.constant dense<0.000000e+00> : vector<5xf32>
    %35 = vector.multi_reduction <add>, %34, %cst_33 [1] : vector<5x5xf32> to vector<5xf32>
    %36 = vector.shape_cast %35 : vector<5xf32> to vector<5x1xf32>
    %cst_34 = arith.constant dense<0.000000e+00> : vector<5x32xf32>
    %37 = tpu.matmul %34, %28, %cst_34 {dimension_numbers = #tpu.dot_dimension_numbers<[1], [0], [0], [1], [0, 0, 1, 1], [], []>} : vector<5x5xf32>, vector<5x32xf32>, vector<5x32xf32> -> vector<5x32xf32>
    %38 = tpu.reciprocal %36 {approx = true} : vector<5x1xf32> -> vector<5x1xf32>
    %39 = vector.broadcast %38 : vector<5x1xf32> to vector<5x32xf32>
    %40 = arith.mulf %37, %39 : vector<5x32xf32>
    %cst_35 = arith.constant dense<0.000000e+00> : vector<5x32xf32>
    %41 = tpu.matmul %40, %18, %cst_35 {dimension_numbers = #tpu.dot_dimension_numbers<[1], [0], [0], [1], [0, 0, 1, 1], [], []>} : vector<5x32xf32>, vector<32x32xf32>, vector<5x32xf32> -> vector<5x32xf32>
    %42 = vector.broadcast %20 : vector<1x32xf32> to vector<5x32xf32>
    %43 = arith.addf %41, %42 : vector<5x32xf32>
    %cst_36 = arith.constant dense<0.000000e+00> : vector<5xf32>
    %44 = vector.multi_reduction <add>, %43, %cst_36 [1] : vector<5x32xf32> to vector<5xf32>
    %45 = vector.shape_cast %44 : vector<5xf32> to vector<5x1xf32>
    %cst_37 = arith.constant 3.200000e+01 : f32
    %46 = vector.broadcast %cst_37 : f32 to vector<5x1xf32>
    %47 = arith.divf %45, %46 : vector<5x1xf32>
    %48 = vector.broadcast %47 : vector<5x1xf32> to vector<5x32xf32>
    %49 = arith.subf %43, %48 : vector<5x32xf32>
    %50 = arith.mulf %49, %49 : vector<5x32xf32>
    %cst_38 = arith.constant dense<0.000000e+00> : vector<5xf32>
    %51 = vector.multi_reduction <add>, %50, %cst_38 [1] : vector<5x32xf32> to vector<5xf32>
    %52 = vector.shape_cast %51 : vector<5xf32> to vector<5x1xf32>
    %cst_39 = arith.constant 3.200000e+01 : f32
    %53 = vector.broadcast %cst_39 : f32 to vector<5x1xf32>
    %54 = arith.divf %52, %53 : vector<5x1xf32>
    %cst_40 = arith.constant 9.99999974E-6 : f32
    %55 = vector.broadcast %cst_40 : f32 to vector<5x1xf32>
    %56 = arith.addf %54, %55 : vector<5x1xf32>
    %57 = math.rsqrt %56 : vector<5x1xf32>
    %58 = vector.broadcast %57 : vector<5x1xf32> to vector<5x32xf32>
    %59 = arith.mulf %49, %58 : vector<5x32xf32>
    %c0_41 = arith.constant 0 : index
    %c0_42 = arith.constant 0 : index
    %c0_43 = arith.constant 0 : index
    %60 = vector.load %arg12[%c0_41, %c0_42, %c0_43] : memref<10x1x32xf32, #tpu.memory_space<vmem>>, vector<1x1x32xf32>
    %61 = vector.shape_cast %60 : vector<1x1x32xf32> to vector<1x32xf32>
    %62 = vector.broadcast %61 : vector<1x32xf32> to vector<5x32xf32>
    %63 = arith.mulf %59, %62 : vector<5x32xf32>
    %c0_44 = arith.constant 0 : index
    %c0_45 = arith.constant 0 : index
    %c0_46 = arith.constant 0 : index
    %64 = vector.load %arg13[%c0_44, %c0_45, %c0_46] : memref<10x1x32xf32, #tpu.memory_space<vmem>>, vector<1x1x32xf32>
    %65 = vector.shape_cast %64 : vector<1x1x32xf32> to vector<1x32xf32>
    %66 = vector.broadcast %65 : vector<1x32xf32> to vector<5x32xf32>
    %67 = arith.addf %63, %66 : vector<5x32xf32>
    %c1 = arith.constant 1 : index
    %c0_47 = arith.constant 0 : index
    %c0_48 = arith.constant 0 : index
    %68 = vector.load %arg6[%c1, %c0_47, %c0_48] : memref<8x32x32xf32, #tpu.memory_space<vmem>>, vector<1x32x32xf32>
    %69 = vector.shape_cast %68 : vector<1x32x32xf32> to vector<32x32xf32>
    %c1_49 = arith.constant 1 : index
    %c0_50 = arith.constant 0 : index
    %c0_51 = arith.constant 0 : index
    %70 = vector.load %arg7[%c1_49, %c0_50, %c0_51] : memref<8x1x32xf32, #tpu.memory_space<vmem>>, vector<1x1x32xf32>
    %71 = vector.shape_cast %70 : vector<1x1x32xf32> to vector<1x32xf32>
    %c1_52 = arith.constant 1 : index
    %c0_53 = arith.constant 0 : index
    %c0_54 = arith.constant 0 : index
    %72 = vector.load %arg8[%c1_52, %c0_53, %c0_54] : memref<8x32x64xf32, #tpu.memory_space<vmem>>, vector<1x32x64xf32>
    %73 = vector.shape_cast %72 : vector<1x32x64xf32> to vector<32x64xf32>
    %c1_55 = arith.constant 1 : index
    %c0_56 = arith.constant 0 : index
    %c0_57 = arith.constant 0 : index
    %74 = vector.load %arg9[%c1_55, %c0_56, %c0_57] : memref<8x1x64xf32, #tpu.memory_space<vmem>>, vector<1x1x64xf32>
    %75 = vector.shape_cast %74 : vector<1x1x64xf32> to vector<1x64xf32>
    %c1_58 = arith.constant 1 : index
    %c0_59 = arith.constant 0 : index
    %c0_60 = arith.constant 0 : index
    %76 = vector.load %arg10[%c1_58, %c0_59, %c0_60] : memref<8x32x32xf32, #tpu.memory_space<vmem>>, vector<1x32x32xf32>
    %77 = vector.shape_cast %76 : vector<1x32x32xf32> to vector<32x32xf32>
    %c1_61 = arith.constant 1 : index
    %c0_62 = arith.constant 0 : index
    %c0_63 = arith.constant 0 : index
    %78 = vector.load %arg11[%c1_61, %c0_62, %c0_63] : memref<8x1x32xf32, #tpu.memory_space<vmem>>, vector<1x1x32xf32>
    %79 = vector.shape_cast %78 : vector<1x1x32xf32> to vector<1x32xf32>
    %cst_64 = arith.constant dense<0.000000e+00> : vector<5x32xf32>
    %80 = tpu.matmul %67, %69, %cst_64 {dimension_numbers = #tpu.dot_dimension_numbers<[1], [0], [0], [1], [0, 0, 1, 1], [], []>} : vector<5x32xf32>, vector<32x32xf32>, vector<5x32xf32> -> vector<5x32xf32>
    %81 = vector.broadcast %71 : vector<1x32xf32> to vector<5x32xf32>
    %82 = arith.addf %80, %81 : vector<5x32xf32>
    %cst_65 = arith.constant dense<0.000000e+00> : vector<27x64xf32>
    %83 = tpu.matmul %5, %73, %cst_65 {dimension_numbers = #tpu.dot_dimension_numbers<[1], [0], [0], [1], [0, 0, 1, 1], [], []>} : vector<27x32xf32>, vector<32x64xf32>, vector<27x64xf32> -> vector<27x64xf32>
    %84 = vector.broadcast %75 : vector<1x64xf32> to vector<27x64xf32>
    %85 = arith.addf %83, %84 : vector<27x64xf32>
    %86 = vector.extract_strided_slice %85 {offsets = [0, 0], sizes = [27, 32], strides = [1, 1]} : vector<27x64xf32> to vector<27x32xf32>
    %87 = vector.extract_strided_slice %85 {offsets = [0, 32], sizes = [27, 32], strides = [1, 1]} : vector<27x64xf32> to vector<27x32xf32>
    %cst_66 = arith.constant dense<0.000000e+00> : vector<5x27xf32>
    %88 = tpu.matmul %82, %86, %cst_66 {dimension_numbers = #tpu.dot_dimension_numbers<[1], [1], [0], [0], [0, 0, 1, 0], [], []>} : vector<5x32xf32>, vector<27x32xf32>, vector<5x27xf32> -> vector<5x27xf32>
    %cst_67 = arith.constant dense<0xFF800000> : vector<5xf32>
    %89 = vector.multi_reduction <maximumf>, %88, %cst_67 [1] : vector<5x27xf32> to vector<5xf32>
    %90 = vector.shape_cast %89 : vector<5xf32> to vector<5x1xf32>
    %91 = vector.broadcast %90 : vector<5x1xf32> to vector<5x27xf32>
    %92 = arith.subf %88, %91 : vector<5x27xf32>
    %93 = math.exp %92 : vector<5x27xf32>
    %cst_68 = arith.constant dense<0.000000e+00> : vector<5xf32>
    %94 = vector.multi_reduction <add>, %93, %cst_68 [1] : vector<5x27xf32> to vector<5xf32>
    %95 = vector.shape_cast %94 : vector<5xf32> to vector<5x1xf32>
    %cst_69 = arith.constant dense<0.000000e+00> : vector<5x32xf32>
    %96 = tpu.matmul %93, %87, %cst_69 {dimension_numbers = #tpu.dot_dimension_numbers<[1], [0], [0], [1], [0, 0, 1, 1], [], []>} : vector<5x27xf32>, vector<27x32xf32>, vector<5x32xf32> -> vector<5x32xf32>
    %97 = tpu.reciprocal %95 {approx = true} : vector<5x1xf32> -> vector<5x1xf32>
    %98 = vector.broadcast %97 : vector<5x1xf32> to vector<5x32xf32>
    %99 = arith.mulf %96, %98 : vector<5x32xf32>
    %cst_70 = arith.constant dense<0.000000e+00> : vector<5x32xf32>
    %100 = tpu.matmul %99, %77, %cst_70 {dimension_numbers = #tpu.dot_dimension_numbers<[1], [0], [0], [1], [0, 0, 1, 1], [], []>} : vector<5x32xf32>, vector<32x32xf32>, vector<5x32xf32> -> vector<5x32xf32>
    %101 = vector.broadcast %79 : vector<1x32xf32> to vector<5x32xf32>
    %102 = arith.addf %100, %101 : vector<5x32xf32>
    %103 = arith.addf %67, %102 : vector<5x32xf32>
    %cst_71 = arith.constant dense<0.000000e+00> : vector<5xf32>
    %104 = vector.multi_reduction <add>, %103, %cst_71 [1] : vector<5x32xf32> to vector<5xf32>
    %105 = vector.shape_cast %104 : vector<5xf32> to vector<5x1xf32>
    %cst_72 = arith.constant 3.200000e+01 : f32
    %106 = vector.broadcast %cst_72 : f32 to vector<5x1xf32>
    %107 = arith.divf %105, %106 : vector<5x1xf32>
    %108 = vector.broadcast %107 : vector<5x1xf32> to vector<5x32xf32>
    %109 = arith.subf %103, %108 : vector<5x32xf32>
    %110 = arith.mulf %109, %109 : vector<5x32xf32>
    %cst_73 = arith.constant dense<0.000000e+00> : vector<5xf32>
    %111 = vector.multi_reduction <add>, %110, %cst_73 [1] : vector<5x32xf32> to vector<5xf32>
    %112 = vector.shape_cast %111 : vector<5xf32> to vector<5x1xf32>
    %cst_74 = arith.constant 3.200000e+01 : f32
    %113 = vector.broadcast %cst_74 : f32 to vector<5x1xf32>
    %114 = arith.divf %112, %113 : vector<5x1xf32>
    %cst_75 = arith.constant 9.99999974E-6 : f32
    %115 = vector.broadcast %cst_75 : f32 to vector<5x1xf32>
    %116 = arith.addf %114, %115 : vector<5x1xf32>
    %117 = math.rsqrt %116 : vector<5x1xf32>
    %118 = vector.broadcast %117 : vector<5x1xf32> to vector<5x32xf32>
    %119 = arith.mulf %109, %118 : vector<5x32xf32>
    %c1_76 = arith.constant 1 : index
    %c0_77 = arith.constant 0 : index
    %c0_78 = arith.constant 0 : index
    %120 = vector.load %arg12[%c1_76, %c0_77, %c0_78] : memref<10x1x32xf32, #tpu.memory_space<vmem>>, vector<1x1x32xf32>
    %121 = vector.shape_cast %120 : vector<1x1x32xf32> to vector<1x32xf32>
    %122 = vector.broadcast %121 : vector<1x32xf32> to vector<5x32xf32>
    %123 = arith.mulf %119, %122 : vector<5x32xf32>
    %c1_79 = arith.constant 1 : index
    %c0_80 = arith.constant 0 : index
    %c0_81 = arith.constant 0 : index
    %124 = vector.load %arg13[%c1_79, %c0_80, %c0_81] : memref<10x1x32xf32, #tpu.memory_space<vmem>>, vector<1x1x32xf32>
    %125 = vector.shape_cast %124 : vector<1x1x32xf32> to vector<1x32xf32>
    %126 = vector.broadcast %125 : vector<1x32xf32> to vector<5x32xf32>
    %127 = arith.addf %123, %126 : vector<5x32xf32>
    %c0_82 = arith.constant 0 : index
    %c0_83 = arith.constant 0 : index
    %c0_84 = arith.constant 0 : index
    %128 = vector.load %arg14[%c0_82, %c0_83, %c0_84] : memref<2x32x64xf32, #tpu.memory_space<vmem>>, vector<1x32x64xf32>
    %129 = vector.shape_cast %128 : vector<1x32x64xf32> to vector<32x64xf32>
    %cst_85 = arith.constant dense<0.000000e+00> : vector<5x64xf32>
    %130 = tpu.matmul %127, %129, %cst_85 {dimension_numbers = #tpu.dot_dimension_numbers<[1], [0], [0], [1], [0, 0, 1, 1], [], []>} : vector<5x32xf32>, vector<32x64xf32>, vector<5x64xf32> -> vector<5x64xf32>
    %c0_86 = arith.constant 0 : index
    %c0_87 = arith.constant 0 : index
    %c0_88 = arith.constant 0 : index
    %131 = vector.load %arg15[%c0_86, %c0_87, %c0_88] : memref<2x1x64xf32, #tpu.memory_space<vmem>>, vector<1x1x64xf32>
    %132 = vector.shape_cast %131 : vector<1x1x64xf32> to vector<1x64xf32>
    %133 = vector.broadcast %132 : vector<1x64xf32> to vector<5x64xf32>
    %134 = arith.addf %130, %133 : vector<5x64xf32>
    %cst_89 = arith.constant 0.000000e+00 : f32
    %135 = vector.broadcast %cst_89 : f32 to vector<5x64xf32>
    %136 = arith.maximumf %134, %135 : vector<5x64xf32>
    %c0_90 = arith.constant 0 : index
    %c0_91 = arith.constant 0 : index
    %c0_92 = arith.constant 0 : index
    %137 = vector.load %arg16[%c0_90, %c0_91, %c0_92] : memref<2x64x32xf32, #tpu.memory_space<vmem>>, vector<1x64x32xf32>
    %138 = vector.shape_cast %137 : vector<1x64x32xf32> to vector<64x32xf32>
    %cst_93 = arith.constant dense<0.000000e+00> : vector<5x32xf32>
    %139 = tpu.matmul %136, %138, %cst_93 {dimension_numbers = #tpu.dot_dimension_numbers<[1], [0], [0], [1], [0, 0, 1, 1], [], []>} : vector<5x64xf32>, vector<64x32xf32>, vector<5x32xf32> -> vector<5x32xf32>
    %c0_94 = arith.constant 0 : index
    %c0_95 = arith.constant 0 : index
    %c0_96 = arith.constant 0 : index
    %140 = vector.load %arg17[%c0_94, %c0_95, %c0_96] : memref<2x1x32xf32, #tpu.memory_space<vmem>>, vector<1x1x32xf32>
    %141 = vector.shape_cast %140 : vector<1x1x32xf32> to vector<1x32xf32>
    %142 = vector.broadcast %141 : vector<1x32xf32> to vector<5x32xf32>
    %143 = arith.addf %139, %142 : vector<5x32xf32>
    %144 = arith.addf %127, %143 : vector<5x32xf32>
    %cst_97 = arith.constant dense<0.000000e+00> : vector<5xf32>
    %145 = vector.multi_reduction <add>, %144, %cst_97 [1] : vector<5x32xf32> to vector<5xf32>
    %146 = vector.shape_cast %145 : vector<5xf32> to vector<5x1xf32>
    %cst_98 = arith.constant 3.200000e+01 : f32
    %147 = vector.broadcast %cst_98 : f32 to vector<5x1xf32>
    %148 = arith.divf %146, %147 : vector<5x1xf32>
    %149 = vector.broadcast %148 : vector<5x1xf32> to vector<5x32xf32>
    %150 = arith.subf %144, %149 : vector<5x32xf32>
    %151 = arith.mulf %150, %150 : vector<5x32xf32>
    %cst_99 = arith.constant dense<0.000000e+00> : vector<5xf32>
    %152 = vector.multi_reduction <add>, %151, %cst_99 [1] : vector<5x32xf32> to vector<5xf32>
    %153 = vector.shape_cast %152 : vector<5xf32> to vector<5x1xf32>
    %cst_100 = arith.constant 3.200000e+01 : f32
    %154 = vector.broadcast %cst_100 : f32 to vector<5x1xf32>
    %155 = arith.divf %153, %154 : vector<5x1xf32>
    %cst_101 = arith.constant 9.99999974E-6 : f32
    %156 = vector.broadcast %cst_101 : f32 to vector<5x1xf32>
    %157 = arith.addf %155, %156 : vector<5x1xf32>
    %158 = math.rsqrt %157 : vector<5x1xf32>
    %159 = vector.broadcast %158 : vector<5x1xf32> to vector<5x32xf32>
    %160 = arith.mulf %150, %159 : vector<5x32xf32>
    %c2 = arith.constant 2 : index
    %c0_102 = arith.constant 0 : index
    %c0_103 = arith.constant 0 : index
    %161 = vector.load %arg12[%c2, %c0_102, %c0_103] : memref<10x1x32xf32, #tpu.memory_space<vmem>>, vector<1x1x32xf32>
    %162 = vector.shape_cast %161 : vector<1x1x32xf32> to vector<1x32xf32>
    %163 = vector.broadcast %162 : vector<1x32xf32> to vector<5x32xf32>
    %164 = arith.mulf %160, %163 : vector<5x32xf32>
    %c2_104 = arith.constant 2 : index
    %c0_105 = arith.constant 0 : index
    %c0_106 = arith.constant 0 : index
    %165 = vector.load %arg13[%c2_104, %c0_105, %c0_106] : memref<10x1x32xf32, #tpu.memory_space<vmem>>, vector<1x1x32xf32>
    %166 = vector.shape_cast %165 : vector<1x1x32xf32> to vector<1x32xf32>
    %167 = vector.broadcast %166 : vector<1x32xf32> to vector<5x32xf32>
    %168 = arith.addf %164, %167 : vector<5x32xf32>
    %c2_107 = arith.constant 2 : index
    %c0_108 = arith.constant 0 : index
    %c0_109 = arith.constant 0 : index
    %169 = vector.load %arg6[%c2_107, %c0_108, %c0_109] : memref<8x32x32xf32, #tpu.memory_space<vmem>>, vector<1x32x32xf32>
    %170 = vector.shape_cast %169 : vector<1x32x32xf32> to vector<32x32xf32>
    %c2_110 = arith.constant 2 : index
    %c0_111 = arith.constant 0 : index
    %c0_112 = arith.constant 0 : index
    %171 = vector.load %arg7[%c2_110, %c0_111, %c0_112] : memref<8x1x32xf32, #tpu.memory_space<vmem>>, vector<1x1x32xf32>
    %172 = vector.shape_cast %171 : vector<1x1x32xf32> to vector<1x32xf32>
    %c2_113 = arith.constant 2 : index
    %c0_114 = arith.constant 0 : index
    %c0_115 = arith.constant 0 : index
    %173 = vector.load %arg8[%c2_113, %c0_114, %c0_115] : memref<8x32x64xf32, #tpu.memory_space<vmem>>, vector<1x32x64xf32>
    %174 = vector.shape_cast %173 : vector<1x32x64xf32> to vector<32x64xf32>
    %c2_116 = arith.constant 2 : index
    %c0_117 = arith.constant 0 : index
    %c0_118 = arith.constant 0 : index
    %175 = vector.load %arg9[%c2_116, %c0_117, %c0_118] : memref<8x1x64xf32, #tpu.memory_space<vmem>>, vector<1x1x64xf32>
    %176 = vector.shape_cast %175 : vector<1x1x64xf32> to vector<1x64xf32>
    %c2_119 = arith.constant 2 : index
    %c0_120 = arith.constant 0 : index
    %c0_121 = arith.constant 0 : index
    %177 = vector.load %arg10[%c2_119, %c0_120, %c0_121] : memref<8x32x32xf32, #tpu.memory_space<vmem>>, vector<1x32x32xf32>
    %178 = vector.shape_cast %177 : vector<1x32x32xf32> to vector<32x32xf32>
    %c2_122 = arith.constant 2 : index
    %c0_123 = arith.constant 0 : index
    %c0_124 = arith.constant 0 : index
    %179 = vector.load %arg11[%c2_122, %c0_123, %c0_124] : memref<8x1x32xf32, #tpu.memory_space<vmem>>, vector<1x1x32xf32>
    %180 = vector.shape_cast %179 : vector<1x1x32xf32> to vector<1x32xf32>
    %cst_125 = arith.constant dense<0.000000e+00> : vector<27x32xf32>
    %181 = tpu.matmul %5, %170, %cst_125 {dimension_numbers = #tpu.dot_dimension_numbers<[1], [0], [0], [1], [0, 0, 1, 1], [], []>} : vector<27x32xf32>, vector<32x32xf32>, vector<27x32xf32> -> vector<27x32xf32>
    %182 = vector.broadcast %172 : vector<1x32xf32> to vector<27x32xf32>
    %183 = arith.addf %181, %182 : vector<27x32xf32>
    %cst_126 = arith.constant dense<0.000000e+00> : vector<5x64xf32>
    %184 = tpu.matmul %168, %174, %cst_126 {dimension_numbers = #tpu.dot_dimension_numbers<[1], [0], [0], [1], [0, 0, 1, 1], [], []>} : vector<5x32xf32>, vector<32x64xf32>, vector<5x64xf32> -> vector<5x64xf32>
    %185 = vector.broadcast %176 : vector<1x64xf32> to vector<5x64xf32>
    %186 = arith.addf %184, %185 : vector<5x64xf32>
    %187 = vector.extract_strided_slice %186 {offsets = [0, 0], sizes = [5, 32], strides = [1, 1]} : vector<5x64xf32> to vector<5x32xf32>
    %188 = vector.extract_strided_slice %186 {offsets = [0, 32], sizes = [5, 32], strides = [1, 1]} : vector<5x64xf32> to vector<5x32xf32>
    %cst_127 = arith.constant dense<0.000000e+00> : vector<27x5xf32>
    %189 = tpu.matmul %183, %187, %cst_127 {dimension_numbers = #tpu.dot_dimension_numbers<[1], [1], [0], [0], [0, 0, 1, 0], [], []>} : vector<27x32xf32>, vector<5x32xf32>, vector<27x5xf32> -> vector<27x5xf32>
    %cst_128 = arith.constant dense<0xFF800000> : vector<27xf32>
    %190 = vector.multi_reduction <maximumf>, %189, %cst_128 [1] : vector<27x5xf32> to vector<27xf32>
    %191 = vector.shape_cast %190 : vector<27xf32> to vector<27x1xf32>
    %192 = vector.broadcast %191 : vector<27x1xf32> to vector<27x5xf32>
    %193 = arith.subf %189, %192 : vector<27x5xf32>
    %194 = math.exp %193 : vector<27x5xf32>
    %cst_129 = arith.constant dense<0.000000e+00> : vector<27xf32>
    %195 = vector.multi_reduction <add>, %194, %cst_129 [1] : vector<27x5xf32> to vector<27xf32>
    %196 = vector.shape_cast %195 : vector<27xf32> to vector<27x1xf32>
    %cst_130 = arith.constant dense<0.000000e+00> : vector<27x32xf32>
    %197 = tpu.matmul %194, %188, %cst_130 {dimension_numbers = #tpu.dot_dimension_numbers<[1], [0], [0], [1], [0, 0, 1, 1], [], []>} : vector<27x5xf32>, vector<5x32xf32>, vector<27x32xf32> -> vector<27x32xf32>
    %198 = tpu.reciprocal %196 {approx = true} : vector<27x1xf32> -> vector<27x1xf32>
    %199 = vector.broadcast %198 : vector<27x1xf32> to vector<27x32xf32>
    %200 = arith.mulf %197, %199 : vector<27x32xf32>
    %cst_131 = arith.constant dense<0.000000e+00> : vector<27x32xf32>
    %201 = tpu.matmul %200, %178, %cst_131 {dimension_numbers = #tpu.dot_dimension_numbers<[1], [0], [0], [1], [0, 0, 1, 1], [], []>} : vector<27x32xf32>, vector<32x32xf32>, vector<27x32xf32> -> vector<27x32xf32>
    %202 = vector.broadcast %180 : vector<1x32xf32> to vector<27x32xf32>
    %203 = arith.addf %201, %202 : vector<27x32xf32>
    %204 = arith.addf %5, %203 : vector<27x32xf32>
    %cst_132 = arith.constant dense<0.000000e+00> : vector<27xf32>
    %205 = vector.multi_reduction <add>, %204, %cst_132 [1] : vector<27x32xf32> to vector<27xf32>
    %206 = vector.shape_cast %205 : vector<27xf32> to vector<27x1xf32>
    %cst_133 = arith.constant 3.200000e+01 : f32
    %207 = vector.broadcast %cst_133 : f32 to vector<27x1xf32>
    %208 = arith.divf %206, %207 : vector<27x1xf32>
    %209 = vector.broadcast %208 : vector<27x1xf32> to vector<27x32xf32>
    %210 = arith.subf %204, %209 : vector<27x32xf32>
    %211 = arith.mulf %210, %210 : vector<27x32xf32>
    %cst_134 = arith.constant dense<0.000000e+00> : vector<27xf32>
    %212 = vector.multi_reduction <add>, %211, %cst_134 [1] : vector<27x32xf32> to vector<27xf32>
    %213 = vector.shape_cast %212 : vector<27xf32> to vector<27x1xf32>
    %cst_135 = arith.constant 3.200000e+01 : f32
    %214 = vector.broadcast %cst_135 : f32 to vector<27x1xf32>
    %215 = arith.divf %213, %214 : vector<27x1xf32>
    %cst_136 = arith.constant 9.99999974E-6 : f32
    %216 = vector.broadcast %cst_136 : f32 to vector<27x1xf32>
    %217 = arith.addf %215, %216 : vector<27x1xf32>
    %218 = math.rsqrt %217 : vector<27x1xf32>
    %219 = vector.broadcast %218 : vector<27x1xf32> to vector<27x32xf32>
    %220 = arith.mulf %210, %219 : vector<27x32xf32>
    %c3 = arith.constant 3 : index
    %c0_137 = arith.constant 0 : index
    %c0_138 = arith.constant 0 : index
    %221 = vector.load %arg12[%c3, %c0_137, %c0_138] : memref<10x1x32xf32, #tpu.memory_space<vmem>>, vector<1x1x32xf32>
    %222 = vector.shape_cast %221 : vector<1x1x32xf32> to vector<1x32xf32>
    %223 = vector.broadcast %222 : vector<1x32xf32> to vector<27x32xf32>
    %224 = arith.mulf %220, %223 : vector<27x32xf32>
    %c3_139 = arith.constant 3 : index
    %c0_140 = arith.constant 0 : index
    %c0_141 = arith.constant 0 : index
    %225 = vector.load %arg13[%c3_139, %c0_140, %c0_141] : memref<10x1x32xf32, #tpu.memory_space<vmem>>, vector<1x1x32xf32>
    %226 = vector.shape_cast %225 : vector<1x1x32xf32> to vector<1x32xf32>
    %227 = vector.broadcast %226 : vector<1x32xf32> to vector<27x32xf32>
    %228 = arith.addf %224, %227 : vector<27x32xf32>
    %c3_142 = arith.constant 3 : index
    %c0_143 = arith.constant 0 : index
    %c0_144 = arith.constant 0 : index
    %229 = vector.load %arg6[%c3_142, %c0_143, %c0_144] : memref<8x32x32xf32, #tpu.memory_space<vmem>>, vector<1x32x32xf32>
    %230 = vector.shape_cast %229 : vector<1x32x32xf32> to vector<32x32xf32>
    %c3_145 = arith.constant 3 : index
    %c0_146 = arith.constant 0 : index
    %c0_147 = arith.constant 0 : index
    %231 = vector.load %arg7[%c3_145, %c0_146, %c0_147] : memref<8x1x32xf32, #tpu.memory_space<vmem>>, vector<1x1x32xf32>
    %232 = vector.shape_cast %231 : vector<1x1x32xf32> to vector<1x32xf32>
    %c3_148 = arith.constant 3 : index
    %c0_149 = arith.constant 0 : index
    %c0_150 = arith.constant 0 : index
    %233 = vector.load %arg8[%c3_148, %c0_149, %c0_150] : memref<8x32x64xf32, #tpu.memory_space<vmem>>, vector<1x32x64xf32>
    %234 = vector.shape_cast %233 : vector<1x32x64xf32> to vector<32x64xf32>
    %c3_151 = arith.constant 3 : index
    %c0_152 = arith.constant 0 : index
    %c0_153 = arith.constant 0 : index
    %235 = vector.load %arg9[%c3_151, %c0_152, %c0_153] : memref<8x1x64xf32, #tpu.memory_space<vmem>>, vector<1x1x64xf32>
    %236 = vector.shape_cast %235 : vector<1x1x64xf32> to vector<1x64xf32>
    %c3_154 = arith.constant 3 : index
    %c0_155 = arith.constant 0 : index
    %c0_156 = arith.constant 0 : index
    %237 = vector.load %arg10[%c3_154, %c0_155, %c0_156] : memref<8x32x32xf32, #tpu.memory_space<vmem>>, vector<1x32x32xf32>
    %238 = vector.shape_cast %237 : vector<1x32x32xf32> to vector<32x32xf32>
    %c3_157 = arith.constant 3 : index
    %c0_158 = arith.constant 0 : index
    %c0_159 = arith.constant 0 : index
    %239 = vector.load %arg11[%c3_157, %c0_158, %c0_159] : memref<8x1x32xf32, #tpu.memory_space<vmem>>, vector<1x1x32xf32>
    %240 = vector.shape_cast %239 : vector<1x1x32xf32> to vector<1x32xf32>
    %cst_160 = arith.constant dense<0.000000e+00> : vector<1x32xf32>
    %241 = tpu.matmul %8, %230, %cst_160 {dimension_numbers = #tpu.dot_dimension_numbers<[1], [0], [0], [1], [0, 0, 1, 1], [], []>} : vector<1x32xf32>, vector<32x32xf32>, vector<1x32xf32> -> vector<1x32xf32>
    %242 = arith.addf %241, %232 : vector<1x32xf32>
    %cst_161 = arith.constant dense<0.000000e+00> : vector<5x64xf32>
    %243 = tpu.matmul %168, %234, %cst_161 {dimension_numbers = #tpu.dot_dimension_numbers<[1], [0], [0], [1], [0, 0, 1, 1], [], []>} : vector<5x32xf32>, vector<32x64xf32>, vector<5x64xf32> -> vector<5x64xf32>
    %244 = vector.broadcast %236 : vector<1x64xf32> to vector<5x64xf32>
    %245 = arith.addf %243, %244 : vector<5x64xf32>
    %246 = vector.extract_strided_slice %245 {offsets = [0, 0], sizes = [5, 32], strides = [1, 1]} : vector<5x64xf32> to vector<5x32xf32>
    %247 = vector.extract_strided_slice %245 {offsets = [0, 32], sizes = [5, 32], strides = [1, 1]} : vector<5x64xf32> to vector<5x32xf32>
    %cst_162 = arith.constant dense<0.000000e+00> : vector<1x5xf32>
    %248 = tpu.matmul %242, %246, %cst_162 {dimension_numbers = #tpu.dot_dimension_numbers<[1], [1], [0], [0], [0, 0, 1, 0], [], []>} : vector<1x32xf32>, vector<5x32xf32>, vector<1x5xf32> -> vector<1x5xf32>
    %cst_163 = arith.constant dense<0.000000e+00> : vector<27x64xf32>
    %249 = tpu.matmul %228, %234, %cst_163 {dimension_numbers = #tpu.dot_dimension_numbers<[1], [0], [0], [1], [0, 0, 1, 1], [], []>} : vector<27x32xf32>, vector<32x64xf32>, vector<27x64xf32> -> vector<27x64xf32>
    %250 = vector.broadcast %236 : vector<1x64xf32> to vector<27x64xf32>
    %251 = arith.addf %249, %250 : vector<27x64xf32>
    %252 = vector.extract_strided_slice %251 {offsets = [0, 0], sizes = [27, 32], strides = [1, 1]} : vector<27x64xf32> to vector<27x32xf32>
    %253 = vector.extract_strided_slice %251 {offsets = [0, 32], sizes = [27, 32], strides = [1, 1]} : vector<27x64xf32> to vector<27x32xf32>
    %cst_164 = arith.constant dense<0.000000e+00> : vector<1x27xf32>
    %254 = tpu.matmul %242, %252, %cst_164 {dimension_numbers = #tpu.dot_dimension_numbers<[1], [1], [0], [0], [0, 0, 1, 0], [], []>} : vector<1x32xf32>, vector<27x32xf32>, vector<1x27xf32> -> vector<1x27xf32>
    %cst_165 = arith.constant dense<0xFF800000> : vector<1xf32>
    %255 = vector.multi_reduction <maximumf>, %248, %cst_165 [1] : vector<1x5xf32> to vector<1xf32>
    %256 = vector.shape_cast %255 : vector<1xf32> to vector<1x1xf32>
    %cst_166 = arith.constant dense<0xFF800000> : vector<1xf32>
    %257 = vector.multi_reduction <maximumf>, %254, %cst_166 [1] : vector<1x27xf32> to vector<1xf32>
    %258 = vector.shape_cast %257 : vector<1xf32> to vector<1x1xf32>
    %259 = arith.maximumf %256, %258 : vector<1x1xf32>
    %260 = vector.broadcast %259 : vector<1x1xf32> to vector<1x5xf32>
    %261 = arith.subf %248, %260 : vector<1x5xf32>
    %262 = math.exp %261 : vector<1x5xf32>
    %cst_167 = arith.constant dense<0.000000e+00> : vector<1xf32>
    %263 = vector.multi_reduction <add>, %262, %cst_167 [1] : vector<1x5xf32> to vector<1xf32>
    %264 = vector.shape_cast %263 : vector<1xf32> to vector<1x1xf32>
    %cst_168 = arith.constant dense<0.000000e+00> : vector<1x32xf32>
    %265 = tpu.matmul %262, %247, %cst_168 {dimension_numbers = #tpu.dot_dimension_numbers<[1], [0], [0], [1], [0, 0, 1, 1], [], []>} : vector<1x5xf32>, vector<5x32xf32>, vector<1x32xf32> -> vector<1x32xf32>
    %266 = vector.broadcast %259 : vector<1x1xf32> to vector<1x27xf32>
    %267 = arith.subf %254, %266 : vector<1x27xf32>
    %268 = math.exp %267 : vector<1x27xf32>
    %cst_169 = arith.constant dense<0.000000e+00> : vector<1xf32>
    %269 = vector.multi_reduction <add>, %268, %cst_169 [1] : vector<1x27xf32> to vector<1xf32>
    %270 = vector.shape_cast %269 : vector<1xf32> to vector<1x1xf32>
    %cst_170 = arith.constant dense<0.000000e+00> : vector<1x32xf32>
    %271 = tpu.matmul %268, %253, %cst_170 {dimension_numbers = #tpu.dot_dimension_numbers<[1], [0], [0], [1], [0, 0, 1, 1], [], []>} : vector<1x27xf32>, vector<27x32xf32>, vector<1x32xf32> -> vector<1x32xf32>
    %272 = arith.addf %265, %271 : vector<1x32xf32>
    %273 = arith.addf %264, %270 : vector<1x1xf32>
    %274 = tpu.reciprocal %273 {approx = true} : vector<1x1xf32> -> vector<1x1xf32>
    %275 = vector.broadcast %274 : vector<1x1xf32> to vector<1x32xf32>
    %276 = arith.mulf %272, %275 : vector<1x32xf32>
    %cst_171 = arith.constant dense<0.000000e+00> : vector<1x32xf32>
    %277 = tpu.matmul %276, %238, %cst_171 {dimension_numbers = #tpu.dot_dimension_numbers<[1], [0], [0], [1], [0, 0, 1, 1], [], []>} : vector<1x32xf32>, vector<32x32xf32>, vector<1x32xf32> -> vector<1x32xf32>
    %278 = arith.addf %277, %240 : vector<1x32xf32>
    %cst_172 = arith.constant dense<0.000000e+00> : vector<1xf32>
    %279 = vector.multi_reduction <add>, %278, %cst_172 [1] : vector<1x32xf32> to vector<1xf32>
    %280 = vector.shape_cast %279 : vector<1xf32> to vector<1x1xf32>
    %cst_173 = arith.constant 3.200000e+01 : f32
    %281 = vector.broadcast %cst_173 : f32 to vector<1x1xf32>
    %282 = arith.divf %280, %281 : vector<1x1xf32>
    %283 = vector.broadcast %282 : vector<1x1xf32> to vector<1x32xf32>
    %284 = arith.subf %278, %283 : vector<1x32xf32>
    %285 = arith.mulf %284, %284 : vector<1x32xf32>
    %cst_174 = arith.constant dense<0.000000e+00> : vector<1xf32>
    %286 = vector.multi_reduction <add>, %285, %cst_174 [1] : vector<1x32xf32> to vector<1xf32>
    %287 = vector.shape_cast %286 : vector<1xf32> to vector<1x1xf32>
    %cst_175 = arith.constant 3.200000e+01 : f32
    %288 = vector.broadcast %cst_175 : f32 to vector<1x1xf32>
    %289 = arith.divf %287, %288 : vector<1x1xf32>
    %cst_176 = arith.constant 9.99999974E-6 : f32
    %290 = vector.broadcast %cst_176 : f32 to vector<1x1xf32>
    %291 = arith.addf %289, %290 : vector<1x1xf32>
    %292 = math.rsqrt %291 : vector<1x1xf32>
    %293 = vector.broadcast %292 : vector<1x1xf32> to vector<1x32xf32>
    %294 = arith.mulf %284, %293 : vector<1x32xf32>
    %c4 = arith.constant 4 : index
    %c0_177 = arith.constant 0 : index
    %c0_178 = arith.constant 0 : index
    %295 = vector.load %arg12[%c4, %c0_177, %c0_178] : memref<10x1x32xf32, #tpu.memory_space<vmem>>, vector<1x1x32xf32>
    %296 = vector.shape_cast %295 : vector<1x1x32xf32> to vector<1x32xf32>
    %297 = arith.mulf %294, %296 : vector<1x32xf32>
    %c4_179 = arith.constant 4 : index
    %c0_180 = arith.constant 0 : index
    %c0_181 = arith.constant 0 : index
    %298 = vector.load %arg13[%c4_179, %c0_180, %c0_181] : memref<10x1x32xf32, #tpu.memory_space<vmem>>, vector<1x1x32xf32>
    %299 = vector.shape_cast %298 : vector<1x1x32xf32> to vector<1x32xf32>
    %300 = arith.addf %297, %299 : vector<1x32xf32>
    %c4_182 = arith.constant 4 : index
    %c0_183 = arith.constant 0 : index
    %c0_184 = arith.constant 0 : index
    %301 = vector.load %arg6[%c4_182, %c0_183, %c0_184] : memref<8x32x32xf32, #tpu.memory_space<vmem>>, vector<1x32x32xf32>
    %302 = vector.shape_cast %301 : vector<1x32x32xf32> to vector<32x32xf32>
    %c4_185 = arith.constant 4 : index
    %c0_186 = arith.constant 0 : index
    %c0_187 = arith.constant 0 : index
    %303 = vector.load %arg7[%c4_185, %c0_186, %c0_187] : memref<8x1x32xf32, #tpu.memory_space<vmem>>, vector<1x1x32xf32>
    %304 = vector.shape_cast %303 : vector<1x1x32xf32> to vector<1x32xf32>
    %c4_188 = arith.constant 4 : index
    %c0_189 = arith.constant 0 : index
    %c0_190 = arith.constant 0 : index
    %305 = vector.load %arg8[%c4_188, %c0_189, %c0_190] : memref<8x32x64xf32, #tpu.memory_space<vmem>>, vector<1x32x64xf32>
    %306 = vector.shape_cast %305 : vector<1x32x64xf32> to vector<32x64xf32>
    %c4_191 = arith.constant 4 : index
    %c0_192 = arith.constant 0 : index
    %c0_193 = arith.constant 0 : index
    %307 = vector.load %arg9[%c4_191, %c0_192, %c0_193] : memref<8x1x64xf32, #tpu.memory_space<vmem>>, vector<1x1x64xf32>
    %308 = vector.shape_cast %307 : vector<1x1x64xf32> to vector<1x64xf32>
    %c4_194 = arith.constant 4 : index
    %c0_195 = arith.constant 0 : index
    %c0_196 = arith.constant 0 : index
    %309 = vector.load %arg10[%c4_194, %c0_195, %c0_196] : memref<8x32x32xf32, #tpu.memory_space<vmem>>, vector<1x32x32xf32>
    %310 = vector.shape_cast %309 : vector<1x32x32xf32> to vector<32x32xf32>
    %c4_197 = arith.constant 4 : index
    %c0_198 = arith.constant 0 : index
    %c0_199 = arith.constant 0 : index
    %311 = vector.load %arg11[%c4_197, %c0_198, %c0_199] : memref<8x1x32xf32, #tpu.memory_space<vmem>>, vector<1x1x32xf32>
    %312 = vector.shape_cast %311 : vector<1x1x32xf32> to vector<1x32xf32>
    %cst_200 = arith.constant dense<0.000000e+00> : vector<5x32xf32>
    %313 = tpu.matmul %168, %302, %cst_200 {dimension_numbers = #tpu.dot_dimension_numbers<[1], [0], [0], [1], [0, 0, 1, 1], [], []>} : vector<5x32xf32>, vector<32x32xf32>, vector<5x32xf32> -> vector<5x32xf32>
    %314 = vector.broadcast %304 : vector<1x32xf32> to vector<5x32xf32>
    %315 = arith.addf %313, %314 : vector<5x32xf32>
    %cst_201 = arith.constant dense<0.000000e+00> : vector<5x64xf32>
    %316 = tpu.matmul %168, %306, %cst_201 {dimension_numbers = #tpu.dot_dimension_numbers<[1], [0], [0], [1], [0, 0, 1, 1], [], []>} : vector<5x32xf32>, vector<32x64xf32>, vector<5x64xf32> -> vector<5x64xf32>
    %317 = vector.broadcast %308 : vector<1x64xf32> to vector<5x64xf32>
    %318 = arith.addf %316, %317 : vector<5x64xf32>
    %319 = vector.extract_strided_slice %318 {offsets = [0, 0], sizes = [5, 32], strides = [1, 1]} : vector<5x64xf32> to vector<5x32xf32>
    %320 = vector.extract_strided_slice %318 {offsets = [0, 32], sizes = [5, 32], strides = [1, 1]} : vector<5x64xf32> to vector<5x32xf32>
    %cst_202 = arith.constant dense<0.000000e+00> : vector<5x5xf32>
    %321 = tpu.matmul %315, %319, %cst_202 {dimension_numbers = #tpu.dot_dimension_numbers<[1], [1], [0], [0], [0, 0, 1, 0], [], []>} : vector<5x32xf32>, vector<5x32xf32>, vector<5x5xf32> -> vector<5x5xf32>
    %cst_203 = arith.constant dense<0xFF800000> : vector<5xf32>
    %322 = vector.multi_reduction <maximumf>, %321, %cst_203 [1] : vector<5x5xf32> to vector<5xf32>
    %323 = vector.shape_cast %322 : vector<5xf32> to vector<5x1xf32>
    %324 = vector.broadcast %323 : vector<5x1xf32> to vector<5x5xf32>
    %325 = arith.subf %321, %324 : vector<5x5xf32>
    %326 = math.exp %325 : vector<5x5xf32>
    %cst_204 = arith.constant dense<0.000000e+00> : vector<5xf32>
    %327 = vector.multi_reduction <add>, %326, %cst_204 [1] : vector<5x5xf32> to vector<5xf32>
    %328 = vector.shape_cast %327 : vector<5xf32> to vector<5x1xf32>
    %cst_205 = arith.constant dense<0.000000e+00> : vector<5x32xf32>
    %329 = tpu.matmul %326, %320, %cst_205 {dimension_numbers = #tpu.dot_dimension_numbers<[1], [0], [0], [1], [0, 0, 1, 1], [], []>} : vector<5x5xf32>, vector<5x32xf32>, vector<5x32xf32> -> vector<5x32xf32>
    %330 = tpu.reciprocal %328 {approx = true} : vector<5x1xf32> -> vector<5x1xf32>
    %331 = vector.broadcast %330 : vector<5x1xf32> to vector<5x32xf32>
    %332 = arith.mulf %329, %331 : vector<5x32xf32>
    %cst_206 = arith.constant dense<0.000000e+00> : vector<5x32xf32>
    %333 = tpu.matmul %332, %310, %cst_206 {dimension_numbers = #tpu.dot_dimension_numbers<[1], [0], [0], [1], [0, 0, 1, 1], [], []>} : vector<5x32xf32>, vector<32x32xf32>, vector<5x32xf32> -> vector<5x32xf32>
    %334 = vector.broadcast %312 : vector<1x32xf32> to vector<5x32xf32>
    %335 = arith.addf %333, %334 : vector<5x32xf32>
    %cst_207 = arith.constant dense<0.000000e+00> : vector<5xf32>
    %336 = vector.multi_reduction <add>, %335, %cst_207 [1] : vector<5x32xf32> to vector<5xf32>
    %337 = vector.shape_cast %336 : vector<5xf32> to vector<5x1xf32>
    %cst_208 = arith.constant 3.200000e+01 : f32
    %338 = vector.broadcast %cst_208 : f32 to vector<5x1xf32>
    %339 = arith.divf %337, %338 : vector<5x1xf32>
    %340 = vector.broadcast %339 : vector<5x1xf32> to vector<5x32xf32>
    %341 = arith.subf %335, %340 : vector<5x32xf32>
    %342 = arith.mulf %341, %341 : vector<5x32xf32>
    %cst_209 = arith.constant dense<0.000000e+00> : vector<5xf32>
    %343 = vector.multi_reduction <add>, %342, %cst_209 [1] : vector<5x32xf32> to vector<5xf32>
    %344 = vector.shape_cast %343 : vector<5xf32> to vector<5x1xf32>
    %cst_210 = arith.constant 3.200000e+01 : f32
    %345 = vector.broadcast %cst_210 : f32 to vector<5x1xf32>
    %346 = arith.divf %344, %345 : vector<5x1xf32>
    %cst_211 = arith.constant 9.99999974E-6 : f32
    %347 = vector.broadcast %cst_211 : f32 to vector<5x1xf32>
    %348 = arith.addf %346, %347 : vector<5x1xf32>
    %349 = math.rsqrt %348 : vector<5x1xf32>
    %350 = vector.broadcast %349 : vector<5x1xf32> to vector<5x32xf32>
    %351 = arith.mulf %341, %350 : vector<5x32xf32>
    %c5 = arith.constant 5 : index
    %c0_212 = arith.constant 0 : index
    %c0_213 = arith.constant 0 : index
    %352 = vector.load %arg12[%c5, %c0_212, %c0_213] : memref<10x1x32xf32, #tpu.memory_space<vmem>>, vector<1x1x32xf32>
    %353 = vector.shape_cast %352 : vector<1x1x32xf32> to vector<1x32xf32>
    %354 = vector.broadcast %353 : vector<1x32xf32> to vector<5x32xf32>
    %355 = arith.mulf %351, %354 : vector<5x32xf32>
    %c5_214 = arith.constant 5 : index
    %c0_215 = arith.constant 0 : index
    %c0_216 = arith.constant 0 : index
    %356 = vector.load %arg13[%c5_214, %c0_215, %c0_216] : memref<10x1x32xf32, #tpu.memory_space<vmem>>, vector<1x1x32xf32>
    %357 = vector.shape_cast %356 : vector<1x1x32xf32> to vector<1x32xf32>
    %358 = vector.broadcast %357 : vector<1x32xf32> to vector<5x32xf32>
    %359 = arith.addf %355, %358 : vector<5x32xf32>
    %c5_217 = arith.constant 5 : index
    %c0_218 = arith.constant 0 : index
    %c0_219 = arith.constant 0 : index
    %360 = vector.load %arg6[%c5_217, %c0_218, %c0_219] : memref<8x32x32xf32, #tpu.memory_space<vmem>>, vector<1x32x32xf32>
    %361 = vector.shape_cast %360 : vector<1x32x32xf32> to vector<32x32xf32>
    %c5_220 = arith.constant 5 : index
    %c0_221 = arith.constant 0 : index
    %c0_222 = arith.constant 0 : index
    %362 = vector.load %arg7[%c5_220, %c0_221, %c0_222] : memref<8x1x32xf32, #tpu.memory_space<vmem>>, vector<1x1x32xf32>
    %363 = vector.shape_cast %362 : vector<1x1x32xf32> to vector<1x32xf32>
    %c5_223 = arith.constant 5 : index
    %c0_224 = arith.constant 0 : index
    %c0_225 = arith.constant 0 : index
    %364 = vector.load %arg8[%c5_223, %c0_224, %c0_225] : memref<8x32x64xf32, #tpu.memory_space<vmem>>, vector<1x32x64xf32>
    %365 = vector.shape_cast %364 : vector<1x32x64xf32> to vector<32x64xf32>
    %c5_226 = arith.constant 5 : index
    %c0_227 = arith.constant 0 : index
    %c0_228 = arith.constant 0 : index
    %366 = vector.load %arg9[%c5_226, %c0_227, %c0_228] : memref<8x1x64xf32, #tpu.memory_space<vmem>>, vector<1x1x64xf32>
    %367 = vector.shape_cast %366 : vector<1x1x64xf32> to vector<1x64xf32>
    %c5_229 = arith.constant 5 : index
    %c0_230 = arith.constant 0 : index
    %c0_231 = arith.constant 0 : index
    %368 = vector.load %arg10[%c5_229, %c0_230, %c0_231] : memref<8x32x32xf32, #tpu.memory_space<vmem>>, vector<1x32x32xf32>
    %369 = vector.shape_cast %368 : vector<1x32x32xf32> to vector<32x32xf32>
    %c5_232 = arith.constant 5 : index
    %c0_233 = arith.constant 0 : index
    %c0_234 = arith.constant 0 : index
    %370 = vector.load %arg11[%c5_232, %c0_233, %c0_234] : memref<8x1x32xf32, #tpu.memory_space<vmem>>, vector<1x1x32xf32>
    %371 = vector.shape_cast %370 : vector<1x1x32xf32> to vector<1x32xf32>
    %cst_235 = arith.constant dense<0.000000e+00> : vector<5x32xf32>
    %372 = tpu.matmul %359, %361, %cst_235 {dimension_numbers = #tpu.dot_dimension_numbers<[1], [0], [0], [1], [0, 0, 1, 1], [], []>} : vector<5x32xf32>, vector<32x32xf32>, vector<5x32xf32> -> vector<5x32xf32>
    %373 = vector.broadcast %363 : vector<1x32xf32> to vector<5x32xf32>
    %374 = arith.addf %372, %373 : vector<5x32xf32>
    %cst_236 = arith.constant dense<0.000000e+00> : vector<27x64xf32>
    %375 = tpu.matmul %228, %365, %cst_236 {dimension_numbers = #tpu.dot_dimension_numbers<[1], [0], [0], [1], [0, 0, 1, 1], [], []>} : vector<27x32xf32>, vector<32x64xf32>, vector<27x64xf32> -> vector<27x64xf32>
    %376 = vector.broadcast %367 : vector<1x64xf32> to vector<27x64xf32>
    %377 = arith.addf %375, %376 : vector<27x64xf32>
    %378 = vector.extract_strided_slice %377 {offsets = [0, 0], sizes = [27, 32], strides = [1, 1]} : vector<27x64xf32> to vector<27x32xf32>
    %379 = vector.extract_strided_slice %377 {offsets = [0, 32], sizes = [27, 32], strides = [1, 1]} : vector<27x64xf32> to vector<27x32xf32>
    %cst_237 = arith.constant dense<0.000000e+00> : vector<5x27xf32>
    %380 = tpu.matmul %374, %378, %cst_237 {dimension_numbers = #tpu.dot_dimension_numbers<[1], [1], [0], [0], [0, 0, 1, 0], [], []>} : vector<5x32xf32>, vector<27x32xf32>, vector<5x27xf32> -> vector<5x27xf32>
    %cst_238 = arith.constant dense<0xFF800000> : vector<5xf32>
    %381 = vector.multi_reduction <maximumf>, %380, %cst_238 [1] : vector<5x27xf32> to vector<5xf32>
    %382 = vector.shape_cast %381 : vector<5xf32> to vector<5x1xf32>
    %383 = vector.broadcast %382 : vector<5x1xf32> to vector<5x27xf32>
    %384 = arith.subf %380, %383 : vector<5x27xf32>
    %385 = math.exp %384 : vector<5x27xf32>
    %cst_239 = arith.constant dense<0.000000e+00> : vector<5xf32>
    %386 = vector.multi_reduction <add>, %385, %cst_239 [1] : vector<5x27xf32> to vector<5xf32>
    %387 = vector.shape_cast %386 : vector<5xf32> to vector<5x1xf32>
    %cst_240 = arith.constant dense<0.000000e+00> : vector<5x32xf32>
    %388 = tpu.matmul %385, %379, %cst_240 {dimension_numbers = #tpu.dot_dimension_numbers<[1], [0], [0], [1], [0, 0, 1, 1], [], []>} : vector<5x27xf32>, vector<27x32xf32>, vector<5x32xf32> -> vector<5x32xf32>
    %389 = tpu.reciprocal %387 {approx = true} : vector<5x1xf32> -> vector<5x1xf32>
    %390 = vector.broadcast %389 : vector<5x1xf32> to vector<5x32xf32>
    %391 = arith.mulf %388, %390 : vector<5x32xf32>
    %cst_241 = arith.constant dense<0.000000e+00> : vector<5x32xf32>
    %392 = tpu.matmul %391, %369, %cst_241 {dimension_numbers = #tpu.dot_dimension_numbers<[1], [0], [0], [1], [0, 0, 1, 1], [], []>} : vector<5x32xf32>, vector<32x32xf32>, vector<5x32xf32> -> vector<5x32xf32>
    %393 = vector.broadcast %371 : vector<1x32xf32> to vector<5x32xf32>
    %394 = arith.addf %392, %393 : vector<5x32xf32>
    %395 = arith.addf %359, %394 : vector<5x32xf32>
    %cst_242 = arith.constant dense<0.000000e+00> : vector<5xf32>
    %396 = vector.multi_reduction <add>, %395, %cst_242 [1] : vector<5x32xf32> to vector<5xf32>
    %397 = vector.shape_cast %396 : vector<5xf32> to vector<5x1xf32>
    %cst_243 = arith.constant 3.200000e+01 : f32
    %398 = vector.broadcast %cst_243 : f32 to vector<5x1xf32>
    %399 = arith.divf %397, %398 : vector<5x1xf32>
    %400 = vector.broadcast %399 : vector<5x1xf32> to vector<5x32xf32>
    %401 = arith.subf %395, %400 : vector<5x32xf32>
    %402 = arith.mulf %401, %401 : vector<5x32xf32>
    %cst_244 = arith.constant dense<0.000000e+00> : vector<5xf32>
    %403 = vector.multi_reduction <add>, %402, %cst_244 [1] : vector<5x32xf32> to vector<5xf32>
    %404 = vector.shape_cast %403 : vector<5xf32> to vector<5x1xf32>
    %cst_245 = arith.constant 3.200000e+01 : f32
    %405 = vector.broadcast %cst_245 : f32 to vector<5x1xf32>
    %406 = arith.divf %404, %405 : vector<5x1xf32>
    %cst_246 = arith.constant 9.99999974E-6 : f32
    %407 = vector.broadcast %cst_246 : f32 to vector<5x1xf32>
    %408 = arith.addf %406, %407 : vector<5x1xf32>
    %409 = math.rsqrt %408 : vector<5x1xf32>
    %410 = vector.broadcast %409 : vector<5x1xf32> to vector<5x32xf32>
    %411 = arith.mulf %401, %410 : vector<5x32xf32>
    %c6 = arith.constant 6 : index
    %c0_247 = arith.constant 0 : index
    %c0_248 = arith.constant 0 : index
    %412 = vector.load %arg12[%c6, %c0_247, %c0_248] : memref<10x1x32xf32, #tpu.memory_space<vmem>>, vector<1x1x32xf32>
    %413 = vector.shape_cast %412 : vector<1x1x32xf32> to vector<1x32xf32>
    %414 = vector.broadcast %413 : vector<1x32xf32> to vector<5x32xf32>
    %415 = arith.mulf %411, %414 : vector<5x32xf32>
    %c6_249 = arith.constant 6 : index
    %c0_250 = arith.constant 0 : index
    %c0_251 = arith.constant 0 : index
    %416 = vector.load %arg13[%c6_249, %c0_250, %c0_251] : memref<10x1x32xf32, #tpu.memory_space<vmem>>, vector<1x1x32xf32>
    %417 = vector.shape_cast %416 : vector<1x1x32xf32> to vector<1x32xf32>
    %418 = vector.broadcast %417 : vector<1x32xf32> to vector<5x32xf32>
    %419 = arith.addf %415, %418 : vector<5x32xf32>
    %c1_252 = arith.constant 1 : index
    %c0_253 = arith.constant 0 : index
    %c0_254 = arith.constant 0 : index
    %420 = vector.load %arg14[%c1_252, %c0_253, %c0_254] : memref<2x32x64xf32, #tpu.memory_space<vmem>>, vector<1x32x64xf32>
    %421 = vector.shape_cast %420 : vector<1x32x64xf32> to vector<32x64xf32>
    %cst_255 = arith.constant dense<0.000000e+00> : vector<5x64xf32>
    %422 = tpu.matmul %419, %421, %cst_255 {dimension_numbers = #tpu.dot_dimension_numbers<[1], [0], [0], [1], [0, 0, 1, 1], [], []>} : vector<5x32xf32>, vector<32x64xf32>, vector<5x64xf32> -> vector<5x64xf32>
    %c1_256 = arith.constant 1 : index
    %c0_257 = arith.constant 0 : index
    %c0_258 = arith.constant 0 : index
    %423 = vector.load %arg15[%c1_256, %c0_257, %c0_258] : memref<2x1x64xf32, #tpu.memory_space<vmem>>, vector<1x1x64xf32>
    %424 = vector.shape_cast %423 : vector<1x1x64xf32> to vector<1x64xf32>
    %425 = vector.broadcast %424 : vector<1x64xf32> to vector<5x64xf32>
    %426 = arith.addf %422, %425 : vector<5x64xf32>
    %cst_259 = arith.constant 0.000000e+00 : f32
    %427 = vector.broadcast %cst_259 : f32 to vector<5x64xf32>
    %428 = arith.maximumf %426, %427 : vector<5x64xf32>
    %c1_260 = arith.constant 1 : index
    %c0_261 = arith.constant 0 : index
    %c0_262 = arith.constant 0 : index
    %429 = vector.load %arg16[%c1_260, %c0_261, %c0_262] : memref<2x64x32xf32, #tpu.memory_space<vmem>>, vector<1x64x32xf32>
    %430 = vector.shape_cast %429 : vector<1x64x32xf32> to vector<64x32xf32>
    %cst_263 = arith.constant dense<0.000000e+00> : vector<5x32xf32>
    %431 = tpu.matmul %428, %430, %cst_263 {dimension_numbers = #tpu.dot_dimension_numbers<[1], [0], [0], [1], [0, 0, 1, 1], [], []>} : vector<5x64xf32>, vector<64x32xf32>, vector<5x32xf32> -> vector<5x32xf32>
    %c1_264 = arith.constant 1 : index
    %c0_265 = arith.constant 0 : index
    %c0_266 = arith.constant 0 : index
    %432 = vector.load %arg17[%c1_264, %c0_265, %c0_266] : memref<2x1x32xf32, #tpu.memory_space<vmem>>, vector<1x1x32xf32>
    %433 = vector.shape_cast %432 : vector<1x1x32xf32> to vector<1x32xf32>
    %434 = vector.broadcast %433 : vector<1x32xf32> to vector<5x32xf32>
    %435 = arith.addf %431, %434 : vector<5x32xf32>
    %436 = arith.addf %419, %435 : vector<5x32xf32>
    %cst_267 = arith.constant dense<0.000000e+00> : vector<5xf32>
    %437 = vector.multi_reduction <add>, %436, %cst_267 [1] : vector<5x32xf32> to vector<5xf32>
    %438 = vector.shape_cast %437 : vector<5xf32> to vector<5x1xf32>
    %cst_268 = arith.constant 3.200000e+01 : f32
    %439 = vector.broadcast %cst_268 : f32 to vector<5x1xf32>
    %440 = arith.divf %438, %439 : vector<5x1xf32>
    %441 = vector.broadcast %440 : vector<5x1xf32> to vector<5x32xf32>
    %442 = arith.subf %436, %441 : vector<5x32xf32>
    %443 = arith.mulf %442, %442 : vector<5x32xf32>
    %cst_269 = arith.constant dense<0.000000e+00> : vector<5xf32>
    %444 = vector.multi_reduction <add>, %443, %cst_269 [1] : vector<5x32xf32> to vector<5xf32>
    %445 = vector.shape_cast %444 : vector<5xf32> to vector<5x1xf32>
    %cst_270 = arith.constant 3.200000e+01 : f32
    %446 = vector.broadcast %cst_270 : f32 to vector<5x1xf32>
    %447 = arith.divf %445, %446 : vector<5x1xf32>
    %cst_271 = arith.constant 9.99999974E-6 : f32
    %448 = vector.broadcast %cst_271 : f32 to vector<5x1xf32>
    %449 = arith.addf %447, %448 : vector<5x1xf32>
    %450 = math.rsqrt %449 : vector<5x1xf32>
    %451 = vector.broadcast %450 : vector<5x1xf32> to vector<5x32xf32>
    %452 = arith.mulf %442, %451 : vector<5x32xf32>
    %c7 = arith.constant 7 : index
    %c0_272 = arith.constant 0 : index
    %c0_273 = arith.constant 0 : index
    %453 = vector.load %arg12[%c7, %c0_272, %c0_273] : memref<10x1x32xf32, #tpu.memory_space<vmem>>, vector<1x1x32xf32>
    %454 = vector.shape_cast %453 : vector<1x1x32xf32> to vector<1x32xf32>
    %455 = vector.broadcast %454 : vector<1x32xf32> to vector<5x32xf32>
    %456 = arith.mulf %452, %455 : vector<5x32xf32>
    %c7_274 = arith.constant 7 : index
    %c0_275 = arith.constant 0 : index
    %c0_276 = arith.constant 0 : index
    %457 = vector.load %arg13[%c7_274, %c0_275, %c0_276] : memref<10x1x32xf32, #tpu.memory_space<vmem>>, vector<1x1x32xf32>
    %458 = vector.shape_cast %457 : vector<1x1x32xf32> to vector<1x32xf32>
    %459 = vector.broadcast %458 : vector<1x32xf32> to vector<5x32xf32>
    %460 = arith.addf %456, %459 : vector<5x32xf32>
    %c6_277 = arith.constant 6 : index
    %c0_278 = arith.constant 0 : index
    %c0_279 = arith.constant 0 : index
    %461 = vector.load %arg6[%c6_277, %c0_278, %c0_279] : memref<8x32x32xf32, #tpu.memory_space<vmem>>, vector<1x32x32xf32>
    %462 = vector.shape_cast %461 : vector<1x32x32xf32> to vector<32x32xf32>
    %c6_280 = arith.constant 6 : index
    %c0_281 = arith.constant 0 : index
    %c0_282 = arith.constant 0 : index
    %463 = vector.load %arg7[%c6_280, %c0_281, %c0_282] : memref<8x1x32xf32, #tpu.memory_space<vmem>>, vector<1x1x32xf32>
    %464 = vector.shape_cast %463 : vector<1x1x32xf32> to vector<1x32xf32>
    %c6_283 = arith.constant 6 : index
    %c0_284 = arith.constant 0 : index
    %c0_285 = arith.constant 0 : index
    %465 = vector.load %arg8[%c6_283, %c0_284, %c0_285] : memref<8x32x64xf32, #tpu.memory_space<vmem>>, vector<1x32x64xf32>
    %466 = vector.shape_cast %465 : vector<1x32x64xf32> to vector<32x64xf32>
    %c6_286 = arith.constant 6 : index
    %c0_287 = arith.constant 0 : index
    %c0_288 = arith.constant 0 : index
    %467 = vector.load %arg9[%c6_286, %c0_287, %c0_288] : memref<8x1x64xf32, #tpu.memory_space<vmem>>, vector<1x1x64xf32>
    %468 = vector.shape_cast %467 : vector<1x1x64xf32> to vector<1x64xf32>
    %c6_289 = arith.constant 6 : index
    %c0_290 = arith.constant 0 : index
    %c0_291 = arith.constant 0 : index
    %469 = vector.load %arg10[%c6_289, %c0_290, %c0_291] : memref<8x32x32xf32, #tpu.memory_space<vmem>>, vector<1x32x32xf32>
    %470 = vector.shape_cast %469 : vector<1x32x32xf32> to vector<32x32xf32>
    %c6_292 = arith.constant 6 : index
    %c0_293 = arith.constant 0 : index
    %c0_294 = arith.constant 0 : index
    %471 = vector.load %arg11[%c6_292, %c0_293, %c0_294] : memref<8x1x32xf32, #tpu.memory_space<vmem>>, vector<1x1x32xf32>
    %472 = vector.shape_cast %471 : vector<1x1x32xf32> to vector<1x32xf32>
    %cst_295 = arith.constant dense<0.000000e+00> : vector<27x32xf32>
    %473 = tpu.matmul %228, %462, %cst_295 {dimension_numbers = #tpu.dot_dimension_numbers<[1], [0], [0], [1], [0, 0, 1, 1], [], []>} : vector<27x32xf32>, vector<32x32xf32>, vector<27x32xf32> -> vector<27x32xf32>
    %474 = vector.broadcast %464 : vector<1x32xf32> to vector<27x32xf32>
    %475 = arith.addf %473, %474 : vector<27x32xf32>
    %cst_296 = arith.constant dense<0.000000e+00> : vector<5x64xf32>
    %476 = tpu.matmul %460, %466, %cst_296 {dimension_numbers = #tpu.dot_dimension_numbers<[1], [0], [0], [1], [0, 0, 1, 1], [], []>} : vector<5x32xf32>, vector<32x64xf32>, vector<5x64xf32> -> vector<5x64xf32>
    %477 = vector.broadcast %468 : vector<1x64xf32> to vector<5x64xf32>
    %478 = arith.addf %476, %477 : vector<5x64xf32>
    %479 = vector.extract_strided_slice %478 {offsets = [0, 0], sizes = [5, 32], strides = [1, 1]} : vector<5x64xf32> to vector<5x32xf32>
    %480 = vector.extract_strided_slice %478 {offsets = [0, 32], sizes = [5, 32], strides = [1, 1]} : vector<5x64xf32> to vector<5x32xf32>
    %cst_297 = arith.constant dense<0.000000e+00> : vector<27x5xf32>
    %481 = tpu.matmul %475, %479, %cst_297 {dimension_numbers = #tpu.dot_dimension_numbers<[1], [1], [0], [0], [0, 0, 1, 0], [], []>} : vector<27x32xf32>, vector<5x32xf32>, vector<27x5xf32> -> vector<27x5xf32>
    %cst_298 = arith.constant dense<0xFF800000> : vector<27xf32>
    %482 = vector.multi_reduction <maximumf>, %481, %cst_298 [1] : vector<27x5xf32> to vector<27xf32>
    %483 = vector.shape_cast %482 : vector<27xf32> to vector<27x1xf32>
    %484 = vector.broadcast %483 : vector<27x1xf32> to vector<27x5xf32>
    %485 = arith.subf %481, %484 : vector<27x5xf32>
    %486 = math.exp %485 : vector<27x5xf32>
    %cst_299 = arith.constant dense<0.000000e+00> : vector<27xf32>
    %487 = vector.multi_reduction <add>, %486, %cst_299 [1] : vector<27x5xf32> to vector<27xf32>
    %488 = vector.shape_cast %487 : vector<27xf32> to vector<27x1xf32>
    %cst_300 = arith.constant dense<0.000000e+00> : vector<27x32xf32>
    %489 = tpu.matmul %486, %480, %cst_300 {dimension_numbers = #tpu.dot_dimension_numbers<[1], [0], [0], [1], [0, 0, 1, 1], [], []>} : vector<27x5xf32>, vector<5x32xf32>, vector<27x32xf32> -> vector<27x32xf32>
    %490 = tpu.reciprocal %488 {approx = true} : vector<27x1xf32> -> vector<27x1xf32>
    %491 = vector.broadcast %490 : vector<27x1xf32> to vector<27x32xf32>
    %492 = arith.mulf %489, %491 : vector<27x32xf32>
    %cst_301 = arith.constant dense<0.000000e+00> : vector<27x32xf32>
    %493 = tpu.matmul %492, %470, %cst_301 {dimension_numbers = #tpu.dot_dimension_numbers<[1], [0], [0], [1], [0, 0, 1, 1], [], []>} : vector<27x32xf32>, vector<32x32xf32>, vector<27x32xf32> -> vector<27x32xf32>
    %494 = vector.broadcast %472 : vector<1x32xf32> to vector<27x32xf32>
    %495 = arith.addf %493, %494 : vector<27x32xf32>
    %496 = arith.addf %228, %495 : vector<27x32xf32>
    %cst_302 = arith.constant dense<0.000000e+00> : vector<27xf32>
    %497 = vector.multi_reduction <add>, %496, %cst_302 [1] : vector<27x32xf32> to vector<27xf32>
    %498 = vector.shape_cast %497 : vector<27xf32> to vector<27x1xf32>
    %cst_303 = arith.constant 3.200000e+01 : f32
    %499 = vector.broadcast %cst_303 : f32 to vector<27x1xf32>
    %500 = arith.divf %498, %499 : vector<27x1xf32>
    %501 = vector.broadcast %500 : vector<27x1xf32> to vector<27x32xf32>
    %502 = arith.subf %496, %501 : vector<27x32xf32>
    %503 = arith.mulf %502, %502 : vector<27x32xf32>
    %cst_304 = arith.constant dense<0.000000e+00> : vector<27xf32>
    %504 = vector.multi_reduction <add>, %503, %cst_304 [1] : vector<27x32xf32> to vector<27xf32>
    %505 = vector.shape_cast %504 : vector<27xf32> to vector<27x1xf32>
    %cst_305 = arith.constant 3.200000e+01 : f32
    %506 = vector.broadcast %cst_305 : f32 to vector<27x1xf32>
    %507 = arith.divf %505, %506 : vector<27x1xf32>
    %cst_306 = arith.constant 9.99999974E-6 : f32
    %508 = vector.broadcast %cst_306 : f32 to vector<27x1xf32>
    %509 = arith.addf %507, %508 : vector<27x1xf32>
    %510 = math.rsqrt %509 : vector<27x1xf32>
    %511 = vector.broadcast %510 : vector<27x1xf32> to vector<27x32xf32>
    %512 = arith.mulf %502, %511 : vector<27x32xf32>
    %c8 = arith.constant 8 : index
    %c0_307 = arith.constant 0 : index
    %c0_308 = arith.constant 0 : index
    %513 = vector.load %arg12[%c8, %c0_307, %c0_308] : memref<10x1x32xf32, #tpu.memory_space<vmem>>, vector<1x1x32xf32>
    %514 = vector.shape_cast %513 : vector<1x1x32xf32> to vector<1x32xf32>
    %515 = vector.broadcast %514 : vector<1x32xf32> to vector<27x32xf32>
    %516 = arith.mulf %512, %515 : vector<27x32xf32>
    %c8_309 = arith.constant 8 : index
    %c0_310 = arith.constant 0 : index
    %c0_311 = arith.constant 0 : index
    %517 = vector.load %arg13[%c8_309, %c0_310, %c0_311] : memref<10x1x32xf32, #tpu.memory_space<vmem>>, vector<1x1x32xf32>
    %518 = vector.shape_cast %517 : vector<1x1x32xf32> to vector<1x32xf32>
    %519 = vector.broadcast %518 : vector<1x32xf32> to vector<27x32xf32>
    %520 = arith.addf %516, %519 : vector<27x32xf32>
    %c7_312 = arith.constant 7 : index
    %c0_313 = arith.constant 0 : index
    %c0_314 = arith.constant 0 : index
    %521 = vector.load %arg6[%c7_312, %c0_313, %c0_314] : memref<8x32x32xf32, #tpu.memory_space<vmem>>, vector<1x32x32xf32>
    %522 = vector.shape_cast %521 : vector<1x32x32xf32> to vector<32x32xf32>
    %c7_315 = arith.constant 7 : index
    %c0_316 = arith.constant 0 : index
    %c0_317 = arith.constant 0 : index
    %523 = vector.load %arg7[%c7_315, %c0_316, %c0_317] : memref<8x1x32xf32, #tpu.memory_space<vmem>>, vector<1x1x32xf32>
    %524 = vector.shape_cast %523 : vector<1x1x32xf32> to vector<1x32xf32>
    %c7_318 = arith.constant 7 : index
    %c0_319 = arith.constant 0 : index
    %c0_320 = arith.constant 0 : index
    %525 = vector.load %arg8[%c7_318, %c0_319, %c0_320] : memref<8x32x64xf32, #tpu.memory_space<vmem>>, vector<1x32x64xf32>
    %526 = vector.shape_cast %525 : vector<1x32x64xf32> to vector<32x64xf32>
    %c7_321 = arith.constant 7 : index
    %c0_322 = arith.constant 0 : index
    %c0_323 = arith.constant 0 : index
    %527 = vector.load %arg9[%c7_321, %c0_322, %c0_323] : memref<8x1x64xf32, #tpu.memory_space<vmem>>, vector<1x1x64xf32>
    %528 = vector.shape_cast %527 : vector<1x1x64xf32> to vector<1x64xf32>
    %c7_324 = arith.constant 7 : index
    %c0_325 = arith.constant 0 : index
    %c0_326 = arith.constant 0 : index
    %529 = vector.load %arg10[%c7_324, %c0_325, %c0_326] : memref<8x32x32xf32, #tpu.memory_space<vmem>>, vector<1x32x32xf32>
    %530 = vector.shape_cast %529 : vector<1x32x32xf32> to vector<32x32xf32>
    %c7_327 = arith.constant 7 : index
    %c0_328 = arith.constant 0 : index
    %c0_329 = arith.constant 0 : index
    %531 = vector.load %arg11[%c7_327, %c0_328, %c0_329] : memref<8x1x32xf32, #tpu.memory_space<vmem>>, vector<1x1x32xf32>
    %532 = vector.shape_cast %531 : vector<1x1x32xf32> to vector<1x32xf32>
    %cst_330 = arith.constant dense<0.000000e+00> : vector<1x32xf32>
    %533 = tpu.matmul %300, %522, %cst_330 {dimension_numbers = #tpu.dot_dimension_numbers<[1], [0], [0], [1], [0, 0, 1, 1], [], []>} : vector<1x32xf32>, vector<32x32xf32>, vector<1x32xf32> -> vector<1x32xf32>
    %534 = arith.addf %533, %524 : vector<1x32xf32>
    %cst_331 = arith.constant dense<0.000000e+00> : vector<5x64xf32>
    %535 = tpu.matmul %460, %526, %cst_331 {dimension_numbers = #tpu.dot_dimension_numbers<[1], [0], [0], [1], [0, 0, 1, 1], [], []>} : vector<5x32xf32>, vector<32x64xf32>, vector<5x64xf32> -> vector<5x64xf32>
    %536 = vector.broadcast %528 : vector<1x64xf32> to vector<5x64xf32>
    %537 = arith.addf %535, %536 : vector<5x64xf32>
    %538 = vector.extract_strided_slice %537 {offsets = [0, 0], sizes = [5, 32], strides = [1, 1]} : vector<5x64xf32> to vector<5x32xf32>
    %539 = vector.extract_strided_slice %537 {offsets = [0, 32], sizes = [5, 32], strides = [1, 1]} : vector<5x64xf32> to vector<5x32xf32>
    %cst_332 = arith.constant dense<0.000000e+00> : vector<1x5xf32>
    %540 = tpu.matmul %534, %538, %cst_332 {dimension_numbers = #tpu.dot_dimension_numbers<[1], [1], [0], [0], [0, 0, 1, 0], [], []>} : vector<1x32xf32>, vector<5x32xf32>, vector<1x5xf32> -> vector<1x5xf32>
    %cst_333 = arith.constant dense<0.000000e+00> : vector<27x64xf32>
    %541 = tpu.matmul %520, %526, %cst_333 {dimension_numbers = #tpu.dot_dimension_numbers<[1], [0], [0], [1], [0, 0, 1, 1], [], []>} : vector<27x32xf32>, vector<32x64xf32>, vector<27x64xf32> -> vector<27x64xf32>
    %542 = vector.broadcast %528 : vector<1x64xf32> to vector<27x64xf32>
    %543 = arith.addf %541, %542 : vector<27x64xf32>
    %544 = vector.extract_strided_slice %543 {offsets = [0, 0], sizes = [27, 32], strides = [1, 1]} : vector<27x64xf32> to vector<27x32xf32>
    %545 = vector.extract_strided_slice %543 {offsets = [0, 32], sizes = [27, 32], strides = [1, 1]} : vector<27x64xf32> to vector<27x32xf32>
    %cst_334 = arith.constant dense<0.000000e+00> : vector<1x27xf32>
    %546 = tpu.matmul %534, %544, %cst_334 {dimension_numbers = #tpu.dot_dimension_numbers<[1], [1], [0], [0], [0, 0, 1, 0], [], []>} : vector<1x32xf32>, vector<27x32xf32>, vector<1x27xf32> -> vector<1x27xf32>
    %cst_335 = arith.constant dense<0xFF800000> : vector<1xf32>
    %547 = vector.multi_reduction <maximumf>, %540, %cst_335 [1] : vector<1x5xf32> to vector<1xf32>
    %548 = vector.shape_cast %547 : vector<1xf32> to vector<1x1xf32>
    %cst_336 = arith.constant dense<0xFF800000> : vector<1xf32>
    %549 = vector.multi_reduction <maximumf>, %546, %cst_336 [1] : vector<1x27xf32> to vector<1xf32>
    %550 = vector.shape_cast %549 : vector<1xf32> to vector<1x1xf32>
    %551 = arith.maximumf %548, %550 : vector<1x1xf32>
    %552 = vector.broadcast %551 : vector<1x1xf32> to vector<1x5xf32>
    %553 = arith.subf %540, %552 : vector<1x5xf32>
    %554 = math.exp %553 : vector<1x5xf32>
    %cst_337 = arith.constant dense<0.000000e+00> : vector<1xf32>
    %555 = vector.multi_reduction <add>, %554, %cst_337 [1] : vector<1x5xf32> to vector<1xf32>
    %556 = vector.shape_cast %555 : vector<1xf32> to vector<1x1xf32>
    %cst_338 = arith.constant dense<0.000000e+00> : vector<1x32xf32>
    %557 = tpu.matmul %554, %539, %cst_338 {dimension_numbers = #tpu.dot_dimension_numbers<[1], [0], [0], [1], [0, 0, 1, 1], [], []>} : vector<1x5xf32>, vector<5x32xf32>, vector<1x32xf32> -> vector<1x32xf32>
    %558 = vector.broadcast %551 : vector<1x1xf32> to vector<1x27xf32>
    %559 = arith.subf %546, %558 : vector<1x27xf32>
    %560 = math.exp %559 : vector<1x27xf32>
    %cst_339 = arith.constant dense<0.000000e+00> : vector<1xf32>
    %561 = vector.multi_reduction <add>, %560, %cst_339 [1] : vector<1x27xf32> to vector<1xf32>
    %562 = vector.shape_cast %561 : vector<1xf32> to vector<1x1xf32>
    %cst_340 = arith.constant dense<0.000000e+00> : vector<1x32xf32>
    %563 = tpu.matmul %560, %545, %cst_340 {dimension_numbers = #tpu.dot_dimension_numbers<[1], [0], [0], [1], [0, 0, 1, 1], [], []>} : vector<1x27xf32>, vector<27x32xf32>, vector<1x32xf32> -> vector<1x32xf32>
    %564 = arith.addf %557, %563 : vector<1x32xf32>
    %565 = arith.addf %556, %562 : vector<1x1xf32>
    %566 = tpu.reciprocal %565 {approx = true} : vector<1x1xf32> -> vector<1x1xf32>
    %567 = vector.broadcast %566 : vector<1x1xf32> to vector<1x32xf32>
    %568 = arith.mulf %564, %567 : vector<1x32xf32>
    %cst_341 = arith.constant dense<0.000000e+00> : vector<1x32xf32>
    %569 = tpu.matmul %568, %530, %cst_341 {dimension_numbers = #tpu.dot_dimension_numbers<[1], [0], [0], [1], [0, 0, 1, 1], [], []>} : vector<1x32xf32>, vector<32x32xf32>, vector<1x32xf32> -> vector<1x32xf32>
    %570 = arith.addf %569, %532 : vector<1x32xf32>
    %cst_342 = arith.constant dense<0.000000e+00> : vector<1xf32>
    %571 = vector.multi_reduction <add>, %570, %cst_342 [1] : vector<1x32xf32> to vector<1xf32>
    %572 = vector.shape_cast %571 : vector<1xf32> to vector<1x1xf32>
    %cst_343 = arith.constant 3.200000e+01 : f32
    %573 = vector.broadcast %cst_343 : f32 to vector<1x1xf32>
    %574 = arith.divf %572, %573 : vector<1x1xf32>
    %575 = vector.broadcast %574 : vector<1x1xf32> to vector<1x32xf32>
    %576 = arith.subf %570, %575 : vector<1x32xf32>
    %577 = arith.mulf %576, %576 : vector<1x32xf32>
    %cst_344 = arith.constant dense<0.000000e+00> : vector<1xf32>
    %578 = vector.multi_reduction <add>, %577, %cst_344 [1] : vector<1x32xf32> to vector<1xf32>
    %579 = vector.shape_cast %578 : vector<1xf32> to vector<1x1xf32>
    %cst_345 = arith.constant 3.200000e+01 : f32
    %580 = vector.broadcast %cst_345 : f32 to vector<1x1xf32>
    %581 = arith.divf %579, %580 : vector<1x1xf32>
    %cst_346 = arith.constant 9.99999974E-6 : f32
    %582 = vector.broadcast %cst_346 : f32 to vector<1x1xf32>
    %583 = arith.addf %581, %582 : vector<1x1xf32>
    %584 = math.rsqrt %583 : vector<1x1xf32>
    %585 = vector.broadcast %584 : vector<1x1xf32> to vector<1x32xf32>
    %586 = arith.mulf %576, %585 : vector<1x32xf32>
    %c9 = arith.constant 9 : index
    %c0_347 = arith.constant 0 : index
    %c0_348 = arith.constant 0 : index
    %587 = vector.load %arg12[%c9, %c0_347, %c0_348] : memref<10x1x32xf32, #tpu.memory_space<vmem>>, vector<1x1x32xf32>
    %588 = vector.shape_cast %587 : vector<1x1x32xf32> to vector<1x32xf32>
    %589 = arith.mulf %586, %588 : vector<1x32xf32>
    %c9_349 = arith.constant 9 : index
    %c0_350 = arith.constant 0 : index
    %c0_351 = arith.constant 0 : index
    %590 = vector.load %arg13[%c9_349, %c0_350, %c0_351] : memref<10x1x32xf32, #tpu.memory_space<vmem>>, vector<1x1x32xf32>
    %591 = vector.shape_cast %590 : vector<1x1x32xf32> to vector<1x32xf32>
    %592 = arith.addf %589, %591 : vector<1x32xf32>
    %c0_352 = arith.constant 0 : index
    %c0_353 = arith.constant 0 : index
    %593 = vector.load %arg18[%c0_352, %c0_353] : memref<32x3xf32, #tpu.memory_space<vmem>>, vector<32x3xf32>
    %cst_354 = arith.constant dense<0.000000e+00> : vector<1x3xf32>
    %594 = tpu.matmul %592, %593, %cst_354 {dimension_numbers = #tpu.dot_dimension_numbers<[1], [0], [0], [1], [0, 0, 1, 1], [], []>} : vector<1x32xf32>, vector<32x3xf32>, vector<1x3xf32> -> vector<1x3xf32>
    %c0_355 = arith.constant 0 : index
    %c0_356 = arith.constant 0 : index
    %595 = vector.load %arg19[%c0_355, %c0_356] : memref<1x3xf32, #tpu.memory_space<vmem>>, vector<1x3xf32>
    %596 = arith.addf %594, %595 : vector<1x3xf32>
    %c0_357 = arith.constant 0 : index
    %c0_358 = arith.constant 0 : index
    %c0_359 = arith.constant 0 : index
    %597 = vector.load %arg20[%c0_357, %c0_358, %c0_359] : memref<1x1x3xf32, #tpu.memory_space<vmem>>, vector<1x1x3xf32>
    %598 = vector.shape_cast %597 : vector<1x1x3xf32> to vector<1x3xf32>
    %599 = vector.shape_cast %596 : vector<1x3xf32> to vector<1x1x3xf32>
    tpu.vector_store %arg20[%c0_357, %c0_358, %c0_359], %599 {strides = array<i32>} : memref<1x1x3xf32, #tpu.memory_space<vmem>>, vector<1x1x3xf32>,
    return
  }
  func.func @transform_0(%arg0: i32) -> (i32, i32, i32) {
    %c0_i32 = arith.constant 0 : i32
    %c0_i32_0 = arith.constant 0 : i32
    %c0_i32_1 = arith.constant 0 : i32
    return %arg0, %c0_i32, %c0_i32_0 : i32, i32, i32
  }
  func.func @transform_1(%arg0: i32) -> (i32, i32, i32) {
    %c0_i32 = arith.constant 0 : i32
    %c0_i32_0 = arith.constant 0 : i32
    %c0_i32_1 = arith.constant 0 : i32
    return %arg0, %c0_i32, %c0_i32_0 : i32, i32, i32
  }
  func.func @transform_2(%arg0: i32) -> (i32, i32) {
    %c0_i32 = arith.constant 0 : i32
    %c0_i32_0 = arith.constant 0 : i32
    %c0_i32_1 = arith.constant 0 : i32
    return %c0_i32, %c0_i32_0 : i32, i32
  }
  func.func @transform_3(%arg0: i32) -> (i32, i32) {
    %c0_i32 = arith.constant 0 : i32
    %c0_i32_0 = arith.constant 0 : i32
    %c0_i32_1 = arith.constant 0 : i32
    return %c0_i32, %c0_i32_0 : i32, i32
  }
  func.func @transform_4(%arg0: i32) -> (i32, i32) {
    %c0_i32 = arith.constant 0 : i32
    %c0_i32_0 = arith.constant 0 : i32
    %c0_i32_1 = arith.constant 0 : i32
    return %c0_i32, %c0_i32_0 : i32, i32
  }
  func.func @transform_5(%arg0: i32) -> (i32, i32, i32) {
    %c0_i32 = arith.constant 0 : i32
    %c0_i32_0 = arith.constant 0 : i32
    %c0_i32_1 = arith.constant 0 : i32
    %c0_i32_2 = arith.constant 0 : i32
    return %c0_i32, %c0_i32_0, %c0_i32_1 : i32, i32, i32
  }
  func.func @transform_6(%arg0: i32) -> (i32, i32, i32) {
    %c0_i32 = arith.constant 0 : i32
    %c0_i32_0 = arith.constant 0 : i32
    %c0_i32_1 = arith.constant 0 : i32
    %c0_i32_2 = arith.constant 0 : i32
    return %c0_i32, %c0_i32_0, %c0_i32_1 : i32, i32, i32
  }
  func.func @transform_7(%arg0: i32) -> (i32, i32, i32) {
    %c0_i32 = arith.constant 0 : i32
    %c0_i32_0 = arith.constant 0 : i32
    %c0_i32_1 = arith.constant 0 : i32
    %c0_i32_2 = arith.constant 0 : i32
    return %c0_i32, %c0_i32_0, %c0_i32_1 : i32, i32, i32
  }
  func.func @transform_8(%arg0: i32) -> (i32, i32, i32) {
    %c0_i32 = arith.constant 0 : i32
    %c0_i32_0 = arith.constant 0 : i32
    %c0_i32_1 = arith.constant 0 : i32
    %c0_i32_2 = arith.constant 0 : i32
    return %c0_i32, %c0_i32_0, %c0_i32_1 : i32, i32, i32
  }
  func.func @transform_9(%arg0: i32) -> (i32, i32, i32) {
    %c0_i32 = arith.constant 0 : i32
    %c0_i32_0 = arith.constant 0 : i32
    %c0_i32_1 = arith.constant 0 : i32
    %c0_i32_2 = arith.constant 0 : i32
    return %c0_i32, %c0_i32_0, %c0_i32_1 : i32, i32, i32
  }
  func.func @transform_10(%arg0: i32) -> (i32, i32, i32) {
    %c0_i32 = arith.constant 0 : i32
    %c0_i32_0 = arith.constant 0 : i32
    %c0_i32_1 = arith.constant 0 : i32
    %c0_i32_2 = arith.constant 0 : i32
    return %c0_i32, %c0_i32_0, %c0_i32_1 : i32, i32, i32
  }
  func.func @transform_11(%arg0: i32) -> (i32, i32, i32) {
    %c0_i32 = arith.constant 0 : i32
    %c0_i32_0 = arith.constant 0 : i32
    %c0_i32_1 = arith.constant 0 : i32
    %c0_i32_2 = arith.constant 0 : i32
    return %c0_i32, %c0_i32_0, %c0_i32_1 : i32, i32, i32
  }
  func.func @transform_12(%arg0: i32) -> (i32, i32, i32) {
    %c0_i32 = arith.constant 0 : i32
    %c0_i32_0 = arith.constant 0 : i32
    %c0_i32_1 = arith.constant 0 : i32
    %c0_i32_2 = arith.constant 0 : i32
    return %c0_i32, %c0_i32_0, %c0_i32_1 : i32, i32, i32
  }
  func.func @transform_13(%arg0: i32) -> (i32, i32, i32) {
    %c0_i32 = arith.constant 0 : i32
    %c0_i32_0 = arith.constant 0 : i32
    %c0_i32_1 = arith.constant 0 : i32
    %c0_i32_2 = arith.constant 0 : i32
    return %c0_i32, %c0_i32_0, %c0_i32_1 : i32, i32, i32
  }
  func.func @transform_14(%arg0: i32) -> (i32, i32, i32) {
    %c0_i32 = arith.constant 0 : i32
    %c0_i32_0 = arith.constant 0 : i32
    %c0_i32_1 = arith.constant 0 : i32
    %c0_i32_2 = arith.constant 0 : i32
    return %c0_i32, %c0_i32_0, %c0_i32_1 : i32, i32, i32
  }
  func.func @transform_15(%arg0: i32) -> (i32, i32, i32) {
    %c0_i32 = arith.constant 0 : i32
    %c0_i32_0 = arith.constant 0 : i32
    %c0_i32_1 = arith.constant 0 : i32
    %c0_i32_2 = arith.constant 0 : i32
    return %c0_i32, %c0_i32_0, %c0_i32_1 : i32, i32, i32
  }
  func.func @transform_16(%arg0: i32) -> (i32, i32, i32) {
    %c0_i32 = arith.constant 0 : i32
    %c0_i32_0 = arith.constant 0 : i32
    %c0_i32_1 = arith.constant 0 : i32
    %c0_i32_2 = arith.constant 0 : i32
    return %c0_i32, %c0_i32_0, %c0_i32_1 : i32, i32, i32
  }
  func.func @transform_17(%arg0: i32) -> (i32, i32) {
    %c0_i32 = arith.constant 0 : i32
    %c0_i32_0 = arith.constant 0 : i32
    %c0_i32_1 = arith.constant 0 : i32
    return %c0_i32, %c0_i32_0 : i32, i32
  }
  func.func @transform_18(%arg0: i32) -> (i32, i32) {
    %c0_i32 = arith.constant 0 : i32
    %c0_i32_0 = arith.constant 0 : i32
    %c0_i32_1 = arith.constant 0 : i32
    return %c0_i32, %c0_i32_0 : i32, i32
  }
  func.func @transform_19(%arg0: i32) -> (i32, i32, i32) {
    %c0_i32 = arith.constant 0 : i32
    %c0_i32_0 = arith.constant 0 : i32
    %c0_i32_1 = arith.constant 0 : i32
    return %arg0, %c0_i32, %c0_i32_0 : i32, i32, i32
  }
}

</mosaic_0001>

<llo_original>
// kernel: two_way_transformer.1
$region0: #{two_way_transformer.1}
  #allocation0 [shape = 'u32[]', space=smem, size = 0x4, offset = 0x4, fixed_abs, tag = 'smem constant byte address 0x4 - core index']
  #allocation1 [shape = 'u32[72,128]{1,0:T(1,128)}', space=vmem, size = 0x9000, scoped, tag = 'internal scratch']
  %s0 = inlined_call_operand.vmem [shape: f32[2,5,32], index: 0, kind: input, shape index: {}]
  %s1 = inlined_call_operand.vmem [shape: f32[2,27,128], index: 1, kind: input, shape index: {}]
  %s2 = inlined_call_operand.vmem [shape: f32[128,32], index: 2, kind: input, shape index: {}]
  %s3 = inlined_call_operand.vmem [shape: f32[27,32], index: 3, kind: input, shape index: {}]
  %s4 = inlined_call_operand.vmem [shape: f32[1,32], index: 4, kind: input, shape index: {}]
  %s5 = inlined_call_operand.vmem [shape: f32[8,32,32], index: 5, kind: input, shape index: {}]
  %s6 = inlined_call_operand.vmem [shape: f32[8,1,32], index: 6, kind: input, shape index: {}]
  %s7 = inlined_call_operand.vmem [shape: f32[8,32,64], index: 7, kind: input, shape index: {}]
  %s8 = inlined_call_operand.vmem [shape: f32[8,1,64], index: 8, kind: input, shape index: {}]
  %s9 = inlined_call_operand.vmem [shape: f32[8,32,32], index: 9, kind: input, shape index: {}]
  %s10 = inlined_call_operand.vmem [shape: f32[8,1,32], index: 10, kind: input, shape index: {}]
  %s11 = inlined_call_operand.vmem [shape: f32[10,1,32], index: 11, kind: input, shape index: {}]
  %s12 = inlined_call_operand.vmem [shape: f32[10,1,32], index: 12, kind: input, shape index: {}]
  %s13 = inlined_call_operand.vmem [shape: f32[2,32,64], index: 13, kind: input, shape index: {}]
  %s14 = inlined_call_operand.vmem [shape: f32[2,1,64], index: 14, kind: input, shape index: {}]
  %s15 = inlined_call_operand.vmem [shape: f32[2,64,32], index: 15, kind: input, shape index: {}]
  %s16 = inlined_call_operand.vmem [shape: f32[2,1,32], index: 16, kind: input, shape index: {}]
  %s17 = inlined_call_operand.vmem [shape: f32[32,3], index: 17, kind: input, shape index: {}]
  %s18 = inlined_call_operand.vmem [shape: f32[1,3], index: 18, kind: input, shape index: {}]
  %s19 = inlined_call_operand.hbm [shape: f32[2,1,3], index: 19, kind: output, shape index: {}]
  %s20 = sld [smem:[#allocation0]]
  $region109: #{two_way_transformer.1} parent=0
    _
  %s22 = ssub.s32 1, %s20
  %s23 = scalar_select 0, %s22, %s20
  $region1: #{two_way_transformer.1} parent=0
    #allocation2 [shape = 'u8[1024]{0}', space=vmem, size = 0x400, scoped, tag = 'output window, operand 0']
    #allocation3 [shape = 's32[2]{0}', space=sflag, size = 0x8, scoped, tag = 'scoped memory for two_way_transformer.1']
    %24 = vsyncpa [#allocation3], 0
    %s25 = scalar_lea.sflag [#allocation3], 1
    %26 = vsyncpa %s25, 0
    loop: start=0, step=1, limit=4
    $region2: #{two_way_transformer.1} parent=1 // loop_pre_header
      _
    $region3: #{two_way_transformer.1} parent=1 // loop_header
      %s28 = sphi 0, %s32
      %p29 = scmp.ge.s32.totalorder %s28, 4
      %s38 = sphi 0, %s40
      %s41 = sphi 0, %s38
      %s42 = sphi 0, %s41
      %s58 = sphi 0, %s42
      %s64 = sphi 0, %s66
      %s67 = sphi 0, %s64
      %s68 = sphi 0, %s67
      %s84 = sphi 0, %s68
      %s88 = sphi 0, %s88
      %s90 = sphi 0, %s88
      %s91 = sphi 0, %s90
      %s105 = sphi 0, %s91
      %s109 = sphi 0, %s109
      %s111 = sphi 0, %s109
      %s112 = sphi 0, %s111
      %s126 = sphi 0, %s112
      %s130 = sphi 0, %s130
      %s132 = sphi 0, %s130
      %s133 = sphi 0, %s132
      %s147 = sphi 0, %s133
      %s151 = sphi 0, %s151
      %s153 = sphi 0, %s151
      %s154 = sphi 0, %s153
      %s168 = sphi 0, %s154
      %s172 = sphi 0, %s172
      %s174 = sphi 0, %s172
      %s175 = sphi 0, %s174
      %s189 = sphi 0, %s175
      %s193 = sphi 0, %s193
      %s195 = sphi 0, %s193
      %s196 = sphi 0, %s195
      %s210 = sphi 0, %s196
      %s214 = sphi 0, %s214
      %s216 = sphi 0, %s214
      %s217 = sphi 0, %s216
      %s231 = sphi 0, %s217
      %s235 = sphi 0, %s235
      %s237 = sphi 0, %s235
      %s238 = sphi 0, %s237
      %s252 = sphi 0, %s238
      %s256 = sphi 0, %s256
      %s258 = sphi 0, %s256
      %s259 = sphi 0, %s258
      %s273 = sphi 0, %s259
      %s277 = sphi 0, %s277
      %s279 = sphi 0, %s277
      %s280 = sphi 0, %s279
      %s294 = sphi 0, %s280
      %s298 = sphi 0, %s298
      %s300 = sphi 0, %s298
      %s301 = sphi 0, %s300
      %s315 = sphi 0, %s301
      %s319 = sphi 0, %s319
      %s321 = sphi 0, %s319
      %s322 = sphi 0, %s321
      %s336 = sphi 0, %s322
      %s340 = sphi 0, %s340
      %s342 = sphi 0, %s340
      %s343 = sphi 0, %s342
      %s357 = sphi 0, %s343
      %s361 = sphi 0, %s361
      %s363 = sphi 0, %s361
      %s364 = sphi 0, %s363
      %s378 = sphi 0, %s364
      %s382 = sphi 0, %s382
      %s384 = sphi 0, %s382
      %s385 = sphi 0, %s384
      %s399 = sphi 0, %s385
      %s403 = sphi 0, %s403
      %s405 = sphi 0, %s403
      %s406 = sphi 0, %s405
      %s420 = sphi 0, %s406
      %s424 = sphi 0, %s424
      %s426 = sphi 0, %s424
      %s427 = sphi 0, %s426
      %s441 = sphi 0, %s427
      %s447 = sphi 0, %s449
      %s450 = sphi 0, %s447
      %s451 = sphi 0, %s450
      %s467 = sphi 0, %s451
    $region4: #{two_way_transformer.1} parent=1 // loop_header_branch
      %31 = sbr.rel (%p29) target = $region8
    $region5: #{two_way_transformer.1} parent=1 // loop_body
      %s33 = ssub.s32 %s28, 1
      %s34 = ssub.s32 %s28, 2
      %s35 = sadd.s32 %s28, 1
      %s36 = ssub.s32 %s28, %s35
      %p37 = scmp.eq.s32.totalorder %s36, 0
      %s39 = sadd.s32 %s38, 1
      %s40 = scalar_select %p37, %s38, %s39
      %p43 = pneg %p37
      %p44 = scmp.eq.s32.totalorder %s28, 1
      %p45 = por %p43, %p44
      %p46 = scmp.ne.s32.totalorder %s38, %s41
      %p47 = scmp.eq.s32.totalorder %s28, 0
      %p48 = por %p46, %p47
      %p49 = scmp.ne.s32.totalorder %s38, %s41
      %p50 = scmp.eq.s32.totalorder %s33, 1
      %p51 = por %p49, %p50
      %p52 = scmp.ne.s32.totalorder %s41, %s42
      %p53 = scmp.eq.s32.totalorder %s33, 0
      %p54 = por %p52, %p53
      %p55 = scmp.ne.s32.totalorder %s41, %s42
      %p56 = scmp.eq.s32.totalorder %s34, 1
      %p57 = por %p55, %p56
      %p59 = scmp.ne.s32.totalorder %s42, %s58
      %p60 = scmp.eq.s32.totalorder %s34, 0
      %p61 = por %p59, %p60
      %s62 = ssub.s32 %s28, %s35
      %p63 = scmp.eq.s32.totalorder %s62, 0
      %s65 = sadd.s32 %s64, 1
      %s66 = scalar_select %p63, %s64, %s65
      %p69 = pneg %p63
      %p70 = scmp.eq.s32.totalorder %s28, 1
      %p71 = por %p69, %p70
      %p72 = scmp.ne.s32.totalorder %s64, %s67
      %p73 = scmp.eq.s32.totalorder %s28, 0
      %p74 = por %p72, %p73
      %p75 = scmp.ne.s32.totalorder %s64, %s67
      %p76 = scmp.eq.s32.totalorder %s33, 1
      %p77 = por %p75, %p76
      %p78 = scmp.ne.s32.totalorder %s67, %s68
      %p79 = scmp.eq.s32.totalorder %s33, 0
      %p80 = por %p78, %p79
      %p81 = scmp.ne.s32.totalorder %s67, %s68
      %p82 = scmp.eq.s32.totalorder %s34, 1
      %p83 = por %p81, %p82
      %p85 = scmp.ne.s32.totalorder %s68, %s84
      %p86 = scmp.eq.s32.totalorder %s34, 0
      %p87 = por %p85, %p86
      %s89 = sadd.s32 %s88, 1
      %p92 = scmp.eq.s32.totalorder %s28, 1
      %p93 = scmp.ne.s32.totalorder %s88, %s90
      %p94 = scmp.eq.s32.totalorder %s28, 0
      %p95 = por %p93, %p94
      %p96 = scmp.ne.s32.totalorder %s88, %s90
      %p97 = scmp.eq.s32.totalorder %s33, 1
      %p98 = por %p96, %p97
      %p99 = scmp.ne.s32.totalorder %s90, %s91
      %p100 = scmp.eq.s32.totalorder %s33, 0
      %p101 = por %p99, %p100
      %p102 = scmp.ne.s32.totalorder %s90, %s91
      %p103 = scmp.eq.s32.totalorder %s34, 1
      %p104 = por %p102, %p103
      %p106 = scmp.ne.s32.totalorder %s91, %s105
      %p107 = scmp.eq.s32.totalorder %s34, 0
      %p108 = por %p106, %p107
      %s110 = sadd.s32 %s109, 1
      %p113 = scmp.eq.s32.totalorder %s28, 1
      %p114 = scmp.ne.s32.totalorder %s109, %s111
      %p115 = scmp.eq.s32.totalorder %s28, 0
      %p116 = por %p114, %p115
      %p117 = scmp.ne.s32.totalorder %s109, %s111
      %p118 = scmp.eq.s32.totalorder %s33, 1
      %p119 = por %p117, %p118
      %p120 = scmp.ne.s32.totalorder %s111, %s112
      %p121 = scmp.eq.s32.totalorder %s33, 0
      %p122 = por %p120, %p121
      %p123 = scmp.ne.s32.totalorder %s111, %s112
      %p124 = scmp.eq.s32.totalorder %s34, 1
      %p125 = por %p123, %p124
      %p127 = scmp.ne.s32.totalorder %s112, %s126
      %p128 = scmp.eq.s32.totalorder %s34, 0
      %p129 = por %p127, %p128
      %s131 = sadd.s32 %s130, 1
      %p134 = scmp.eq.s32.totalorder %s28, 1
      %p135 = scmp.ne.s32.totalorder %s130, %s132
      %p136 = scmp.eq.s32.totalorder %s28, 0
      %p137 = por %p135, %p136
      %p138 = scmp.ne.s32.totalorder %s130, %s132
      %p139 = scmp.eq.s32.totalorder %s33, 1
      %p140 = por %p138, %p139
      %p141 = scmp.ne.s32.totalorder %s132, %s133
      %p142 = scmp.eq.s32.totalorder %s33, 0
      %p143 = por %p141, %p142
      %p144 = scmp.ne.s32.totalorder %s132, %s133
      %p145 = scmp.eq.s32.totalorder %s34, 1
      %p146 = por %p144, %p145
      %p148 = scmp.ne.s32.totalorder %s133, %s147
      %p149 = scmp.eq.s32.totalorder %s34, 0
      %p150 = por %p148, %p149
      %s152 = sadd.s32 %s151, 1
      %p155 = scmp.eq.s32.totalorder %s28, 1
      %p156 = scmp.ne.s32.totalorder %s151, %s153
      %p157 = scmp.eq.s32.totalorder %s28, 0
      %p158 = por %p156, %p157
      %p159 = scmp.ne.s32.totalorder %s151, %s153
      %p160 = scmp.eq.s32.totalorder %s33, 1
      %p161 = por %p159, %p160
      %p162 = scmp.ne.s32.totalorder %s153, %s154
      %p163 = scmp.eq.s32.totalorder %s33, 0
      %p164 = por %p162, %p163
      %p165 = scmp.ne.s32.totalorder %s153, %s154
      %p166 = scmp.eq.s32.totalorder %s34, 1
      %p167 = por %p165, %p166
      %p169 = scmp.ne.s32.totalorder %s154, %s168
      %p170 = scmp.eq.s32.totalorder %s34, 0
      %p171 = por %p169, %p170
      %s173 = sadd.s32 %s172, 1
      %p176 = scmp.eq.s32.totalorder %s28, 1
      %p177 = scmp.ne.s32.totalorder %s172, %s174
      %p178 = scmp.eq.s32.totalorder %s28, 0
      %p179 = por %p177, %p178
      %p180 = scmp.ne.s32.totalorder %s172, %s174
      %p181 = scmp.eq.s32.totalorder %s33, 1
      %p182 = por %p180, %p181
      %p183 = scmp.ne.s32.totalorder %s174, %s175
      %p184 = scmp.eq.s32.totalorder %s33, 0
      %p185 = por %p183, %p184
      %p186 = scmp.ne.s32.totalorder %s174, %s175
      %p187 = scmp.eq.s32.totalorder %s34, 1
      %p188 = por %p186, %p187
      %p190 = scmp.ne.s32.totalorder %s175, %s189
      %p191 = scmp.eq.s32.totalorder %s34, 0
      %p192 = por %p190, %p191
      %s194 = sadd.s32 %s193, 1
      %p197 = scmp.eq.s32.totalorder %s28, 1
      %p198 = scmp.ne.s32.totalorder %s193, %s195
      %p199 = scmp.eq.s32.totalorder %s28, 0
      %p200 = por %p198, %p199
      %p201 = scmp.ne.s32.totalorder %s193, %s195
      %p202 = scmp.eq.s32.totalorder %s33, 1
      %p203 = por %p201, %p202
      %p204 = scmp.ne.s32.totalorder %s195, %s196
      %p205 = scmp.eq.s32.totalorder %s33, 0
      %p206 = por %p204, %p205
      %p207 = scmp.ne.s32.totalorder %s195, %s196
      %p208 = scmp.eq.s32.totalorder %s34, 1
      %p209 = por %p207, %p208
      %p211 = scmp.ne.s32.totalorder %s196, %s210
      %p212 = scmp.eq.s32.totalorder %s34, 0
      %p213 = por %p211, %p212
      %s215 = sadd.s32 %s214, 1
      %p218 = scmp.eq.s32.totalorder %s28, 1
      %p219 = scmp.ne.s32.totalorder %s214, %s216
      %p220 = scmp.eq.s32.totalorder %s28, 0
      %p221 = por %p219, %p220
      %p222 = scmp.ne.s32.totalorder %s214, %s216
      %p223 = scmp.eq.s32.totalorder %s33, 1
      %p224 = por %p222, %p223
      %p225 = scmp.ne.s32.totalorder %s216, %s217
      %p226 = scmp.eq.s32.totalorder %s33, 0
      %p227 = por %p225, %p226
      %p228 = scmp.ne.s32.totalorder %s216, %s217
      %p229 = scmp.eq.s32.totalorder %s34, 1
      %p230 = por %p228, %p229
      %p232 = scmp.ne.s32.totalorder %s217, %s231
      %p233 = scmp.eq.s32.totalorder %s34, 0
      %p234 = por %p232, %p233
      %s236 = sadd.s32 %s235, 1
      %p239 = scmp.eq.s32.totalorder %s28, 1
      %p240 = scmp.ne.s32.totalorder %s235, %s237
      %p241 = scmp.eq.s32.totalorder %s28, 0
      %p242 = por %p240, %p241
      %p243 = scmp.ne.s32.totalorder %s235, %s237
      %p244 = scmp.eq.s32.totalorder %s33, 1
      %p245 = por %p243, %p244
      %p246 = scmp.ne.s32.totalorder %s237, %s238
      %p247 = scmp.eq.s32.totalorder %s33, 0
      %p248 = por %p246, %p247
      %p249 = scmp.ne.s32.totalorder %s237, %s238
      %p250 = scmp.eq.s32.totalorder %s34, 1
      %p251 = por %p249, %p250
      %p253 = scmp.ne.s32.totalorder %s238, %s252
      %p254 = scmp.eq.s32.totalorder %s34, 0
      %p255 = por %p253, %p254
      %s257 = sadd.s32 %s256, 1
      %p260 = scmp.eq.s32.totalorder %s28, 1
      %p261 = scmp.ne.s32.totalorder %s256, %s258
      %p262 = scmp.eq.s32.totalorder %s28, 0
      %p263 = por %p261, %p262
      %p264 = scmp.ne.s32.totalorder %s256, %s258
      %p265 = scmp.eq.s32.totalorder %s33, 1
      %p266 = por %p264, %p265
      %p267 = scmp.ne.s32.totalorder %s258, %s259
      %p268 = scmp.eq.s32.totalorder %s33, 0
      %p269 = por %p267, %p268
      %p270 = scmp.ne.s32.totalorder %s258, %s259
      %p271 = scmp.eq.s32.totalorder %s34, 1
      %p272 = por %p270, %p271
      %p274 = scmp.ne.s32.totalorder %s259, %s273
      %p275 = scmp.eq.s32.totalorder %s34, 0
      %p276 = por %p274, %p275
      %s278 = sadd.s32 %s277, 1
      %p281 = scmp.eq.s32.totalorder %s28, 1
      %p282 = scmp.ne.s32.totalorder %s277, %s279
      %p283 = scmp.eq.s32.totalorder %s28, 0
      %p284 = por %p282, %p283
      %p285 = scmp.ne.s32.totalorder %s277, %s279
      %p286 = scmp.eq.s32.totalorder %s33, 1
      %p287 = por %p285, %p286
      %p288 = scmp.ne.s32.totalorder %s279, %s280
      %p289 = scmp.eq.s32.totalorder %s33, 0
      %p290 = por %p288, %p289
      %p291 = scmp.ne.s32.totalorder %s279, %s280
      %p292 = scmp.eq.s32.totalorder %s34, 1
      %p293 = por %p291, %p292
      %p295 = scmp.ne.s32.totalorder %s280, %s294
      %p296 = scmp.eq.s32.totalorder %s34, 0
      %p297 = por %p295, %p296
      %s299 = sadd.s32 %s298, 1
      %p302 = scmp.eq.s32.totalorder %s28, 1
      %p303 = scmp.ne.s32.totalorder %s298, %s300
      %p304 = scmp.eq.s32.totalorder %s28, 0
      %p305 = por %p303, %p304
      %p306 = scmp.ne.s32.totalorder %s298, %s300
      %p307 = scmp.eq.s32.totalorder %s33, 1
      %p308 = por %p306, %p307
      %p309 = scmp.ne.s32.totalorder %s300, %s301
      %p310 = scmp.eq.s32.totalorder %s33, 0
      %p311 = por %p309, %p310
      %p312 = scmp.ne.s32.totalorder %s300, %s301
      %p313 = scmp.eq.s32.totalorder %s34, 1
      %p314 = por %p312, %p313
      %p316 = scmp.ne.s32.totalorder %s301, %s315
      %p317 = scmp.eq.s32.totalorder %s34, 0
      %p318 = por %p316, %p317
      %s320 = sadd.s32 %s319, 1
      %p323 = scmp.eq.s32.totalorder %s28, 1
      %p324 = scmp.ne.s32.totalorder %s319, %s321
      %p325 = scmp.eq.s32.totalorder %s28, 0
      %p326 = por %p324, %p325
      %p327 = scmp.ne.s32.totalorder %s319, %s321
      %p328 = scmp.eq.s32.totalorder %s33, 1
      %p329 = por %p327, %p328
      %p330 = scmp.ne.s32.totalorder %s321, %s322
      %p331 = scmp.eq.s32.totalorder %s33, 0
      %p332 = por %p330, %p331
      %p333 = scmp.ne.s32.totalorder %s321, %s322
      %p334 = scmp.eq.s32.totalorder %s34, 1
      %p335 = por %p333, %p334
      %p337 = scmp.ne.s32.totalorder %s322, %s336
      %p338 = scmp.eq.s32.totalorder %s34, 0
      %p339 = por %p337, %p338
      %s341 = sadd.s32 %s340, 1
      %p344 = scmp.eq.s32.totalorder %s28, 1
      %p345 = scmp.ne.s32.totalorder %s340, %s342
      %p346 = scmp.eq.s32.totalorder %s28, 0
      %p347 = por %p345, %p346
      %p348 = scmp.ne.s32.totalorder %s340, %s342
      %p349 = scmp.eq.s32.totalorder %s33, 1
      %p350 = por %p348, %p349
      %p351 = scmp.ne.s32.totalorder %s342, %s343
      %p352 = scmp.eq.s32.totalorder %s33, 0
      %p353 = por %p351, %p352
      %p354 = scmp.ne.s32.totalorder %s342, %s343
      %p355 = scmp.eq.s32.totalorder %s34, 1
      %p356 = por %p354, %p355
      %p358 = scmp.ne.s32.totalorder %s343, %s357
      %p359 = scmp.eq.s32.totalorder %s34, 0
      %p360 = por %p358, %p359
      %s362 = sadd.s32 %s361, 1
      %p365 = scmp.eq.s32.totalorder %s28, 1
      %p366 = scmp.ne.s32.totalorder %s361, %s363
      %p367 = scmp.eq.s32.totalorder %s28, 0
      %p368 = por %p366, %p367
      %p369 = scmp.ne.s32.totalorder %s361, %s363
      %p370 = scmp.eq.s32.totalorder %s33, 1
      %p371 = por %p369, %p370
      %p372 = scmp.ne.s32.totalorder %s363, %s364
      %p373 = scmp.eq.s32.totalorder %s33, 0
      %p374 = por %p372, %p373
      %p375 = scmp.ne.s32.totalorder %s363, %s364
      %p376 = scmp.eq.s32.totalorder %s34, 1
      %p377 = por %p375, %p376
      %p379 = scmp.ne.s32.totalorder %s364, %s378
      %p380 = scmp.eq.s32.totalorder %s34, 0
      %p381 = por %p379, %p380
      %s383 = sadd.s32 %s382, 1
      %p386 = scmp.eq.s32.totalorder %s28, 1
      %p387 = scmp.ne.s32.totalorder %s382, %s384
      %p388 = scmp.eq.s32.totalorder %s28, 0
      %p389 = por %p387, %p388
      %p390 = scmp.ne.s32.totalorder %s382, %s384
      %p391 = scmp.eq.s32.totalorder %s33, 1
      %p392 = por %p390, %p391
      %p393 = scmp.ne.s32.totalorder %s384, %s385
      %p394 = scmp.eq.s32.totalorder %s33, 0
      %p395 = por %p393, %p394
      %p396 = scmp.ne.s32.totalorder %s384, %s385
      %p397 = scmp.eq.s32.totalorder %s34, 1
      %p398 = por %p396, %p397
      %p400 = scmp.ne.s32.totalorder %s385, %s399
      %p401 = scmp.eq.s32.totalorder %s34, 0
      %p402 = por %p400, %p401
      %s404 = sadd.s32 %s403, 1
      %p407 = scmp.eq.s32.totalorder %s28, 1
      %p408 = scmp.ne.s32.totalorder %s403, %s405
      %p409 = scmp.eq.s32.totalorder %s28, 0
      %p410 = por %p408, %p409
      %p411 = scmp.ne.s32.totalorder %s403, %s405
      %p412 = scmp.eq.s32.totalorder %s33, 1
      %p413 = por %p411, %p412
      %p414 = scmp.ne.s32.totalorder %s405, %s406
      %p415 = scmp.eq.s32.totalorder %s33, 0
      %p416 = por %p414, %p415
      %p417 = scmp.ne.s32.totalorder %s405, %s406
      %p418 = scmp.eq.s32.totalorder %s34, 1
      %p419 = por %p417, %p418
      %p421 = scmp.ne.s32.totalorder %s406, %s420
      %p422 = scmp.eq.s32.totalorder %s34, 0
      %p423 = por %p421, %p422
      %s425 = sadd.s32 %s424, 1
      %p428 = scmp.eq.s32.totalorder %s28, 1
      %p429 = scmp.ne.s32.totalorder %s424, %s426
      %p430 = scmp.eq.s32.totalorder %s28, 0
      %p431 = por %p429, %p430
      %p432 = scmp.ne.s32.totalorder %s424, %s426
      %p433 = scmp.eq.s32.totalorder %s33, 1
      %p434 = por %p432, %p433
      %p435 = scmp.ne.s32.totalorder %s426, %s427
      %p436 = scmp.eq.s32.totalorder %s33, 0
      %p437 = por %p435, %p436
      %p438 = scmp.ne.s32.totalorder %s426, %s427
      %p439 = scmp.eq.s32.totalorder %s34, 1
      %p440 = por %p438, %p439
      %p442 = scmp.ne.s32.totalorder %s427, %s441
      %p443 = scmp.eq.s32.totalorder %s34, 0
      %p444 = por %p442, %p443
      %s445 = ssub.s32 %s28, %s35
      %p446 = scmp.eq.s32.totalorder %s445, 0
      %s448 = sadd.s32 %s447, 1
      %s449 = scalar_select %p446, %s447, %s448
      %p452 = pneg %p446
      %p453 = scmp.eq.s32.totalorder %s28, 1
      %p454 = por %p452, %p453
      %p455 = scmp.ne.s32.totalorder %s447, %s450
      %p456 = scmp.eq.s32.totalorder %s28, 0
      %p457 = por %p455, %p456
      %p458 = scmp.ne.s32.totalorder %s447, %s450
      %p459 = scmp.eq.s32.totalorder %s33, 1
      %p460 = por %p458, %p459
      %p461 = scmp.ne.s32.totalorder %s450, %s451
      %p462 = scmp.eq.s32.totalorder %s33, 0
      %p463 = por %p461, %p462
      %p464 = scmp.ne.s32.totalorder %s450, %s451
      %p465 = scmp.eq.s32.totalorder %s34, 1
      %p466 = por %p464, %p465
      %p468 = scmp.ne.s32.totalorder %s451, %s467
      %p469 = scmp.eq.s32.totalorder %s34, 0
      %p470 = por %p468, %p469
      %p471 = scmp.le.s32.totalorder 1, %s28
      %p472 = scmp.lt.s32.totalorder %s28, 3
      %p473 = pnand %p471, %p472
      %p474 = pneg %p473
      // Predicated region
      $region9: #{two_way_transformer.1} parent=5 // pred_check
        _
      $region10: #{two_way_transformer.1} parent=5 // pred_check_branch
        %476 = sbr.rel (%p473) target = $region12
      $region11: #{two_way_transformer.1} parent=5 // pred_region
        %s477 = ssub.s32 %s28, 1
        // Predicated region
        $region13: #{two_way_transformer.1} parent=11 // pred_check
          %p478 = pneg %p101
        $region14: #{two_way_transformer.1} parent=11 // pred_check_branch
          %480 = sbr.rel (%p478) target = $region16
        $region15: #{two_way_transformer.1} parent=11 // pred_region
          _
        $region16: #{two_way_transformer.1} parent=11 // pred_fallthru
          _
        // Predicated region
        $region17: #{two_way_transformer.1} parent=11 // pred_check
          %p481 = pneg %p122
        $region18: #{two_way_transformer.1} parent=11 // pred_check_branch
          %483 = sbr.rel (%p481) target = $region20
        $region19: #{two_way_transformer.1} parent=11 // pred_region
          _
        $region20: #{two_way_transformer.1} parent=11 // pred_fallthru
          _
        // Predicated region
        $region21: #{two_way_transformer.1} parent=11 // pred_check
          %p484 = pneg %p143
        $region22: #{two_way_transformer.1} parent=11 // pred_check_branch
          %486 = sbr.rel (%p484) target = $region24
        $region23: #{two_way_transformer.1} parent=11 // pred_region
          _
        $region24: #{two_way_transformer.1} parent=11 // pred_fallthru
          _
        // Predicated region
        $region25: #{two_way_transformer.1} parent=11 // pred_check
          %p487 = pneg %p164
        $region26: #{two_way_transformer.1} parent=11 // pred_check_branch
          %489 = sbr.rel (%p487) target = $region28
        $region27: #{two_way_transformer.1} parent=11 // pred_region
          _
        $region28: #{two_way_transformer.1} parent=11 // pred_fallthru
          _
        // Predicated region
        $region29: #{two_way_transformer.1} parent=11 // pred_check
          %p490 = pneg %p185
        $region30: #{two_way_transformer.1} parent=11 // pred_check_branch
          %492 = sbr.rel (%p490) target = $region32
        $region31: #{two_way_transformer.1} parent=11 // pred_region
          _
        $region32: #{two_way_transformer.1} parent=11 // pred_fallthru
          _
        // Predicated region
        $region33: #{two_way_transformer.1} parent=11 // pred_check
          %p493 = pneg %p206
        $region34: #{two_way_transformer.1} parent=11 // pred_check_branch
          %495 = sbr.rel (%p493) target = $region36
        $region35: #{two_way_transformer.1} parent=11 // pred_region
          _
        $region36: #{two_way_transformer.1} parent=11 // pred_fallthru
          _
        // Predicated region
        $region37: #{two_way_transformer.1} parent=11 // pred_check
          %p496 = pneg %p227
        $region38: #{two_way_transformer.1} parent=11 // pred_check_branch
          %498 = sbr.rel (%p496) target = $region40
        $region39: #{two_way_transformer.1} parent=11 // pred_region
          _
        $region40: #{two_way_transformer.1} parent=11 // pred_fallthru
          _
        // Predicated region
        $region41: #{two_way_transformer.1} parent=11 // pred_check
          %p499 = pneg %p248
        $region42: #{two_way_transformer.1} parent=11 // pred_check_branch
          %501 = sbr.rel (%p499) target = $region44
        $region43: #{two_way_transformer.1} parent=11 // pred_region
          _
        $region44: #{two_way_transformer.1} parent=11 // pred_fallthru
          _
        // Predicated region
        $region45: #{two_way_transformer.1} parent=11 // pred_check
          %p502 = pneg %p269
        $region46: #{two_way_transformer.1} parent=11 // pred_check_branch
          %504 = sbr.rel (%p502) target = $region48
        $region47: #{two_way_transformer.1} parent=11 // pred_region
          _
        $region48: #{two_way_transformer.1} parent=11 // pred_fallthru
          _
        // Predicated region
        $region49: #{two_way_transformer.1} parent=11 // pred_check
          %p505 = pneg %p290
        $region50: #{two_way_transformer.1} parent=11 // pred_check_branch
          %507 = sbr.rel (%p505) target = $region52
        $region51: #{two_way_transformer.1} parent=11 // pred_region
          _
        $region52: #{two_way_transformer.1} parent=11 // pred_fallthru
          _
        // Predicated region
        $region53: #{two_way_transformer.1} parent=11 // pred_check
          %p508 = pneg %p311
        $region54: #{two_way_transformer.1} parent=11 // pred_check_branch
          %510 = sbr.rel (%p508) target = $region56
        $region55: #{two_way_transformer.1} parent=11 // pred_region
          _
        $region56: #{two_way_transformer.1} parent=11 // pred_fallthru
          _
        // Predicated region
        $region57: #{two_way_transformer.1} parent=11 // pred_check
          %p511 = pneg %p332
        $region58: #{two_way_transformer.1} parent=11 // pred_check_branch
          %513 = sbr.rel (%p511) target = $region60
        $region59: #{two_way_transformer.1} parent=11 // pred_region
          _
        $region60: #{two_way_transformer.1} parent=11 // pred_fallthru
          _
        // Predicated region
        $region61: #{two_way_transformer.1} parent=11 // pred_check
          %p514 = pneg %p353
        $region62: #{two_way_transformer.1} parent=11 // pred_check_branch
          %516 = sbr.rel (%p514) target = $region64
        $region63: #{two_way_transformer.1} parent=11 // pred_region
          _
        $region64: #{two_way_transformer.1} parent=11 // pred_fallthru
          _
        // Predicated region
        $region65: #{two_way_transformer.1} parent=11 // pred_check
          %p517 = pneg %p374
        $region66: #{two_way_transformer.1} parent=11 // pred_check_branch
          %519 = sbr.rel (%p517) target = $region68
        $region67: #{two_way_transformer.1} parent=11 // pred_region
          _
        $region68: #{two_way_transformer.1} parent=11 // pred_fallthru
          _
        // Predicated region
        $region69: #{two_way_transformer.1} parent=11 // pred_check
          %p520 = pneg %p395
        $region70: #{two_way_transformer.1} parent=11 // pred_check_branch
          %522 = sbr.rel (%p520) target = $region72
        $region71: #{two_way_transformer.1} parent=11 // pred_region
          _
        $region72: #{two_way_transformer.1} parent=11 // pred_fallthru
          _
        // Predicated region
        $region73: #{two_way_transformer.1} parent=11 // pred_check
          %p523 = pneg %p416
        $region74: #{two_way_transformer.1} parent=11 // pred_check_branch
          %525 = sbr.rel (%p523) target = $region76
        $region75: #{two_way_transformer.1} parent=11 // pred_region
          _
        $region76: #{two_way_transformer.1} parent=11 // pred_fallthru
          _
        // Predicated region
        $region77: #{two_way_transformer.1} parent=11 // pred_check
          %p526 = pneg %p437
        $region78: #{two_way_transformer.1} parent=11 // pred_check_branch
          %528 = sbr.rel (%p526) target = $region80
        $region79: #{two_way_transformer.1} parent=11 // pred_region
          _
        $region80: #{two_way_transformer.1} parent=11 // pred_fallthru
          _
      $region12: #{two_way_transformer.1} parent=5 // pred_fallthru
        _
      %p529 = scmp.lt.s32.totalorder %s28, 2
      // Predicated region
      $region81: #{two_way_transformer.1} parent=5 // pred_check
        %p530 = pneg %p529
      $region82: #{two_way_transformer.1} parent=5 // pred_check_branch
        %532 = sbr.rel (%p530) target = $region84
      $region83: #{two_way_transformer.1} parent=5 // pred_region
        // Predicated region
        $region85: #{two_way_transformer.1} parent=83 // pred_check
          %p533 = pneg %p48
        $region86: #{two_way_transformer.1} parent=83 // pred_check_branch
          %535 = sbr.rel (%p533) target = $region88
        $region87: #{two_way_transformer.1} parent=83 // pred_region
          %p536 = scmp.lt.s32.totalorder %s28, 1
          %s537 = scalar_select %p536, %s28, 1
          %s538 = smul.addr %s537, 8
          %s539 = scalar_lea.vmem %s0, %s538
        $region88: #{two_way_transformer.1} parent=83 // pred_fallthru
          _
        // Predicated region
        $region89: #{two_way_transformer.1} parent=83 // pred_check
          %p540 = pneg %p74
        $region90: #{two_way_transformer.1} parent=83 // pred_check_branch
          %542 = sbr.rel (%p540) target = $region92
        $region91: #{two_way_transformer.1} parent=83 // pred_region
          %p543 = scmp.lt.s32.totalorder %s28, 1
          %s544 = scalar_select %p543, %s28, 1
          %s545 = smul.addr %s544, 4
          %s546 = smul.addr %s545, 8
          %s547 = scalar_lea.vmem %s1, %s546
        $region92: #{two_way_transformer.1} parent=83 // pred_fallthru
          _
      $region84: #{two_way_transformer.1} parent=5 // pred_fallthru
        _
      %p548 = scmp.le.s32.totalorder 1, %s28
      %p549 = scmp.lt.s32.totalorder %s28, 3
      %p550 = pnand %p548, %p549
      %p551 = pneg %p550
      // Predicated region
      $region93: #{two_way_transformer.1} parent=5 // pred_check
        _
      $region94: #{two_way_transformer.1} parent=5 // pred_check_branch
        %553 = sbr.rel (%p550) target = $region96
      $region95: #{two_way_transformer.1} parent=5 // pred_region
        %s554 = ssub.s32 %s28, 1
        %p555 = scmp.lt.s32.totalorder %s33, 1
        %s556 = scalar_select %p555, %s33, 1
        %s557 = smul.addr %s556, 8
        %s558 = scalar_lea.vmem %s0, %s557
        %p559 = pneg %p54
        %p560 = pneg %p51
        %p561 = scmp.lt.s32.totalorder %s33, 1
        %s562 = scalar_select %p561, %s33, 1
        %s563 = smul.addr %s562, 4
        %s564 = smul.addr %s563, 8
        %s565 = scalar_lea.vmem %s1, %s564
        %p566 = pneg %p80
        %p567 = pneg %p77
        %p568 = pneg %p101
        %p569 = pneg %p98
        %p570 = pneg %p122
        %p571 = pneg %p119
        %p572 = pneg %p143
        %p573 = pneg %p140
        %p574 = pneg %p164
        %p575 = pneg %p161
        %p576 = pneg %p185
        %p577 = pneg %p182
        %p578 = pneg %p206
        %p579 = pneg %p203
        %p580 = pneg %p227
        %p581 = pneg %p224
        %p582 = pneg %p248
        %p583 = pneg %p245
        %p584 = pneg %p269
        %p585 = pneg %p266
        %p586 = pneg %p290
        %p587 = pneg %p287
        %p588 = pneg %p311
        %p589 = pneg %p308
        %p590 = pneg %p332
        %p591 = pneg %p329
        %p592 = pneg %p353
        %p593 = pneg %p350
        %p594 = pneg %p374
        %p595 = pneg %p371
        %p596 = pneg %p395
        %p597 = pneg %p392
        %p598 = pneg %p416
        %p599 = pneg %p413
        %p600 = pneg %p437
        %p601 = pneg %p434
        %p602 = pneg %p463
        %p603 = pneg %p460
        %s604 = sand.u32 %s450, 1
        %s605 = scalar_lea.sflag [#allocation3], %s604
        %s606 = sand.u32 %s450, 1
        %s607 = scalar_lea.vmem [#allocation2], %s606
        %p608 = scmp.lt.s32.totalorder %s33, 1
        %s609 = scalar_select %p608, %s33, 1
        %s610 = smul.addr %s609, 8
        %s611 = scalar_lea.vmem %s0, %s610
        %p612 = scmp.lt.s32.totalorder %s33, 1
        %s613 = scalar_select %p612, %s33, 1
        %s614 = smul.addr %s613, 4
        %s615 = smul.addr %s614, 8
        %s616 = scalar_lea.vmem %s1, %s615
        %v617 = vld [vmem:[%s616] sm:$0xff]
        %v618 = vld [vmem:[%s616 + $0x8] sm:$0xff]
        %v619 = vld [vmem:[%s616 + $0x10] sm:$0xff]
        %v620 = vld [vmem:[%s616 + $0x18] sm:$0x7]
        %v621 = vld [vmem:[%s2] sm:$0xff]
        %v622 = vld [vmem:[%s2 + $0x8] sm:$0xff]
        %v623 = vld [vmem:[%s2 + $0x10] sm:$0xff]
        %v624 = vld [vmem:[%s2 + $0x18] sm:$0xff]
        %v625 = vld [vmem:[%s2 + $0x20] sm:$0xff]
        %v626 = vld [vmem:[%s2 + $0x28] sm:$0xff]
        %v627 = vld [vmem:[%s2 + $0x30] sm:$0xff]
        %v628 = vld [vmem:[%s2 + $0x38] sm:$0xff]
        %v629 = vld [vmem:[%s2 + $0x40] sm:$0xff]
        %v630 = vld [vmem:[%s2 + $0x48] sm:$0xff]
        %v631 = vld [vmem:[%s2 + $0x50] sm:$0xff]
        %v632 = vld [vmem:[%s2 + $0x58] sm:$0xff]
        %v633 = vld [vmem:[%s2 + $0x60] sm:$0xff]
        %v634 = vld [vmem:[%s2 + $0x68] sm:$0xff]
        %v635 = vld [vmem:[%s2 + $0x70] sm:$0xff]
        %v636 = vld [vmem:[%s2 + $0x78] sm:$0xff]
        %v637 = vld [vmem:[%s3] sm:$0xff]
        %v638 = vld [vmem:[%s3 + $0x8] sm:$0xff]
        %v639 = vld [vmem:[%s3 + $0x10] sm:$0xff]
        %v640 = vld [vmem:[%s3 + $0x18] sm:$0x7]
        %641 = vmatpush.msra.mxu0 %v636
        %642 = vmatpush.msra.mxu0 %v635
        %643 = vmatpush.msra.mxu0 %v634
        %644 = vmatpush.msra.mxu0 %v633
        %645 = vmatpush.msra.mxu0 %v632
        %646 = vmatpush.msra.mxu0 %v631
        %647 = vmatpush.msra.mxu0 %v630
        %648 = vmatpush.msra.mxu0 %v629
        %649 = vmatpush.msra.mxu0 %v628
        %650 = vmatpush.msra.mxu0 %v627
        %651 = vmatpush.msra.mxu0 %v626
        %652 = vmatpush.msra.mxu0 %v625
        %653 = vmatpush.msra.mxu0 %v624
        %654 = vmatpush.msra.mxu0 %v623
        %655 = vmatpush.msra.mxu0 %v622
        %656 = vmatpush.msra.mxu0 %v621
        %657 = vmatmul.f32.gmra.mxu0 %v617
        %v658 = vpop.f32.mrf.mxu0
        %v659 = vadd.f32 %v637, %v658
        %660 = vmatmul.f32.gmra.mxu0 %v618
        %v661 = vpop.f32.mrf.mxu0
        %v662 = vadd.f32 %v638, %v661
        %663 = vmatmul.f32.gmra.mxu0 %v619
        %v664 = vpop.f32.mrf.mxu0
        %v665 = vadd.f32 %v639, %v664
        %666 = vmatmul.f32.gmra.mxu0 %v620
        %v667 = vpop.f32.mrf.mxu0
        %v668 = vadd.f32 %v640, %v667
        %669 = vdwg.mxu0
        %v670 = vld [vmem:[%s611] sm:$0x1f]
        %v671 = vld [vmem:[%s4] sm:$0x1]
        %v672 = vld [vmem:[%s5] sm:$0xff]
        %v673 = vld [vmem:[%s5 + $0x8] sm:$0xff]
        %v674 = vld [vmem:[%s5 + $0x10] sm:$0xff]
        %v675 = vld [vmem:[%s5 + $0x18] sm:$0xff]
        %v676 = vld [vmem:[%s6] sm:$0x1]
        %v677 = vld [vmem:[%s7] sm:$0xff]
        %v678 = vld [vmem:[%s7 + $0x8] sm:$0xff]
        %v679 = vld [vmem:[%s7 + $0x10] sm:$0xff]
        %v680 = vld [vmem:[%s7 + $0x18] sm:$0xff]
        %v681 = vld [vmem:[%s8] sm:$0x1]
        %v682 = vld [vmem:[%s9] sm:$0xff]
        %v683 = vld [vmem:[%s9 + $0x8] sm:$0xff]
        %v684 = vld [vmem:[%s9 + $0x10] sm:$0xff]
        %v685 = vld [vmem:[%s9 + $0x18] sm:$0xff]
        %v686 = vld [vmem:[%s10] sm:$0x1]
        %v688 = vperm.slane %v676, 0
        %vm690 = vcmask 261120
        %v692 = vsel %vm690, %v670, 0
        %694 = vmatpush.msra.mxu0 0.0
        %695 = vmatpush.msra.mxu0 0.0
        %696 = vmatpush.msra.mxu0 0.0
        %697 = vmatpush.msra.mxu0 0.0
        %698 = vmatpush.msra.mxu0 0.0
        %699 = vmatpush.msra.mxu0 0.0
        %700 = vmatpush.msra.mxu0 0.0
        %701 = vmatpush.msra.mxu0 0.0
        %702 = vmatpush.msra.mxu0 0.0
        %703 = vmatpush.msra.mxu0 0.0
        %704 = vmatpush.msra.mxu0 0.0
        %705 = vmatpush.msra.mxu0 0.0
        %706 = vmatpush.msra.mxu0 %v675
        %707 = vmatpush.msra.mxu0 %v674
        %708 = vmatpush.msra.mxu0 %v673
        %709 = vmatpush.msra.mxu0 %v672
        %710 = vmatmul.f32.gmra.mxu0 %v692
        %v711 = vpop.f32.mrf.mxu0
        %v712 = vadd.f32 %v688, %v711
        %713 = vdwg.mxu0
        %v715 = vperm.slane %v681, 0
        %717 = vmatpush.msra.mxu0 0.0
        %718 = vmatpush.msra.mxu0 0.0
        %719 = vmatpush.msra.mxu0 0.0
        %720 = vmatpush.msra.mxu0 0.0
        %721 = vmatpush.msra.mxu0 0.0
        %722 = vmatpush.msra.mxu0 0.0
        %723 = vmatpush.msra.mxu0 0.0
        %724 = vmatpush.msra.mxu0 0.0
        %725 = vmatpush.msra.mxu0 0.0
        %726 = vmatpush.msra.mxu0 0.0
        %727 = vmatpush.msra.mxu0 0.0
        %728 = vmatpush.msra.mxu0 0.0
        %729 = vmatpush.msra.mxu0 %v680
        %730 = vmatpush.msra.mxu0 %v679
        %731 = vmatpush.msra.mxu0 %v678
        %732 = vmatpush.msra.mxu0 %v677
        %733 = vmatmul.f32.gmra.mxu0 %v692
        %v734 = vpop.f32.mrf.mxu0
        %v735 = vadd.f32 %v715, %v734
        %736 = vdwg.mxu0
        %v738 = vsel %vm690, %v712, 0
        %v741 = vsel %vm690, %v735, 0
        %743 = vmatpush.xpose.msra.mxu0 0.0
        %744 = vmatpush.xpose.msra.mxu0 0.0
        %745 = vmatpush.xpose.msra.mxu0 0.0
        %746 = vmatpush.xpose.msra.mxu0 0.0
        %747 = vmatpush.xpose.msra.mxu0 0.0
        %748 = vmatpush.xpose.msra.mxu0 0.0
        %749 = vmatpush.xpose.msra.mxu0 0.0
        %750 = vmatpush.xpose.msra.mxu0 0.0
        %751 = vmatpush.xpose.msra.mxu0 0.0
        %752 = vmatpush.xpose.msra.mxu0 0.0
        %753 = vmatpush.xpose.msra.mxu0 0.0
        %754 = vmatpush.xpose.msra.mxu0 0.0
        %755 = vmatpush.xpose.msra.mxu0 0.0
        %756 = vmatpush.xpose.msra.mxu0 0.0
        %757 = vmatpush.xpose.msra.mxu0 0.0
        %758 = vmatpush.xpose.msra.mxu0 %v741
        %759 = vmatmul.f32.gmra.mxu0 %v738
        %v760 = vpop.f32.mrf.mxu0
        %v761 = vadd.f32 0.0, %v760
        %762 = vdwg.mxu0
        %vm763 = vcmask 36864
        %v764 = vsel %vm763, %v761, -inf
        %765 = vmax.xlane.f32.xlu0 %v764
        %v766 = vpop.xlane.xlu0 %765
        %v767 = vsub.f32 %v761, %v766
        %v768 = vmul.f32 %v767, 1.442695
        %v769 = vpow.pop %v768
        %v770 = vsel %vm763, %v769, 0.0
        %771 = vadd.xlane.f32.xlu0 %v770
        %v772 = vpop.xlane.xlu0 %771
        %773 = vrot.lane.b32.xlu0 %v735, 96
        %v774 = vpop.permute.xlu0 %773
        %vm775 = vcmask 39936
        %v777 = vsel %vm775, %v769, 0
        %vm779 = vcmask 1044480
        %v780 = vsel %vm779, %v774, 0
        %782 = vmatpush.msra.mxu0 0.0
        %783 = vmatpush.msra.mxu0 0.0
        %784 = vmatpush.msra.mxu0 0.0
        %785 = vmatpush.msra.mxu0 0.0
        %786 = vmatpush.msra.mxu0 0.0
        %787 = vmatpush.msra.mxu0 0.0
        %788 = vmatpush.msra.mxu0 0.0
        %789 = vmatpush.msra.mxu0 0.0
        %790 = vmatpush.msra.mxu0 0.0
        %791 = vmatpush.msra.mxu0 0.0
        %792 = vmatpush.msra.mxu0 0.0
        %793 = vmatpush.msra.mxu0 0.0
        %794 = vmatpush.msra.mxu0 0.0
        %795 = vmatpush.msra.mxu0 0.0
        %796 = vmatpush.msra.mxu0 0.0
        %797 = vmatpush.msra.mxu0 %v780
        %798 = vmatmul.f32.gmra.mxu0 %v777
        %v799 = vpop.f32.mrf.mxu0
        %v800 = vadd.f32 0.0, %v799
        %801 = vdwg.mxu0
        %v802 = vrcp.pop %v772
        %v803 = vmul.f32 %v800, %v802
        %v805 = vperm.slane %v686, 0
        %v808 = vsel %vm690, %v803, 0
        %810 = vmatpush.msra.mxu0 0.0
        %811 = vmatpush.msra.mxu0 0.0
        %812 = vmatpush.msra.mxu0 0.0
        %813 = vmatpush.msra.mxu0 0.0
        %814 = vmatpush.msra.mxu0 0.0
        %815 = vmatpush.msra.mxu0 0.0
        %816 = vmatpush.msra.mxu0 0.0
        %817 = vmatpush.msra.mxu0 0.0
        %818 = vmatpush.msra.mxu0 0.0
        %819 = vmatpush.msra.mxu0 0.0
        %820 = vmatpush.msra.mxu0 0.0
        %821 = vmatpush.msra.mxu0 0.0
        %822 = vmatpush.msra.mxu0 %v685
        %823 = vmatpush.msra.mxu0 %v684
        %824 = vmatpush.msra.mxu0 %v683
        %825 = vmatpush.msra.mxu0 %v682
        %826 = vmatmul.f32.gmra.mxu0 %v808
        %v827 = vpop.f32.mrf.mxu0
        %v828 = vadd.f32 %v805, %v827
        %829 = vdwg.mxu0
        %vm830 = vcmask 258048
        %v831 = vsel %vm830, %v828, 0.0
        %832 = vadd.xlane.f32.xlu0 %v831
        %v833 = vpop.xlane.xlu0 %832
        %v834 = vrcp.pop 32.0
        %v835 = vmul.f32 32.0, %v834
        %v836 = vsub.f32 1.0, %v835
        %v837 = vmul.f32 %v834, %v836
        %v838 = vadd.f32 %v834, %v837
        %vm839 = vweird.f32 %v834
        %v840 = vsel %vm839, %v834, %v838
        %v841 = vmul.f32 %v833, %v840
        %v842 = vsub.f32 %v828, %v841
        %v843 = vmul.f32 %v842, %v842
        %v844 = vsel %vm830, %v843, 0.0
        %845 = vadd.xlane.f32.xlu0 %v844
        %v846 = vpop.xlane.xlu0 %845
        %v847 = vmul.f32 %v846, %v840
        %v848 = vadd.f32 %v847, 1e-05
        %v849 = vrsqrt.pop %v848
        %v850 = vmul.f32 %v849, %v848
        %v851 = vmul.f32 %v850, %v849
        %v852 = vmul.f32 0.5, %v851
        %v853 = vsub.f32 1.5, %v852
        %v854 = vmul.f32 %v849, %v853
        %vm855 = vweird.f32 %v848
        %vm856 = vweird.f32 %v849
        %vm857 = vmor %vm855, %vm856
        %v858 = vsel %vm857, %v849, %v854
        %v859 = vmul.f32 %v842, %v858
        %v860 = vld [vmem:[%s11] sm:$0x1]
        %v862 = vperm.slane %v860, 0
        %v864 = vmul.f32 %v859, %v862
        %v865 = vld [vmem:[%s12] sm:$0x1]
        %v867 = vperm.slane %v865, 0
        %v869 = vadd.f32 %v864, %v867
        %s870 = scalar_lea.vmem %s5, 32
        %v871 = vld [vmem:[%s870] sm:$0xff]
        %v872 = vld [vmem:[%s870 + $0x8] sm:$0xff]
        %v873 = vld [vmem:[%s870 + $0x10] sm:$0xff]
        %v874 = vld [vmem:[%s870 + $0x18] sm:$0xff]
        %s875 = scalar_lea.vmem %s6, 1
        %v876 = vld [vmem:[%s875] sm:$0x1]
        %s877 = scalar_lea.vmem %s7, 32
        %v878 = vld [vmem:[%s877] sm:$0xff]
        %v879 = vld [vmem:[%s877 + $0x8] sm:$0xff]
        %v880 = vld [vmem:[%s877 + $0x10] sm:$0xff]
        %v881 = vld [vmem:[%s877 + $0x18] sm:$0xff]
        %s882 = scalar_lea.vmem %s8, 1
        %v883 = vld [vmem:[%s882] sm:$0x1]
        %s884 = scalar_lea.vmem %s9, 32
        %v885 = vld [vmem:[%s884] sm:$0xff]
        %v886 = vld [vmem:[%s884 + $0x8] sm:$0xff]
        %v887 = vld [vmem:[%s884 + $0x10] sm:$0xff]
        %v888 = vld [vmem:[%s884 + $0x18] sm:$0xff]
        %s889 = scalar_lea.vmem %s10, 1
        %v890 = vld [vmem:[%s889] sm:$0x1]
        %v892 = vperm.slane %v876, 0
        %v895 = vsel %vm690, %v869, 0
        %897 = vmatpush.msra.mxu0 0.0
        %898 = vmatpush.msra.mxu0 0.0
        %899 = vmatpush.msra.mxu0 0.0
        %900 = vmatpush.msra.mxu0 0.0
        %901 = vmatpush.msra.mxu0 0.0
        %902 = vmatpush.msra.mxu0 0.0
        %903 = vmatpush.msra.mxu0 0.0
        %904 = vmatpush.msra.mxu0 0.0
        %905 = vmatpush.msra.mxu0 0.0
        %906 = vmatpush.msra.mxu0 0.0
        %907 = vmatpush.msra.mxu0 0.0
        %908 = vmatpush.msra.mxu0 0.0
        %909 = vmatpush.msra.mxu0 %v874
        %910 = vmatpush.msra.mxu0 %v873
        %911 = vmatpush.msra.mxu0 %v872
        %912 = vmatpush.msra.mxu0 %v871
        %913 = vmatmul.f32.gmra.mxu0 %v895
        %v914 = vpop.f32.mrf.mxu0
        %v915 = vadd.f32 %v892, %v914
        %916 = vdwg.mxu0
        %v918 = vperm.slane %v883, 0
        %v921 = vsel %vm690, %v659, 0
        %v924 = vsel %vm690, %v662, 0
        %v927 = vsel %vm690, %v665, 0
        %v930 = vsel %vm690, %v668, 0
        %932 = vmatpush.msra.mxu0 0.0
        %933 = vmatpush.msra.mxu0 0.0
        %934 = vmatpush.msra.mxu0 0.0
        %935 = vmatpush.msra.mxu0 0.0
        %936 = vmatpush.msra.mxu0 0.0
        %937 = vmatpush.msra.mxu0 0.0
        %938 = vmatpush.msra.mxu0 0.0
        %939 = vmatpush.msra.mxu0 0.0
        %940 = vmatpush.msra.mxu0 0.0
        %941 = vmatpush.msra.mxu0 0.0
        %942 = vmatpush.msra.mxu0 0.0
        %943 = vmatpush.msra.mxu0 0.0
        %944 = vmatpush.msra.mxu0 %v881
        %945 = vmatpush.msra.mxu0 %v880
        %946 = vmatpush.msra.mxu0 %v879
        %947 = vmatpush.msra.mxu0 %v878
        %948 = vmatmul.f32.gmra.mxu0 %v921
        %v949 = vpop.f32.mrf.mxu0
        %v950 = vadd.f32 %v918, %v949
        %951 = vmatmul.f32.gmra.mxu0 %v924
        %v952 = vpop.f32.mrf.mxu0
        %v953 = vadd.f32 %v918, %v952
        %954 = vmatmul.f32.gmra.mxu0 %v927
        %v955 = vpop.f32.mrf.mxu0
        %v956 = vadd.f32 %v918, %v955
        %957 = vmatmul.f32.gmra.mxu0 %v930
        %v958 = vpop.f32.mrf.mxu0
        %v959 = vadd.f32 %v918, %v958
        %960 = vdwg.mxu0
        %v962 = vsel %vm690, %v915, 0
        %v965 = vsel %vm690, %v950, 0
        %v968 = vsel %vm690, %v953, 0
        %v971 = vsel %vm690, %v956, 0
        %v974 = vsel %vm690, %v959, 0
        %976 = vmatpush.xpose.msra.mxu0 0.0
        %977 = vmatpush.xpose.msra.mxu0 0.0
        %978 = vmatpush.xpose.msra.mxu0 0.0
        %979 = vmatpush.xpose.msra.mxu0 0.0
        %980 = vmatpush.xpose.msra.mxu0 0.0
        %981 = vmatpush.xpose.msra.mxu0 0.0
        %982 = vmatpush.xpose.msra.mxu0 0.0
        %983 = vmatpush.xpose.msra.mxu0 0.0
        %984 = vmatpush.xpose.msra.mxu0 0.0
        %985 = vmatpush.xpose.msra.mxu0 0.0
        %986 = vmatpush.xpose.msra.mxu0 0.0
        %987 = vmatpush.xpose.msra.mxu0 0.0
        %988 = vmatpush.xpose.msra.mxu0 %v974
        %989 = vmatpush.xpose.msra.mxu0 %v971
        %990 = vmatpush.xpose.msra.mxu0 %v968
        %991 = vmatpush.xpose.msra.mxu0 %v965
        %992 = vmatmul.f32.gmra.mxu0 %v962
        %v993 = vpop.f32.mrf.mxu0
        %v994 = vadd.f32 0.0, %v993
        %995 = vdwg.mxu0
        %vm996 = vcmask 217088
        %v997 = vsel %vm996, %v994, -inf
        %998 = vmax.xlane.f32.xlu0 %v997
        %v999 = vpop.xlane.xlu0 %998
        %v1000 = vsub.f32 %v994, %v999
        %v1001 = vmul.f32 %v1000, 1.442695
        %v1002 = vpow.pop %v1001
        %v1003 = vsel %vm996, %v1002, 0.0
        %1004 = vadd.xlane.f32.xlu0 %v1003
        %v1005 = vpop.xlane.xlu0 %1004
        %1006 = vrot.lane.b32.xlu0 %v950, 96
        %v1007 = vpop.permute.xlu0 %1006
        %1008 = vrot.lane.b32.xlu0 %v953, 96
        %v1009 = vpop.permute.xlu0 %1008
        %1010 = vrot.lane.b32.xlu0 %v956, 96
        %v1011 = vpop.permute.xlu0 %1010
        %1012 = vrot.lane.b32.xlu0 %v959, 96
        %v1013 = vpop.permute.xlu0 %1012
        %vm1017 = vcmask 220160
        %v1019 = vsel %vm1017, %v1002, 0
        %vm1021 = vcmask 1042432
        %v1022 = vsel %vm1021, %v1013, 0
        %1024 = vmatpush.msra.mxu0 0.0
        %1025 = vmatpush.msra.mxu0 0.0
        %1026 = vmatpush.msra.mxu0 0.0
        %1027 = vmatpush.msra.mxu0 0.0
        %1028 = vmatpush.msra.mxu0 0.0
        %1029 = vmatpush.msra.mxu0 0.0
        %1030 = vmatpush.msra.mxu0 0.0
        %1031 = vmatpush.msra.mxu0 0.0
        %1032 = vmatpush.msra.mxu0 0.0
        %1033 = vmatpush.msra.mxu0 0.0
        %1034 = vmatpush.msra.mxu0 0.0
        %1035 = vmatpush.msra.mxu0 0.0
        %1036 = vmatpush.msra.mxu0 %v1022
        %1037 = vmatpush.msra.mxu0 %v1011
        %1038 = vmatpush.msra.mxu0 %v1009
        %1039 = vmatpush.msra.mxu0 %v1007
        %1040 = vmatmul.f32.gmra.mxu0 %v1019
        %v1041 = vpop.f32.mrf.mxu0
        %v1042 = vadd.f32 0.0, %v1041
        %1043 = vdwg.mxu0
        %v1044 = vrcp.pop %v1005
        %v1045 = vmul.f32 %v1042, %v1044
        %v1047 = vperm.slane %v890, 0
        %v1050 = vsel %vm690, %v1045, 0
        %1052 = vmatpush.msra.mxu0 0.0
        %1053 = vmatpush.msra.mxu0 0.0
        %1054 = vmatpush.msra.mxu0 0.0
        %1055 = vmatpush.msra.mxu0 0.0
        %1056 = vmatpush.msra.mxu0 0.0
        %1057 = vmatpush.msra.mxu0 0.0
        %1058 = vmatpush.msra.mxu0 0.0
        %1059 = vmatpush.msra.mxu0 0.0
        %1060 = vmatpush.msra.mxu0 0.0
        %1061 = vmatpush.msra.mxu0 0.0
        %1062 = vmatpush.msra.mxu0 0.0
        %1063 = vmatpush.msra.mxu0 0.0
        %1064 = vmatpush.msra.mxu0 %v888
        %1065 = vmatpush.msra.mxu0 %v887
        %1066 = vmatpush.msra.mxu0 %v886
        %1067 = vmatpush.msra.mxu0 %v885
        %1068 = vmatmul.f32.gmra.mxu0 %v1050
        %v1069 = vpop.f32.mrf.mxu0
        %v1070 = vadd.f32 %v1047, %v1069
        %1071 = vdwg.mxu0
        %v1072 = vadd.f32 %v869, %v1070
        %v1073 = vsel %vm830, %v1072, 0.0
        %1074 = vadd.xlane.f32.xlu0 %v1073
        %v1075 = vpop.xlane.xlu0 %1074
        %v1076 = vmul.f32 %v1075, %v840
        %v1077 = vsub.f32 %v1072, %v1076
        %v1078 = vmul.f32 %v1077, %v1077
        %v1079 = vsel %vm830, %v1078, 0.0
        %1080 = vadd.xlane.f32.xlu0 %v1079
        %v1081 = vpop.xlane.xlu0 %1080
        %v1082 = vmul.f32 %v1081, %v840
        %v1083 = vadd.f32 %v1082, 1e-05
        %v1084 = vrsqrt.pop %v1083
        %v1085 = vmul.f32 %v1084, %v1083
        %v1086 = vmul.f32 %v1085, %v1084
        %v1087 = vmul.f32 0.5, %v1086
        %v1088 = vsub.f32 1.5, %v1087
        %v1089 = vmul.f32 %v1084, %v1088
        %vm1090 = vweird.f32 %v1083
        %vm1091 = vweird.f32 %v1084
        %vm1092 = vmor %vm1090, %vm1091
        %v1093 = vsel %vm1092, %v1084, %v1089
        %v1094 = vmul.f32 %v1077, %v1093
        %s1095 = scalar_lea.vmem %s11, 1
        %v1096 = vld [vmem:[%s1095] sm:$0x1]
        %v1098 = vperm.slane %v1096, 0
        %v1100 = vmul.f32 %v1094, %v1098
        %s1101 = scalar_lea.vmem %s12, 1
        %v1102 = vld [vmem:[%s1101] sm:$0x1]
        %v1104 = vperm.slane %v1102, 0
        %v1106 = vadd.f32 %v1100, %v1104
        %v1107 = vld [vmem:[%s13] sm:$0xff]
        %v1108 = vld [vmem:[%s13 + $0x8] sm:$0xff]
        %v1109 = vld [vmem:[%s13 + $0x10] sm:$0xff]
        %v1110 = vld [vmem:[%s13 + $0x18] sm:$0xff]
        %v1111 = vld [vmem:[%s14] sm:$0x1]
        %v1113 = vperm.slane %v1111, 0
        %v1116 = vsel %vm690, %v1106, 0
        %1118 = vmatpush.msra.mxu0 0.0
        %1119 = vmatpush.msra.mxu0 0.0
        %1120 = vmatpush.msra.mxu0 0.0
        %1121 = vmatpush.msra.mxu0 0.0
        %1122 = vmatpush.msra.mxu0 0.0
        %1123 = vmatpush.msra.mxu0 0.0
        %1124 = vmatpush.msra.mxu0 0.0
        %1125 = vmatpush.msra.mxu0 0.0
        %1126 = vmatpush.msra.mxu0 0.0
        %1127 = vmatpush.msra.mxu0 0.0
        %1128 = vmatpush.msra.mxu0 0.0
        %1129 = vmatpush.msra.mxu0 0.0
        %1130 = vmatpush.msra.mxu0 %v1110
        %1131 = vmatpush.msra.mxu0 %v1109
        %1132 = vmatpush.msra.mxu0 %v1108
        %1133 = vmatpush.msra.mxu0 %v1107
        %1134 = vmatmul.f32.gmra.mxu0 %v1116
        %v1135 = vpop.f32.mrf.mxu0
        %v1136 = vadd.f32 %v1113, %v1135
        %1137 = vdwg.mxu0
        %v1138 = vmax.f32 %v1136, 0.0
        %v1139 = vld [vmem:[%s15] sm:$0xff]
        %v1140 = vld [vmem:[%s15 + $0x8] sm:$0xff]
        %v1141 = vld [vmem:[%s15 + $0x10] sm:$0xff]
        %v1142 = vld [vmem:[%s15 + $0x18] sm:$0xff]
        %v1143 = vld [vmem:[%s15 + $0x20] sm:$0xff]
        %v1144 = vld [vmem:[%s15 + $0x28] sm:$0xff]
        %v1145 = vld [vmem:[%s15 + $0x30] sm:$0xff]
        %v1146 = vld [vmem:[%s15 + $0x38] sm:$0xff]
        %v1147 = vld [vmem:[%s16] sm:$0x1]
        %v1149 = vperm.slane %v1147, 0
        %vm1151 = vcmask 523264
        %v1153 = vsel %vm1151, %v1138, 0
        %1155 = vmatpush.msra.mxu0 0.0
        %1156 = vmatpush.msra.mxu0 0.0
        %1157 = vmatpush.msra.mxu0 0.0
        %1158 = vmatpush.msra.mxu0 0.0
        %1159 = vmatpush.msra.mxu0 0.0
        %1160 = vmatpush.msra.mxu0 0.0
        %1161 = vmatpush.msra.mxu0 0.0
        %1162 = vmatpush.msra.mxu0 0.0
        %1163 = vmatpush.msra.mxu0 %v1146
        %1164 = vmatpush.msra.mxu0 %v1145
        %1165 = vmatpush.msra.mxu0 %v1144
        %1166 = vmatpush.msra.mxu0 %v1143
        %1167 = vmatpush.msra.mxu0 %v1142
        %1168 = vmatpush.msra.mxu0 %v1141
        %1169 = vmatpush.msra.mxu0 %v1140
        %1170 = vmatpush.msra.mxu0 %v1139
        %1171 = vmatmul.f32.gmra.mxu0 %v1153
        %v1172 = vpop.f32.mrf.mxu0
        %v1173 = vadd.f32 %v1149, %v1172
        %1174 = vdwg.mxu0
        %v1175 = vadd.f32 %v1106, %v1173
        %v1176 = vsel %vm830, %v1175, 0.0
        %1177 = vadd.xlane.f32.xlu0 %v1176
        %v1178 = vpop.xlane.xlu0 %1177
        %v1179 = vmul.f32 %v1178, %v840
        %v1180 = vsub.f32 %v1175, %v1179
        %v1181 = vmul.f32 %v1180, %v1180
        %v1182 = vsel %vm830, %v1181, 0.0
        %1183 = vadd.xlane.f32.xlu0 %v1182
        %v1184 = vpop.xlane.xlu0 %1183
        %v1185 = vmul.f32 %v1184, %v840
        %v1186 = vadd.f32 %v1185, 1e-05
        %v1187 = vrsqrt.pop %v1186
        %v1188 = vmul.f32 %v1187, %v1186
        %v1189 = vmul.f32 %v1188, %v1187
        %v1190 = vmul.f32 0.5, %v1189
        %v1191 = vsub.f32 1.5, %v1190
        %v1192 = vmul.f32 %v1187, %v1191
        %vm1193 = vweird.f32 %v1186
        %vm1194 = vweird.f32 %v1187
        %vm1195 = vmor %vm1193, %vm1194
        %v1196 = vsel %vm1195, %v1187, %v1192
        %v1197 = vmul.f32 %v1180, %v1196
        %s1198 = scalar_lea.vmem %s11, 2
        %v1199 = vld [vmem:[%s1198] sm:$0x1]
        %v1201 = vperm.slane %v1199, 0
        %v1203 = vmul.f32 %v1197, %v1201
        %s1204 = scalar_lea.vmem %s12, 2
        %v1205 = vld [vmem:[%s1204] sm:$0x1]
        %v1207 = vperm.slane %v1205, 0
        %v1209 = vadd.f32 %v1203, %v1207
        %s1210 = scalar_lea.vmem %s5, 64
        %v1211 = vld [vmem:[%s1210] sm:$0xff]
        %v1212 = vld [vmem:[%s1210 + $0x8] sm:$0xff]
        %v1213 = vld [vmem:[%s1210 + $0x10] sm:$0xff]
        %v1214 = vld [vmem:[%s1210 + $0x18] sm:$0xff]
        %s1215 = scalar_lea.vmem %s6, 2
        %v1216 = vld [vmem:[%s1215] sm:$0x1]
        %s1217 = scalar_lea.vmem %s7, 64
        %v1218 = vld [vmem:[%s1217] sm:$0xff]
        %v1219 = vld [vmem:[%s1217 + $0x8] sm:$0xff]
        %v1220 = vld [vmem:[%s1217 + $0x10] sm:$0xff]
        %v1221 = vld [vmem:[%s1217 + $0x18] sm:$0xff]
        %s1222 = scalar_lea.vmem %s8, 2
        %v1223 = vld [vmem:[%s1222] sm:$0x1]
        %s1224 = scalar_lea.vmem %s9, 64
        %v1225 = vld [vmem:[%s1224] sm:$0xff]
        %v1226 = vld [vmem:[%s1224 + $0x8] sm:$0xff]
        %v1227 = vld [vmem:[%s1224 + $0x10] sm:$0xff]
        %v1228 = vld [vmem:[%s1224 + $0x18] sm:$0xff]
        %s1229 = scalar_lea.vmem %s10, 2
        %v1230 = vld [vmem:[%s1229] sm:$0x1]
        %v1232 = vperm.slane %v1216, 0
        %1234 = vmatpush.msra.mxu0 0.0
        %1235 = vmatpush.msra.mxu0 0.0
        %1236 = vmatpush.msra.mxu0 0.0
        %1237 = vmatpush.msra.mxu0 0.0
        %1238 = vmatpush.msra.mxu0 0.0
        %1239 = vmatpush.msra.mxu0 0.0
        %1240 = vmatpush.msra.mxu0 0.0
        %1241 = vmatpush.msra.mxu0 0.0
        %1242 = vmatpush.msra.mxu0 0.0
        %1243 = vmatpush.msra.mxu0 0.0
        %1244 = vmatpush.msra.mxu0 0.0
        %1245 = vmatpush.msra.mxu0 0.0
        %1246 = vmatpush.msra.mxu0 %v1214
        %1247 = vmatpush.msra.mxu0 %v1213
        %1248 = vmatpush.msra.mxu0 %v1212
        %1249 = vmatpush.msra.mxu0 %v1211
        %1250 = vmatmul.f32.gmra.mxu0 %v921
        %v1251 = vpop.f32.mrf.mxu0
        %v1252 = vadd.f32 %v1232, %v1251
        %1253 = vmatmul.f32.gmra.mxu0 %v924
        %v1254 = vpop.f32.mrf.mxu0
        %v1255 = vadd.f32 %v1232, %v1254
        %1256 = vmatmul.f32.gmra.mxu0 %v927
        %v1257 = vpop.f32.mrf.mxu0
        %v1258 = vadd.f32 %v1232, %v1257
        %1259 = vmatmul.f32.gmra.mxu0 %v930
        %v1260 = vpop.f32.mrf.mxu0
        %v1261 = vadd.f32 %v1232, %v1260
        %1262 = vdwg.mxu0
        %v1264 = vperm.slane %v1223, 0
        %v1267 = vsel %vm690, %v1209, 0
        %1269 = vmatpush.msra.mxu0 0.0
        %1270 = vmatpush.msra.mxu0 0.0
        %1271 = vmatpush.msra.mxu0 0.0
        %1272 = vmatpush.msra.mxu0 0.0
        %1273 = vmatpush.msra.mxu0 0.0
        %1274 = vmatpush.msra.mxu0 0.0
        %1275 = vmatpush.msra.mxu0 0.0
        %1276 = vmatpush.msra.mxu0 0.0
        %1277 = vmatpush.msra.mxu0 0.0
        %1278 = vmatpush.msra.mxu0 0.0
        %1279 = vmatpush.msra.mxu0 0.0
        %1280 = vmatpush.msra.mxu0 0.0
        %1281 = vmatpush.msra.mxu0 %v1221
        %1282 = vmatpush.msra.mxu0 %v1220
        %1283 = vmatpush.msra.mxu0 %v1219
        %1284 = vmatpush.msra.mxu0 %v1218
        %1285 = vmatmul.f32.gmra.mxu0 %v1267
        %v1286 = vpop.f32.mrf.mxu0
        %v1287 = vadd.f32 %v1264, %v1286
        %1288 = vdwg.mxu0
        %v1290 = vsel %vm690, %v1252, 0
        %v1293 = vsel %vm690, %v1255, 0
        %v1296 = vsel %vm690, %v1258, 0
        %v1299 = vsel %vm690, %v1261, 0
        %v1302 = vsel %vm690, %v1287, 0
        %1304 = vmatpush.xpose.msra.mxu0 0.0
        %1305 = vmatpush.xpose.msra.mxu0 0.0
        %1306 = vmatpush.xpose.msra.mxu0 0.0
        %1307 = vmatpush.xpose.msra.mxu0 0.0
        %1308 = vmatpush.xpose.msra.mxu0 0.0
        %1309 = vmatpush.xpose.msra.mxu0 0.0
        %1310 = vmatpush.xpose.msra.mxu0 0.0
        %1311 = vmatpush.xpose.msra.mxu0 0.0
        %1312 = vmatpush.xpose.msra.mxu0 0.0
        %1313 = vmatpush.xpose.msra.mxu0 0.0
        %1314 = vmatpush.xpose.msra.mxu0 0.0
        %1315 = vmatpush.xpose.msra.mxu0 0.0
        %1316 = vmatpush.xpose.msra.mxu0 0.0
        %1317 = vmatpush.xpose.msra.mxu0 0.0
        %1318 = vmatpush.xpose.msra.mxu0 0.0
        %1319 = vmatpush.xpose.msra.mxu0 %v1302
        %1320 = vmatmul.f32.gmra.mxu0 %v1290
        %v1321 = vpop.f32.mrf.mxu0
        %v1322 = vadd.f32 0.0, %v1321
        %1323 = vmatmul.f32.gmra.mxu0 %v1293
        %v1324 = vpop.f32.mrf.mxu0
        %v1325 = vadd.f32 0.0, %v1324
        %1326 = vmatmul.f32.gmra.mxu0 %v1296
        %v1327 = vpop.f32.mrf.mxu0
        %v1328 = vadd.f32 0.0, %v1327
        %1329 = vmatmul.f32.gmra.mxu0 %v1299
        %v1330 = vpop.f32.mrf.mxu0
        %v1331 = vadd.f32 0.0, %v1330
        %1332 = vdwg.mxu0
        %v1333 = vsel %vm775, %v1322, -inf
        %1334 = vmax.xlane.f32.xlu0 %v1333
        %v1335 = vpop.xlane.xlu0 %1334
        %v1336 = vsel %vm775, %v1325, -inf
        %1337 = vmax.xlane.f32.xlu0 %v1336
        %v1338 = vpop.xlane.xlu0 %1337
        %v1339 = vsel %vm775, %v1328, -inf
        %1340 = vmax.xlane.f32.xlu0 %v1339
        %v1341 = vpop.xlane.xlu0 %1340
        %vm1342 = vcmask 34816
        %v1343 = vsel %vm1342, %v1331, -inf
        %1344 = vmax.xlane.f32.xlu0 %v1343
        %v1345 = vpop.xlane.xlu0 %1344
        %v1346 = vsub.f32 %v1322, %v1335
        %v1347 = vsub.f32 %v1325, %v1338
        %v1348 = vsub.f32 %v1328, %v1341
        %v1349 = vsub.f32 %v1331, %v1345
        %v1350 = vmul.f32 %v1346, 1.442695
        %v1351 = vpow.pop %v1350
        %v1352 = vmul.f32 %v1347, 1.442695
        %v1353 = vpow.pop %v1352
        %v1354 = vmul.f32 %v1348, 1.442695
        %v1355 = vpow.pop %v1354
        %v1356 = vmul.f32 %v1349, 1.442695
        %v1357 = vpow.pop %v1356
        %v1358 = vsel %vm775, %v1351, 0.0
        %1359 = vadd.xlane.f32.xlu0 %v1358
        %v1360 = vpop.xlane.xlu0 %1359
        %v1361 = vsel %vm775, %v1353, 0.0
        %1362 = vadd.xlane.f32.xlu0 %v1361
        %v1363 = vpop.xlane.xlu0 %1362
        %v1364 = vsel %vm775, %v1355, 0.0
        %1365 = vadd.xlane.f32.xlu0 %v1364
        %v1366 = vpop.xlane.xlu0 %1365
        %v1367 = vsel %vm1342, %v1357, 0.0
        %1368 = vadd.xlane.f32.xlu0 %v1367
        %v1369 = vpop.xlane.xlu0 %1368
        %1370 = vrot.lane.b32.xlu0 %v1287, 96
        %v1371 = vpop.permute.xlu0 %1370
        %v1373 = vsel %vm775, %v1351, 0
        %v1376 = vsel %vm775, %v1353, 0
        %v1379 = vsel %vm775, %v1355, 0
        %v1382 = vsel %vm775, %v1357, 0
        %v1384 = vsel %vm779, %v1371, 0
        %1386 = vmatpush.msra.mxu0 0.0
        %1387 = vmatpush.msra.mxu0 0.0
        %1388 = vmatpush.msra.mxu0 0.0
        %1389 = vmatpush.msra.mxu0 0.0
        %1390 = vmatpush.msra.mxu0 0.0
        %1391 = vmatpush.msra.mxu0 0.0
        %1392 = vmatpush.msra.mxu0 0.0
        %1393 = vmatpush.msra.mxu0 0.0
        %1394 = vmatpush.msra.mxu0 0.0
        %1395 = vmatpush.msra.mxu0 0.0
        %1396 = vmatpush.msra.mxu0 0.0
        %1397 = vmatpush.msra.mxu0 0.0
        %1398 = vmatpush.msra.mxu0 0.0
        %1399 = vmatpush.msra.mxu0 0.0
        %1400 = vmatpush.msra.mxu0 0.0
        %1401 = vmatpush.msra.mxu0 %v1384
        %1402 = vmatmul.f32.gmra.mxu0 %v1373
        %v1403 = vpop.f32.mrf.mxu0
        %v1404 = vadd.f32 0.0, %v1403
        %1405 = vmatmul.f32.gmra.mxu0 %v1376
        %v1406 = vpop.f32.mrf.mxu0
        %v1407 = vadd.f32 0.0, %v1406
        %1408 = vmatmul.f32.gmra.mxu0 %v1379
        %v1409 = vpop.f32.mrf.mxu0
        %v1410 = vadd.f32 0.0, %v1409
        %1411 = vmatmul.f32.gmra.mxu0 %v1382
        %v1412 = vpop.f32.mrf.mxu0
        %v1413 = vadd.f32 0.0, %v1412
        %1414 = vdwg.mxu0
        %v1415 = vrcp.pop %v1360
        %v1416 = vrcp.pop %v1363
        %v1417 = vrcp.pop %v1366
        %v1418 = vrcp.pop %v1369
        %v1419 = vmul.f32 %v1404, %v1415
        %v1420 = vmul.f32 %v1407, %v1416
        %v1421 = vmul.f32 %v1410, %v1417
        %v1422 = vmul.f32 %v1413, %v1418
        %v1424 = vperm.slane %v1230, 0
        %v1427 = vsel %vm690, %v1419, 0
        %v1430 = vsel %vm690, %v1420, 0
        %v1433 = vsel %vm690, %v1421, 0
        %v1436 = vsel %vm690, %v1422, 0
        %1438 = vmatpush.msra.mxu0 0.0
        %1439 = vmatpush.msra.mxu0 0.0
        %1440 = vmatpush.msra.mxu0 0.0
        %1441 = vmatpush.msra.mxu0 0.0
        %1442 = vmatpush.msra.mxu0 0.0
        %1443 = vmatpush.msra.mxu0 0.0
        %1444 = vmatpush.msra.mxu0 0.0
        %1445 = vmatpush.msra.mxu0 0.0
        %1446 = vmatpush.msra.mxu0 0.0
        %1447 = vmatpush.msra.mxu0 0.0
        %1448 = vmatpush.msra.mxu0 0.0
        %1449 = vmatpush.msra.mxu0 0.0
        %1450 = vmatpush.msra.mxu0 %v1228
        %1451 = vmatpush.msra.mxu0 %v1227
        %1452 = vmatpush.msra.mxu0 %v1226
        %1453 = vmatpush.msra.mxu0 %v1225
        %1454 = vmatmul.f32.gmra.mxu0 %v1427
        %v1455 = vpop.f32.mrf.mxu0
        %v1456 = vadd.f32 %v1424, %v1455
        %1457 = vmatmul.f32.gmra.mxu0 %v1430
        %v1458 = vpop.f32.mrf.mxu0
        %v1459 = vadd.f32 %v1424, %v1458
        %1460 = vmatmul.f32.gmra.mxu0 %v1433
        %v1461 = vpop.f32.mrf.mxu0
        %v1462 = vadd.f32 %v1424, %v1461
        %1463 = vmatmul.f32.gmra.mxu0 %v1436
        %v1464 = vpop.f32.mrf.mxu0
        %v1465 = vadd.f32 %v1424, %v1464
        %1466 = vdwg.mxu0
        %v1467 = vadd.f32 %v659, %v1456
        %v1468 = vadd.f32 %v662, %v1459
        %v1469 = vadd.f32 %v665, %v1462
        %v1470 = vadd.f32 %v668, %v1465
        %v1471 = vsel %vm690, %v1467, 0.0
        %1472 = vadd.xlane.f32.xlu0 %v1471
        %v1473 = vpop.xlane.xlu0 %1472
        %v1474 = vsel %vm690, %v1468, 0.0
        %1475 = vadd.xlane.f32.xlu0 %v1474
        %v1476 = vpop.xlane.xlu0 %1475
        %v1477 = vsel %vm690, %v1469, 0.0
        %1478 = vadd.xlane.f32.xlu0 %v1477
        %v1479 = vpop.xlane.xlu0 %1478
        %vm1480 = vcmask 256000
        %v1481 = vsel %vm1480, %v1470, 0.0
        %1482 = vadd.xlane.f32.xlu0 %v1481
        %v1483 = vpop.xlane.xlu0 %1482
        %v1484 = vmul.f32 %v1473, %v840
        %v1485 = vmul.f32 %v1476, %v840
        %v1486 = vmul.f32 %v1479, %v840
        %v1487 = vmul.f32 %v1483, %v840
        %v1488 = vsub.f32 %v1467, %v1484
        %v1489 = vsub.f32 %v1468, %v1485
        %v1490 = vsub.f32 %v1469, %v1486
        %v1491 = vsub.f32 %v1470, %v1487
        %v1492 = vmul.f32 %v1488, %v1488
        %v1493 = vmul.f32 %v1489, %v1489
        %v1494 = vmul.f32 %v1490, %v1490
        %v1495 = vmul.f32 %v1491, %v1491
        %v1496 = vsel %vm690, %v1492, 0.0
        %1497 = vadd.xlane.f32.xlu0 %v1496
        %v1498 = vpop.xlane.xlu0 %1497
        %v1499 = vsel %vm690, %v1493, 0.0
        %1500 = vadd.xlane.f32.xlu0 %v1499
        %v1501 = vpop.xlane.xlu0 %1500
        %v1502 = vsel %vm690, %v1494, 0.0
        %1503 = vadd.xlane.f32.xlu0 %v1502
        %v1504 = vpop.xlane.xlu0 %1503
        %v1505 = vsel %vm1480, %v1495, 0.0
        %1506 = vadd.xlane.f32.xlu0 %v1505
        %v1507 = vpop.xlane.xlu0 %1506
        %v1508 = vmul.f32 %v1498, %v840
        %v1509 = vmul.f32 %v1501, %v840
        %v1510 = vmul.f32 %v1504, %v840
        %v1511 = vmul.f32 %v1507, %v840
        %v1512 = vadd.f32 %v1508, 1e-05
        %v1513 = vadd.f32 %v1509, 1e-05
        %v1514 = vadd.f32 %v1510, 1e-05
        %v1515 = vadd.f32 %v1511, 1e-05
        %v1516 = vrsqrt.pop %v1512
        %v1517 = vmul.f32 %v1516, %v1512
        %v1518 = vmul.f32 %v1517, %v1516
        %v1519 = vmul.f32 0.5, %v1518
        %v1520 = vsub.f32 1.5, %v1519
        %v1521 = vmul.f32 %v1516, %v1520
        %vm1522 = vweird.f32 %v1512
        %vm1523 = vweird.f32 %v1516
        %vm1524 = vmor %vm1522, %vm1523
        %v1525 = vsel %vm1524, %v1516, %v1521
        %v1526 = vrsqrt.pop %v1513
        %v1527 = vmul.f32 %v1526, %v1513
        %v1528 = vmul.f32 %v1527, %v1526
        %v1529 = vmul.f32 0.5, %v1528
        %v1530 = vsub.f32 1.5, %v1529
        %v1531 = vmul.f32 %v1526, %v1530
        %vm1532 = vweird.f32 %v1513
        %vm1533 = vweird.f32 %v1526
        %vm1534 = vmor %vm1532, %vm1533
        %v1535 = vsel %vm1534, %v1526, %v1531
        %v1536 = vrsqrt.pop %v1514
        %v1537 = vmul.f32 %v1536, %v1514
        %v1538 = vmul.f32 %v1537, %v1536
        %v1539 = vmul.f32 0.5, %v1538
        %v1540 = vsub.f32 1.5, %v1539
        %v1541 = vmul.f32 %v1536, %v1540
        %vm1542 = vweird.f32 %v1514
        %vm1543 = vweird.f32 %v1536
        %vm1544 = vmor %vm1542, %vm1543
        %v1545 = vsel %vm1544, %v1536, %v1541
        %v1546 = vrsqrt.pop %v1515
        %v1547 = vmul.f32 %v1546, %v1515
        %v1548 = vmul.f32 %v1547, %v1546
        %v1549 = vmul.f32 0.5, %v1548
        %v1550 = vsub.f32 1.5, %v1549
        %v1551 = vmul.f32 %v1546, %v1550
        %vm1552 = vweird.f32 %v1515
        %vm1553 = vweird.f32 %v1546
        %vm1554 = vmor %vm1552, %vm1553
        %v1555 = vsel %vm1554, %v1546, %v1551
        %v1556 = vmul.f32 %v1488, %v1525
        %v1557 = vmul.f32 %v1489, %v1535
        %v1558 = vmul.f32 %v1490, %v1545
        %v1559 = vmul.f32 %v1491, %v1555
        %s1560 = scalar_lea.vmem %s11, 3
        %v1561 = vld [vmem:[%s1560] sm:$0x1]
        %v1563 = vperm.slane %v1561, 0
        %v1565 = vmul.f32 %v1556, %v1563
        %v1566 = vmul.f32 %v1557, %v1563
        %v1567 = vmul.f32 %v1558, %v1563
        %v1568 = vmul.f32 %v1559, %v1563
        %s1569 = scalar_lea.vmem %s12, 3
        %v1570 = vld [vmem:[%s1569] sm:$0x1]
        %v1572 = vperm.slane %v1570, 0
        %v1574 = vadd.f32 %v1565, %v1572
        %v1575 = vadd.f32 %v1566, %v1572
        %v1576 = vadd.f32 %v1567, %v1572
        %v1577 = vadd.f32 %v1568, %v1572
        %s1578 = scalar_lea.vmem %s5, 96
        %v1579 = vld [vmem:[%s1578] sm:$0xff]
        %v1580 = vld [vmem:[%s1578 + $0x8] sm:$0xff]
        %v1581 = vld [vmem:[%s1578 + $0x10] sm:$0xff]
        %v1582 = vld [vmem:[%s1578 + $0x18] sm:$0xff]
        %s1583 = scalar_lea.vmem %s6, 3
        %v1584 = vld [vmem:[%s1583] sm:$0x1]
        %s1585 = scalar_lea.vmem %s7, 96
        %v1586 = vld [vmem:[%s1585] sm:$0xff]
        %v1587 = vld [vmem:[%s1585 + $0x8] sm:$0xff]
        %v1588 = vld [vmem:[%s1585 + $0x10] sm:$0xff]
        %v1589 = vld [vmem:[%s1585 + $0x18] sm:$0xff]
        %s1590 = scalar_lea.vmem %s8, 3
        %v1591 = vld [vmem:[%s1590] sm:$0x1]
        %s1592 = scalar_lea.vmem %s9, 96
        %v1593 = vld [vmem:[%s1592] sm:$0xff]
        %v1594 = vld [vmem:[%s1592 + $0x8] sm:$0xff]
        %v1595 = vld [vmem:[%s1592 + $0x10] sm:$0xff]
        %v1596 = vld [vmem:[%s1592 + $0x18] sm:$0xff]
        %s1597 = scalar_lea.vmem %s10, 3
        %v1598 = vld [vmem:[%s1597] sm:$0x1]
        %v1600 = vsel %vm690, %v671, 0
        %1602 = vmatpush.msra.mxu0 0.0
        %1603 = vmatpush.msra.mxu0 0.0
        %1604 = vmatpush.msra.mxu0 0.0
        %1605 = vmatpush.msra.mxu0 0.0
        %1606 = vmatpush.msra.mxu0 0.0
        %1607 = vmatpush.msra.mxu0 0.0
        %1608 = vmatpush.msra.mxu0 0.0
        %1609 = vmatpush.msra.mxu0 0.0
        %1610 = vmatpush.msra.mxu0 0.0
        %1611 = vmatpush.msra.mxu0 0.0
        %1612 = vmatpush.msra.mxu0 0.0
        %1613 = vmatpush.msra.mxu0 0.0
        %1614 = vmatpush.msra.mxu0 %v1582
        %1615 = vmatpush.msra.mxu0 %v1581
        %1616 = vmatpush.msra.mxu0 %v1580
        %1617 = vmatpush.msra.mxu0 %v1579
        %1618 = vmatmul.f32.gmra.mxu0 %v1600
        %v1619 = vpop.f32.mrf.mxu0
        %v1620 = vadd.f32 %v1584, %v1619
        %1621 = vdwg.mxu0
        %v1623 = vperm.slane %v1591, 0
        %1625 = vmatpush.msra.mxu0 0.0
        %1626 = vmatpush.msra.mxu0 0.0
        %1627 = vmatpush.msra.mxu0 0.0
        %1628 = vmatpush.msra.mxu0 0.0
        %1629 = vmatpush.msra.mxu0 0.0
        %1630 = vmatpush.msra.mxu0 0.0
        %1631 = vmatpush.msra.mxu0 0.0
        %1632 = vmatpush.msra.mxu0 0.0
        %1633 = vmatpush.msra.mxu0 0.0
        %1634 = vmatpush.msra.mxu0 0.0
        %1635 = vmatpush.msra.mxu0 0.0
        %1636 = vmatpush.msra.mxu0 0.0
        %1637 = vmatpush.msra.mxu0 %v1589
        %1638 = vmatpush.msra.mxu0 %v1588
        %1639 = vmatpush.msra.mxu0 %v1587
        %1640 = vmatpush.msra.mxu0 %v1586
        %1641 = vmatmul.f32.gmra.mxu0 %v1267
        %v1642 = vpop.f32.mrf.mxu0
        %v1643 = vadd.f32 %v1623, %v1642
        %1644 = vdwg.mxu0
        %v1646 = vsel %vm690, %v1620, 0
        %v1649 = vsel %vm690, %v1643, 0
        %1651 = vmatpush.xpose.msra.mxu0 0.0
        %1652 = vmatpush.xpose.msra.mxu0 0.0
        %1653 = vmatpush.xpose.msra.mxu0 0.0
        %1654 = vmatpush.xpose.msra.mxu0 0.0
        %1655 = vmatpush.xpose.msra.mxu0 0.0
        %1656 = vmatpush.xpose.msra.mxu0 0.0
        %1657 = vmatpush.xpose.msra.mxu0 0.0
        %1658 = vmatpush.xpose.msra.mxu0 0.0
        %1659 = vmatpush.xpose.msra.mxu0 0.0
        %1660 = vmatpush.xpose.msra.mxu0 0.0
        %1661 = vmatpush.xpose.msra.mxu0 0.0
        %1662 = vmatpush.xpose.msra.mxu0 0.0
        %1663 = vmatpush.xpose.msra.mxu0 0.0
        %1664 = vmatpush.xpose.msra.mxu0 0.0
        %1665 = vmatpush.xpose.msra.mxu0 0.0
        %1666 = vmatpush.xpose.msra.mxu0 %v1649
        %1667 = vmatmul.f32.gmra.mxu0 %v1646
        %v1668 = vpop.f32.mrf.mxu0
        %v1669 = vadd.f32 0.0, %v1668
        %1670 = vdwg.mxu0
        %v1672 = vsel %vm690, %v1574, 0
        %v1675 = vsel %vm690, %v1575, 0
        %v1678 = vsel %vm690, %v1576, 0
        %v1681 = vsel %vm690, %v1577, 0
        %1683 = vmatpush.msra.mxu0 0.0
        %1684 = vmatpush.msra.mxu0 0.0
        %1685 = vmatpush.msra.mxu0 0.0
        %1686 = vmatpush.msra.mxu0 0.0
        %1687 = vmatpush.msra.mxu0 0.0
        %1688 = vmatpush.msra.mxu0 0.0
        %1689 = vmatpush.msra.mxu0 0.0
        %1690 = vmatpush.msra.mxu0 0.0
        %1691 = vmatpush.msra.mxu0 0.0
        %1692 = vmatpush.msra.mxu0 0.0
        %1693 = vmatpush.msra.mxu0 0.0
        %1694 = vmatpush.msra.mxu0 0.0
        %1695 = vmatpush.msra.mxu0 %v1589
        %1696 = vmatpush.msra.mxu0 %v1588
        %1697 = vmatpush.msra.mxu0 %v1587
        %1698 = vmatpush.msra.mxu0 %v1586
        %1699 = vmatmul.f32.gmra.mxu0 %v1672
        %v1700 = vpop.f32.mrf.mxu0
        %v1701 = vadd.f32 %v1623, %v1700
        %1702 = vmatmul.f32.gmra.mxu0 %v1675
        %v1703 = vpop.f32.mrf.mxu0
        %v1704 = vadd.f32 %v1623, %v1703
        %1705 = vmatmul.f32.gmra.mxu0 %v1678
        %v1706 = vpop.f32.mrf.mxu0
        %v1707 = vadd.f32 %v1623, %v1706
        %1708 = vmatmul.f32.gmra.mxu0 %v1681
        %v1709 = vpop.f32.mrf.mxu0
        %v1710 = vadd.f32 %v1623, %v1709
        %1711 = vdwg.mxu0
        %v1713 = vsel %vm690, %v1701, 0
        %v1716 = vsel %vm690, %v1704, 0
        %v1719 = vsel %vm690, %v1707, 0
        %v1722 = vsel %vm690, %v1710, 0
        %1724 = vmatpush.xpose.msra.mxu0 0.0
        %1725 = vmatpush.xpose.msra.mxu0 0.0
        %1726 = vmatpush.xpose.msra.mxu0 0.0
        %1727 = vmatpush.xpose.msra.mxu0 0.0
        %1728 = vmatpush.xpose.msra.mxu0 0.0
        %1729 = vmatpush.xpose.msra.mxu0 0.0
        %1730 = vmatpush.xpose.msra.mxu0 0.0
        %1731 = vmatpush.xpose.msra.mxu0 0.0
        %1732 = vmatpush.xpose.msra.mxu0 0.0
        %1733 = vmatpush.xpose.msra.mxu0 0.0
        %1734 = vmatpush.xpose.msra.mxu0 0.0
        %1735 = vmatpush.xpose.msra.mxu0 0.0
        %1736 = vmatpush.xpose.msra.mxu0 %v1722
        %1737 = vmatpush.xpose.msra.mxu0 %v1719
        %1738 = vmatpush.xpose.msra.mxu0 %v1716
        %1739 = vmatpush.xpose.msra.mxu0 %v1713
        %1740 = vmatmul.f32.gmra.mxu0 %v1646
        %v1741 = vpop.f32.mrf.mxu0
        %v1742 = vadd.f32 0.0, %v1741
        %1743 = vdwg.mxu0
        %vm1744 = vcmask 32768
        %v1745 = vsel %vm1744, %v1669, -inf
        %1746 = vmax.xlane.f32.xlu0 %v1745
        %v1747 = vpop.xlane.xlu0 %1746
        %vm1748 = vcmask 212992
        %v1749 = vsel %vm1748, %v1742, -inf
        %1750 = vmax.xlane.f32.xlu0 %v1749
        %v1751 = vpop.xlane.xlu0 %1750
        %v1752 = vmax.f32 %v1747, %v1751
        %v1753 = vsub.f32 %v1669, %v1752
        %v1754 = vmul.f32 %v1753, 1.442695
        %v1755 = vpow.pop %v1754
        %v1756 = vsel %vm1744, %v1755, 0.0
        %1757 = vadd.xlane.f32.xlu0 %v1756
        %v1758 = vpop.xlane.xlu0 %1757
        %v1759 = vsub.f32 %v1742, %v1752
        %v1760 = vmul.f32 %v1759, 1.442695
        %v1761 = vpow.pop %v1760
        %v1762 = vsel %vm1748, %v1761, 0.0
        %1763 = vadd.xlane.f32.xlu0 %v1762
        %v1764 = vpop.xlane.xlu0 %1763
        %1765 = vrot.lane.b32.xlu0 %v1701, 96
        %v1766 = vpop.permute.xlu0 %1765
        %1767 = vrot.lane.b32.xlu0 %v1704, 96
        %v1768 = vpop.permute.xlu0 %1767
        %1769 = vrot.lane.b32.xlu0 %v1707, 96
        %v1770 = vpop.permute.xlu0 %1769
        %1771 = vrot.lane.b32.xlu0 %v1710, 96
        %v1772 = vpop.permute.xlu0 %1771
        %v1777 = vsel %vm1017, %v1761, 0
        %v1779 = vsel %vm1021, %v1772, 0
        %1781 = vmatpush.msra.mxu0 0.0
        %1782 = vmatpush.msra.mxu0 0.0
        %1783 = vmatpush.msra.mxu0 0.0
        %1784 = vmatpush.msra.mxu0 0.0
        %1785 = vmatpush.msra.mxu0 0.0
        %1786 = vmatpush.msra.mxu0 0.0
        %1787 = vmatpush.msra.mxu0 0.0
        %1788 = vmatpush.msra.mxu0 0.0
        %1789 = vmatpush.msra.mxu0 0.0
        %1790 = vmatpush.msra.mxu0 0.0
        %1791 = vmatpush.msra.mxu0 0.0
        %1792 = vmatpush.msra.mxu0 0.0
        %1793 = vmatpush.msra.mxu0 %v1779
        %1794 = vmatpush.msra.mxu0 %v1770
        %1795 = vmatpush.msra.mxu0 %v1768
        %1796 = vmatpush.msra.mxu0 %v1766
        %1797 = vmatmul.f32.gmra.mxu0 %v1777
        %v1798 = vpop.f32.mrf.mxu0
        %v1799 = vadd.f32 0.0, %v1798
        %1800 = vdwg.mxu0
        %1801 = vrot.lane.b32.xlu0 %v1643, 96
        %v1802 = vpop.permute.xlu0 %1801
        %v1804 = vsel %vm775, %v1755, 0
        %v1806 = vsel %vm779, %v1802, 0
        %1808 = vmatpush.msra.mxu0 0.0
        %1809 = vmatpush.msra.mxu0 0.0
        %1810 = vmatpush.msra.mxu0 0.0
        %1811 = vmatpush.msra.mxu0 0.0
        %1812 = vmatpush.msra.mxu0 0.0
        %1813 = vmatpush.msra.mxu0 0.0
        %1814 = vmatpush.msra.mxu0 0.0
        %1815 = vmatpush.msra.mxu0 0.0
        %1816 = vmatpush.msra.mxu0 0.0
        %1817 = vmatpush.msra.mxu0 0.0
        %1818 = vmatpush.msra.mxu0 0.0
        %1819 = vmatpush.msra.mxu0 0.0
        %1820 = vmatpush.msra.mxu0 0.0
        %1821 = vmatpush.msra.mxu0 0.0
        %1822 = vmatpush.msra.mxu0 0.0
        %1823 = vmatpush.msra.mxu0 %v1806
        %1824 = vmatmul.f32.gmra.mxu0 %v1804
        %v1825 = vpop.f32.mrf.mxu0
        %v1826 = vadd.f32 %v1799, %v1825
        %1827 = vdwg.mxu0
        %v1828 = vadd.f32 %v1758, %v1764
        %v1829 = vrcp.pop %v1828
        %v1830 = vmul.f32 %v1826, %v1829
        %v1832 = vsel %vm690, %v1830, 0
        %1834 = vmatpush.msra.mxu0 0.0
        %1835 = vmatpush.msra.mxu0 0.0
        %1836 = vmatpush.msra.mxu0 0.0
        %1837 = vmatpush.msra.mxu0 0.0
        %1838 = vmatpush.msra.mxu0 0.0
        %1839 = vmatpush.msra.mxu0 0.0
        %1840 = vmatpush.msra.mxu0 0.0
        %1841 = vmatpush.msra.mxu0 0.0
        %1842 = vmatpush.msra.mxu0 0.0
        %1843 = vmatpush.msra.mxu0 0.0
        %1844 = vmatpush.msra.mxu0 0.0
        %1845 = vmatpush.msra.mxu0 0.0
        %1846 = vmatpush.msra.mxu0 %v1596
        %1847 = vmatpush.msra.mxu0 %v1595
        %1848 = vmatpush.msra.mxu0 %v1594
        %1849 = vmatpush.msra.mxu0 %v1593
        %1850 = vmatmul.f32.gmra.mxu0 %v1832
        %v1851 = vpop.f32.mrf.mxu0
        %v1852 = vadd.f32 %v1598, %v1851
        %1853 = vdwg.mxu0
        %vm1854 = vcmask 253952
        %v1855 = vsel %vm1854, %v1852, 0.0
        %1856 = vadd.xlane.f32.xlu0 %v1855
        %v1857 = vpop.xlane.xlu0 %1856
        %v1858 = vmul.f32 %v1857, %v840
        %v1859 = vsub.f32 %v1852, %v1858
        %v1860 = vmul.f32 %v1859, %v1859
        %v1861 = vsel %vm1854, %v1860, 0.0
        %1862 = vadd.xlane.f32.xlu0 %v1861
        %v1863 = vpop.xlane.xlu0 %1862
        %v1864 = vmul.f32 %v1863, %v840
        %v1865 = vadd.f32 %v1864, 1e-05
        %v1866 = vrsqrt.pop %v1865
        %v1867 = vmul.f32 %v1866, %v1865
        %v1868 = vmul.f32 %v1867, %v1866
        %v1869 = vmul.f32 0.5, %v1868
        %v1870 = vsub.f32 1.5, %v1869
        %v1871 = vmul.f32 %v1866, %v1870
        %vm1872 = vweird.f32 %v1865
        %vm1873 = vweird.f32 %v1866
        %vm1874 = vmor %vm1872, %vm1873
        %v1875 = vsel %vm1874, %v1866, %v1871
        %v1876 = vmul.f32 %v1859, %v1875
        %s1877 = scalar_lea.vmem %s11, 4
        %v1878 = vld [vmem:[%s1877] sm:$0x1]
        %v1879 = vmul.f32 %v1876, %v1878
        %s1880 = scalar_lea.vmem %s12, 4
        %v1881 = vld [vmem:[%s1880] sm:$0x1]
        %v1882 = vadd.f32 %v1879, %v1881
        %s1883 = scalar_lea.vmem %s5, 128
        %v1884 = vld [vmem:[%s1883] sm:$0xff]
        %v1885 = vld [vmem:[%s1883 + $0x8] sm:$0xff]
        %v1886 = vld [vmem:[%s1883 + $0x10] sm:$0xff]
        %v1887 = vld [vmem:[%s1883 + $0x18] sm:$0xff]
        %s1888 = scalar_lea.vmem %s6, 4
        %v1889 = vld [vmem:[%s1888] sm:$0x1]
        %s1890 = scalar_lea.vmem %s7, 128
        %v1891 = vld [vmem:[%s1890] sm:$0xff]
        %v1892 = vld [vmem:[%s1890 + $0x8] sm:$0xff]
        %v1893 = vld [vmem:[%s1890 + $0x10] sm:$0xff]
        %v1894 = vld [vmem:[%s1890 + $0x18] sm:$0xff]
        %s1895 = scalar_lea.vmem %s8, 4
        %v1896 = vld [vmem:[%s1895] sm:$0x1]
        %s1897 = scalar_lea.vmem %s9, 128
        %v1898 = vld [vmem:[%s1897] sm:$0xff]
        %v1899 = vld [vmem:[%s1897 + $0x8] sm:$0xff]
        %v1900 = vld [vmem:[%s1897 + $0x10] sm:$0xff]
        %v1901 = vld [vmem:[%s1897 + $0x18] sm:$0xff]
        %s1902 = scalar_lea.vmem %s10, 4
        %v1903 = vld [vmem:[%s1902] sm:$0x1]
        %v1905 = vperm.slane %v1889, 0
        %1907 = vmatpush.msra.mxu0 0.0
        %1908 = vmatpush.msra.mxu0 0.0
        %1909 = vmatpush.msra.mxu0 0.0
        %1910 = vmatpush.msra.mxu0 0.0
        %1911 = vmatpush.msra.mxu0 0.0
        %1912 = vmatpush.msra.mxu0 0.0
        %1913 = vmatpush.msra.mxu0 0.0
        %1914 = vmatpush.msra.mxu0 0.0
        %1915 = vmatpush.msra.mxu0 0.0
        %1916 = vmatpush.msra.mxu0 0.0
        %1917 = vmatpush.msra.mxu0 0.0
        %1918 = vmatpush.msra.mxu0 0.0
        %1919 = vmatpush.msra.mxu0 %v1887
        %1920 = vmatpush.msra.mxu0 %v1886
        %1921 = vmatpush.msra.mxu0 %v1885
        %1922 = vmatpush.msra.mxu0 %v1884
        %1923 = vmatmul.f32.gmra.mxu0 %v1267
        %v1924 = vpop.f32.mrf.mxu0
        %v1925 = vadd.f32 %v1905, %v1924
        %1926 = vdwg.mxu0
        %v1928 = vperm.slane %v1896, 0
        %1930 = vmatpush.msra.mxu0 0.0
        %1931 = vmatpush.msra.mxu0 0.0
        %1932 = vmatpush.msra.mxu0 0.0
        %1933 = vmatpush.msra.mxu0 0.0
        %1934 = vmatpush.msra.mxu0 0.0
        %1935 = vmatpush.msra.mxu0 0.0
        %1936 = vmatpush.msra.mxu0 0.0
        %1937 = vmatpush.msra.mxu0 0.0
        %1938 = vmatpush.msra.mxu0 0.0
        %1939 = vmatpush.msra.mxu0 0.0
        %1940 = vmatpush.msra.mxu0 0.0
        %1941 = vmatpush.msra.mxu0 0.0
        %1942 = vmatpush.msra.mxu0 %v1894
        %1943 = vmatpush.msra.mxu0 %v1893
        %1944 = vmatpush.msra.mxu0 %v1892
        %1945 = vmatpush.msra.mxu0 %v1891
        %1946 = vmatmul.f32.gmra.mxu0 %v1267
        %v1947 = vpop.f32.mrf.mxu0
        %v1948 = vadd.f32 %v1928, %v1947
        %1949 = vdwg.mxu0
        %v1951 = vsel %vm690, %v1925, 0
        %v1954 = vsel %vm690, %v1948, 0
        %1956 = vmatpush.xpose.msra.mxu0 0.0
        %1957 = vmatpush.xpose.msra.mxu0 0.0
        %1958 = vmatpush.xpose.msra.mxu0 0.0
        %1959 = vmatpush.xpose.msra.mxu0 0.0
        %1960 = vmatpush.xpose.msra.mxu0 0.0
        %1961 = vmatpush.xpose.msra.mxu0 0.0
        %1962 = vmatpush.xpose.msra.mxu0 0.0
        %1963 = vmatpush.xpose.msra.mxu0 0.0
        %1964 = vmatpush.xpose.msra.mxu0 0.0
        %1965 = vmatpush.xpose.msra.mxu0 0.0
        %1966 = vmatpush.xpose.msra.mxu0 0.0
        %1967 = vmatpush.xpose.msra.mxu0 0.0
        %1968 = vmatpush.xpose.msra.mxu0 0.0
        %1969 = vmatpush.xpose.msra.mxu0 0.0
        %1970 = vmatpush.xpose.msra.mxu0 0.0
        %1971 = vmatpush.xpose.msra.mxu0 %v1954
        %1972 = vmatmul.f32.gmra.mxu0 %v1951
        %v1973 = vpop.f32.mrf.mxu0
        %v1974 = vadd.f32 0.0, %v1973
        %1975 = vdwg.mxu0
        %v1976 = vsel %vm763, %v1974, -inf
        %1977 = vmax.xlane.f32.xlu0 %v1976
        %v1978 = vpop.xlane.xlu0 %1977
        %v1979 = vsub.f32 %v1974, %v1978
        %v1980 = vmul.f32 %v1979, 1.442695
        %v1981 = vpow.pop %v1980
        %v1982 = vsel %vm763, %v1981, 0.0
        %1983 = vadd.xlane.f32.xlu0 %v1982
        %v1984 = vpop.xlane.xlu0 %1983
        %1985 = vrot.lane.b32.xlu0 %v1948, 96
        %v1986 = vpop.permute.xlu0 %1985
        %v1988 = vsel %vm775, %v1981, 0
        %v1990 = vsel %vm779, %v1986, 0
        %1992 = vmatpush.msra.mxu0 0.0
        %1993 = vmatpush.msra.mxu0 0.0
        %1994 = vmatpush.msra.mxu0 0.0
        %1995 = vmatpush.msra.mxu0 0.0
        %1996 = vmatpush.msra.mxu0 0.0
        %1997 = vmatpush.msra.mxu0 0.0
        %1998 = vmatpush.msra.mxu0 0.0
        %1999 = vmatpush.msra.mxu0 0.0
        %2000 = vmatpush.msra.mxu0 0.0
        %2001 = vmatpush.msra.mxu0 0.0
        %2002 = vmatpush.msra.mxu0 0.0
        %2003 = vmatpush.msra.mxu0 0.0
        %2004 = vmatpush.msra.mxu0 0.0
        %2005 = vmatpush.msra.mxu0 0.0
        %2006 = vmatpush.msra.mxu0 0.0
        %2007 = vmatpush.msra.mxu0 %v1990
        %2008 = vmatmul.f32.gmra.mxu0 %v1988
        %v2009 = vpop.f32.mrf.mxu0
        %v2010 = vadd.f32 0.0, %v2009
        %2011 = vdwg.mxu0
        %v2012 = vrcp.pop %v1984
        %v2013 = vmul.f32 %v2010, %v2012
        %v2015 = vperm.slane %v1903, 0
        %v2018 = vsel %vm690, %v2013, 0
        %2020 = vmatpush.msra.mxu0 0.0
        %2021 = vmatpush.msra.mxu0 0.0
        %2022 = vmatpush.msra.mxu0 0.0
        %2023 = vmatpush.msra.mxu0 0.0
        %2024 = vmatpush.msra.mxu0 0.0
        %2025 = vmatpush.msra.mxu0 0.0
        %2026 = vmatpush.msra.mxu0 0.0
        %2027 = vmatpush.msra.mxu0 0.0
        %2028 = vmatpush.msra.mxu0 0.0
        %2029 = vmatpush.msra.mxu0 0.0
        %2030 = vmatpush.msra.mxu0 0.0
        %2031 = vmatpush.msra.mxu0 0.0
        %2032 = vmatpush.msra.mxu0 %v1901
        %2033 = vmatpush.msra.mxu0 %v1900
        %2034 = vmatpush.msra.mxu0 %v1899
        %2035 = vmatpush.msra.mxu0 %v1898
        %2036 = vmatmul.f32.gmra.mxu0 %v2018
        %v2037 = vpop.f32.mrf.mxu0
        %v2038 = vadd.f32 %v2015, %v2037
        %2039 = vdwg.mxu0
        %v2040 = vsel %vm830, %v2038, 0.0
        %2041 = vadd.xlane.f32.xlu0 %v2040
        %v2042 = vpop.xlane.xlu0 %2041
        %v2043 = vmul.f32 %v2042, %v840
        %v2044 = vsub.f32 %v2038, %v2043
        %v2045 = vmul.f32 %v2044, %v2044
        %v2046 = vsel %vm830, %v2045, 0.0
        %2047 = vadd.xlane.f32.xlu0 %v2046
        %v2048 = vpop.xlane.xlu0 %2047
        %v2049 = vmul.f32 %v2048, %v840
        %v2050 = vadd.f32 %v2049, 1e-05
        %v2051 = vrsqrt.pop %v2050
        %v2052 = vmul.f32 %v2051, %v2050
        %v2053 = vmul.f32 %v2052, %v2051
        %v2054 = vmul.f32 0.5, %v2053
        %v2055 = vsub.f32 1.5, %v2054
        %v2056 = vmul.f32 %v2051, %v2055
        %vm2057 = vweird.f32 %v2050
        %vm2058 = vweird.f32 %v2051
        %vm2059 = vmor %vm2057, %vm2058
        %v2060 = vsel %vm2059, %v2051, %v2056
        %v2061 = vmul.f32 %v2044, %v2060
        %s2062 = scalar_lea.vmem %s11, 5
        %v2063 = vld [vmem:[%s2062] sm:$0x1]
        %v2065 = vperm.slane %v2063, 0
        %v2067 = vmul.f32 %v2061, %v2065
        %s2068 = scalar_lea.vmem %s12, 5
        %v2069 = vld [vmem:[%s2068] sm:$0x1]
        %v2071 = vperm.slane %v2069, 0
        %v2073 = vadd.f32 %v2067, %v2071
        %s2074 = scalar_lea.vmem %s5, 160
        %v2075 = vld [vmem:[%s2074] sm:$0xff]
        %v2076 = vld [vmem:[%s2074 + $0x8] sm:$0xff]
        %v2077 = vld [vmem:[%s2074 + $0x10] sm:$0xff]
        %v2078 = vld [vmem:[%s2074 + $0x18] sm:$0xff]
        %s2079 = scalar_lea.vmem %s6, 5
        %v2080 = vld [vmem:[%s2079] sm:$0x1]
        %s2081 = scalar_lea.vmem %s7, 160
        %v2082 = vld [vmem:[%s2081] sm:$0xff]
        %v2083 = vld [vmem:[%s2081 + $0x8] sm:$0xff]
        %v2084 = vld [vmem:[%s2081 + $0x10] sm:$0xff]
        %v2085 = vld [vmem:[%s2081 + $0x18] sm:$0xff]
        %s2086 = scalar_lea.vmem %s8, 5
        %v2087 = vld [vmem:[%s2086] sm:$0x1]
        %s2088 = scalar_lea.vmem %s9, 160
        %v2089 = vld [vmem:[%s2088] sm:$0xff]
        %v2090 = vld [vmem:[%s2088 + $0x8] sm:$0xff]
        %v2091 = vld [vmem:[%s2088 + $0x10] sm:$0xff]
        %v2092 = vld [vmem:[%s2088 + $0x18] sm:$0xff]
        %s2093 = scalar_lea.vmem %s10, 5
        %v2094 = vld [vmem:[%s2093] sm:$0x1]
        %v2096 = vperm.slane %v2080, 0
        %v2099 = vsel %vm690, %v2073, 0
        %2101 = vmatpush.msra.mxu0 0.0
        %2102 = vmatpush.msra.mxu0 0.0
        %2103 = vmatpush.msra.mxu0 0.0
        %2104 = vmatpush.msra.mxu0 0.0
        %2105 = vmatpush.msra.mxu0 0.0
        %2106 = vmatpush.msra.mxu0 0.0
        %2107 = vmatpush.msra.mxu0 0.0
        %2108 = vmatpush.msra.mxu0 0.0
        %2109 = vmatpush.msra.mxu0 0.0
        %2110 = vmatpush.msra.mxu0 0.0
        %2111 = vmatpush.msra.mxu0 0.0
        %2112 = vmatpush.msra.mxu0 0.0
        %2113 = vmatpush.msra.mxu0 %v2078
        %2114 = vmatpush.msra.mxu0 %v2077
        %2115 = vmatpush.msra.mxu0 %v2076
        %2116 = vmatpush.msra.mxu0 %v2075
        %2117 = vmatmul.f32.gmra.mxu0 %v2099
        %v2118 = vpop.f32.mrf.mxu0
        %v2119 = vadd.f32 %v2096, %v2118
        %2120 = vdwg.mxu0
        %v2122 = vperm.slane %v2087, 0
        %2124 = vmatpush.msra.mxu0 0.0
        %2125 = vmatpush.msra.mxu0 0.0
        %2126 = vmatpush.msra.mxu0 0.0
        %2127 = vmatpush.msra.mxu0 0.0
        %2128 = vmatpush.msra.mxu0 0.0
        %2129 = vmatpush.msra.mxu0 0.0
        %2130 = vmatpush.msra.mxu0 0.0
        %2131 = vmatpush.msra.mxu0 0.0
        %2132 = vmatpush.msra.mxu0 0.0
        %2133 = vmatpush.msra.mxu0 0.0
        %2134 = vmatpush.msra.mxu0 0.0
        %2135 = vmatpush.msra.mxu0 0.0
        %2136 = vmatpush.msra.mxu0 %v2085
        %2137 = vmatpush.msra.mxu0 %v2084
        %2138 = vmatpush.msra.mxu0 %v2083
        %2139 = vmatpush.msra.mxu0 %v2082
        %2140 = vmatmul.f32.gmra.mxu0 %v1672
        %v2141 = vpop.f32.mrf.mxu0
        %v2142 = vadd.f32 %v2122, %v2141
        %2143 = vmatmul.f32.gmra.mxu0 %v1675
        %v2144 = vpop.f32.mrf.mxu0
        %v2145 = vadd.f32 %v2122, %v2144
        %2146 = vmatmul.f32.gmra.mxu0 %v1678
        %v2147 = vpop.f32.mrf.mxu0
        %v2148 = vadd.f32 %v2122, %v2147
        %2149 = vmatmul.f32.gmra.mxu0 %v1681
        %v2150 = vpop.f32.mrf.mxu0
        %v2151 = vadd.f32 %v2122, %v2150
        %2152 = vdwg.mxu0
        %v2154 = vsel %vm690, %v2119, 0
        %v2157 = vsel %vm690, %v2142, 0
        %v2160 = vsel %vm690, %v2145, 0
        %v2163 = vsel %vm690, %v2148, 0
        %v2166 = vsel %vm690, %v2151, 0
        %2168 = vmatpush.xpose.msra.mxu0 0.0
        %2169 = vmatpush.xpose.msra.mxu0 0.0
        %2170 = vmatpush.xpose.msra.mxu0 0.0
        %2171 = vmatpush.xpose.msra.mxu0 0.0
        %2172 = vmatpush.xpose.msra.mxu0 0.0
        %2173 = vmatpush.xpose.msra.mxu0 0.0
        %2174 = vmatpush.xpose.msra.mxu0 0.0
        %2175 = vmatpush.xpose.msra.mxu0 0.0
        %2176 = vmatpush.xpose.msra.mxu0 0.0
        %2177 = vmatpush.xpose.msra.mxu0 0.0
        %2178 = vmatpush.xpose.msra.mxu0 0.0
        %2179 = vmatpush.xpose.msra.mxu0 0.0
        %2180 = vmatpush.xpose.msra.mxu0 %v2166
        %2181 = vmatpush.xpose.msra.mxu0 %v2163
        %2182 = vmatpush.xpose.msra.mxu0 %v2160
        %2183 = vmatpush.xpose.msra.mxu0 %v2157
        %2184 = vmatmul.f32.gmra.mxu0 %v2154
        %v2185 = vpop.f32.mrf.mxu0
        %v2186 = vadd.f32 0.0, %v2185
        %2187 = vdwg.mxu0
        %v2188 = vsel %vm996, %v2186, -inf
        %2189 = vmax.xlane.f32.xlu0 %v2188
        %v2190 = vpop.xlane.xlu0 %2189
        %v2191 = vsub.f32 %v2186, %v2190
        %v2192 = vmul.f32 %v2191, 1.442695
        %v2193 = vpow.pop %v2192
        %v2194 = vsel %vm996, %v2193, 0.0
        %2195 = vadd.xlane.f32.xlu0 %v2194
        %v2196 = vpop.xlane.xlu0 %2195
        %2197 = vrot.lane.b32.xlu0 %v2142, 96
        %v2198 = vpop.permute.xlu0 %2197
        %2199 = vrot.lane.b32.xlu0 %v2145, 96
        %v2200 = vpop.permute.xlu0 %2199
        %2201 = vrot.lane.b32.xlu0 %v2148, 96
        %v2202 = vpop.permute.xlu0 %2201
        %2203 = vrot.lane.b32.xlu0 %v2151, 96
        %v2204 = vpop.permute.xlu0 %2203
        %v2209 = vsel %vm1017, %v2193, 0
        %v2211 = vsel %vm1021, %v2204, 0
        %2213 = vmatpush.msra.mxu0 0.0
        %2214 = vmatpush.msra.mxu0 0.0
        %2215 = vmatpush.msra.mxu0 0.0
        %2216 = vmatpush.msra.mxu0 0.0
        %2217 = vmatpush.msra.mxu0 0.0
        %2218 = vmatpush.msra.mxu0 0.0
        %2219 = vmatpush.msra.mxu0 0.0
        %2220 = vmatpush.msra.mxu0 0.0
        %2221 = vmatpush.msra.mxu0 0.0
        %2222 = vmatpush.msra.mxu0 0.0
        %2223 = vmatpush.msra.mxu0 0.0
        %2224 = vmatpush.msra.mxu0 0.0
        %2225 = vmatpush.msra.mxu0 %v2211
        %2226 = vmatpush.msra.mxu0 %v2202
        %2227 = vmatpush.msra.mxu0 %v2200
        %2228 = vmatpush.msra.mxu0 %v2198
        %2229 = vmatmul.f32.gmra.mxu0 %v2209
        %v2230 = vpop.f32.mrf.mxu0
        %v2231 = vadd.f32 0.0, %v2230
        %2232 = vdwg.mxu0
        %v2233 = vrcp.pop %v2196
        %v2234 = vmul.f32 %v2231, %v2233
        %v2236 = vperm.slane %v2094, 0
        %v2239 = vsel %vm690, %v2234, 0
        %2241 = vmatpush.msra.mxu0 0.0
        %2242 = vmatpush.msra.mxu0 0.0
        %2243 = vmatpush.msra.mxu0 0.0
        %2244 = vmatpush.msra.mxu0 0.0
        %2245 = vmatpush.msra.mxu0 0.0
        %2246 = vmatpush.msra.mxu0 0.0
        %2247 = vmatpush.msra.mxu0 0.0
        %2248 = vmatpush.msra.mxu0 0.0
        %2249 = vmatpush.msra.mxu0 0.0
        %2250 = vmatpush.msra.mxu0 0.0
        %2251 = vmatpush.msra.mxu0 0.0
        %2252 = vmatpush.msra.mxu0 0.0
        %2253 = vmatpush.msra.mxu0 %v2092
        %2254 = vmatpush.msra.mxu0 %v2091
        %2255 = vmatpush.msra.mxu0 %v2090
        %2256 = vmatpush.msra.mxu0 %v2089
        %2257 = vmatmul.f32.gmra.mxu0 %v2239
        %v2258 = vpop.f32.mrf.mxu0
        %v2259 = vadd.f32 %v2236, %v2258
        %2260 = vdwg.mxu0
        %v2261 = vadd.f32 %v2073, %v2259
        %v2262 = vsel %vm830, %v2261, 0.0
        %2263 = vadd.xlane.f32.xlu0 %v2262
        %v2264 = vpop.xlane.xlu0 %2263
        %v2265 = vmul.f32 %v2264, %v840
        %v2266 = vsub.f32 %v2261, %v2265
        %v2267 = vmul.f32 %v2266, %v2266
        %v2268 = vsel %vm830, %v2267, 0.0
        %2269 = vadd.xlane.f32.xlu0 %v2268
        %v2270 = vpop.xlane.xlu0 %2269
        %v2271 = vmul.f32 %v2270, %v840
        %v2272 = vadd.f32 %v2271, 1e-05
        %v2273 = vrsqrt.pop %v2272
        %v2274 = vmul.f32 %v2273, %v2272
        %v2275 = vmul.f32 %v2274, %v2273
        %v2276 = vmul.f32 0.5, %v2275
        %v2277 = vsub.f32 1.5, %v2276
        %v2278 = vmul.f32 %v2273, %v2277
        %vm2279 = vweird.f32 %v2272
        %vm2280 = vweird.f32 %v2273
        %vm2281 = vmor %vm2279, %vm2280
        %v2282 = vsel %vm2281, %v2273, %v2278
        %v2283 = vmul.f32 %v2266, %v2282
        %s2284 = scalar_lea.vmem %s11, 6
        %v2285 = vld [vmem:[%s2284] sm:$0x1]
        %v2287 = vperm.slane %v2285, 0
        %v2289 = vmul.f32 %v2283, %v2287
        %s2290 = scalar_lea.vmem %s12, 6
        %v2291 = vld [vmem:[%s2290] sm:$0x1]
        %v2293 = vperm.slane %v2291, 0
        %v2295 = vadd.f32 %v2289, %v2293
        %s2296 = scalar_lea.vmem %s13, 32
        %v2297 = vld [vmem:[%s2296] sm:$0xff]
        %v2298 = vld [vmem:[%s2296 + $0x8] sm:$0xff]
        %v2299 = vld [vmem:[%s2296 + $0x10] sm:$0xff]
        %v2300 = vld [vmem:[%s2296 + $0x18] sm:$0xff]
        %s2301 = scalar_lea.vmem %s14, 1
        %v2302 = vld [vmem:[%s2301] sm:$0x1]
        %v2304 = vperm.slane %v2302, 0
        %v2307 = vsel %vm690, %v2295, 0
        %2309 = vmatpush.msra.mxu0 0.0
        %2310 = vmatpush.msra.mxu0 0.0
        %2311 = vmatpush.msra.mxu0 0.0
        %2312 = vmatpush.msra.mxu0 0.0
        %2313 = vmatpush.msra.mxu0 0.0
        %2314 = vmatpush.msra.mxu0 0.0
        %2315 = vmatpush.msra.mxu0 0.0
        %2316 = vmatpush.msra.mxu0 0.0
        %2317 = vmatpush.msra.mxu0 0.0
        %2318 = vmatpush.msra.mxu0 0.0
        %2319 = vmatpush.msra.mxu0 0.0
        %2320 = vmatpush.msra.mxu0 0.0
        %2321 = vmatpush.msra.mxu0 %v2300
        %2322 = vmatpush.msra.mxu0 %v2299
        %2323 = vmatpush.msra.mxu0 %v2298
        %2324 = vmatpush.msra.mxu0 %v2297
        %2325 = vmatmul.f32.gmra.mxu0 %v2307
        %v2326 = vpop.f32.mrf.mxu0
        %v2327 = vadd.f32 %v2304, %v2326
        %2328 = vdwg.mxu0
        %v2329 = vmax.f32 %v2327, 0.0
        %s2330 = scalar_lea.vmem %s15, 64
        %v2331 = vld [vmem:[%s2330] sm:$0xff]
        %v2332 = vld [vmem:[%s2330 + $0x8] sm:$0xff]
        %v2333 = vld [vmem:[%s2330 + $0x10] sm:$0xff]
        %v2334 = vld [vmem:[%s2330 + $0x18] sm:$0xff]
        %v2335 = vld [vmem:[%s2330 + $0x20] sm:$0xff]
        %v2336 = vld [vmem:[%s2330 + $0x28] sm:$0xff]
        %v2337 = vld [vmem:[%s2330 + $0x30] sm:$0xff]
        %v2338 = vld [vmem:[%s2330 + $0x38] sm:$0xff]
        %s2339 = scalar_lea.vmem %s16, 1
        %v2340 = vld [vmem:[%s2339] sm:$0x1]
        %v2342 = vperm.slane %v2340, 0
        %v2345 = vsel %vm1151, %v2329, 0
        %2347 = vmatpush.msra.mxu0 0.0
        %2348 = vmatpush.msra.mxu0 0.0
        %2349 = vmatpush.msra.mxu0 0.0
        %2350 = vmatpush.msra.mxu0 0.0
        %2351 = vmatpush.msra.mxu0 0.0
        %2352 = vmatpush.msra.mxu0 0.0
        %2353 = vmatpush.msra.mxu0 0.0
        %2354 = vmatpush.msra.mxu0 0.0
        %2355 = vmatpush.msra.mxu0 %v2338
        %2356 = vmatpush.msra.mxu0 %v2337
        %2357 = vmatpush.msra.mxu0 %v2336
        %2358 = vmatpush.msra.mxu0 %v2335
        %2359 = vmatpush.msra.mxu0 %v2334
        %2360 = vmatpush.msra.mxu0 %v2333
        %2361 = vmatpush.msra.mxu0 %v2332
        %2362 = vmatpush.msra.mxu0 %v2331
        %2363 = vmatmul.f32.gmra.mxu0 %v2345
        %v2364 = vpop.f32.mrf.mxu0
        %v2365 = vadd.f32 %v2342, %v2364
        %2366 = vdwg.mxu0
        %v2367 = vadd.f32 %v2295, %v2365
        %v2368 = vsel %vm830, %v2367, 0.0
        %2369 = vadd.xlane.f32.xlu0 %v2368
        %v2370 = vpop.xlane.xlu0 %2369
        %v2371 = vmul.f32 %v2370, %v840
        %v2372 = vsub.f32 %v2367, %v2371
        %v2373 = vmul.f32 %v2372, %v2372
        %v2374 = vsel %vm830, %v2373, 0.0
        %2375 = vadd.xlane.f32.xlu0 %v2374
        %v2376 = vpop.xlane.xlu0 %2375
        %v2377 = vmul.f32 %v2376, %v840
        %v2378 = vadd.f32 %v2377, 1e-05
        %v2379 = vrsqrt.pop %v2378
        %v2380 = vmul.f32 %v2379, %v2378
        %v2381 = vmul.f32 %v2380, %v2379
        %v2382 = vmul.f32 0.5, %v2381
        %v2383 = vsub.f32 1.5, %v2382
        %v2384 = vmul.f32 %v2379, %v2383
        %vm2385 = vweird.f32 %v2378
        %vm2386 = vweird.f32 %v2379
        %vm2387 = vmor %vm2385, %vm2386
        %v2388 = vsel %vm2387, %v2379, %v2384
        %v2389 = vmul.f32 %v2372, %v2388
        %s2390 = scalar_lea.vmem %s11, 7
        %v2391 = vld [vmem:[%s2390] sm:$0x1]
        %v2393 = vperm.slane %v2391, 0
        %v2395 = vmul.f32 %v2389, %v2393
        %s2396 = scalar_lea.vmem %s12, 7
        %v2397 = vld [vmem:[%s2396] sm:$0x1]
        %v2399 = vperm.slane %v2397, 0
        %v2401 = vadd.f32 %v2395, %v2399
        %s2402 = scalar_lea.vmem %s5, 192
        %v2403 = vld [vmem:[%s2402] sm:$0xff]
        %v2404 = vld [vmem:[%s2402 + $0x8] sm:$0xff]
        %v2405 = vld [vmem:[%s2402 + $0x10] sm:$0xff]
        %v2406 = vld [vmem:[%s2402 + $0x18] sm:$0xff]
        %s2407 = scalar_lea.vmem %s6, 6
        %v2408 = vld [vmem:[%s2407] sm:$0x1]
        %s2409 = scalar_lea.vmem %s7, 192
        %v2410 = vld [vmem:[%s2409] sm:$0xff]
        %v2411 = vld [vmem:[%s2409 + $0x8] sm:$0xff]
        %v2412 = vld [vmem:[%s2409 + $0x10] sm:$0xff]
        %v2413 = vld [vmem:[%s2409 + $0x18] sm:$0xff]
        %s2414 = scalar_lea.vmem %s8, 6
        %v2415 = vld [vmem:[%s2414] sm:$0x1]
        %s2416 = scalar_lea.vmem %s9, 192
        %v2417 = vld [vmem:[%s2416] sm:$0xff]
        %v2418 = vld [vmem:[%s2416 + $0x8] sm:$0xff]
        %v2419 = vld [vmem:[%s2416 + $0x10] sm:$0xff]
        %v2420 = vld [vmem:[%s2416 + $0x18] sm:$0xff]
        %s2421 = scalar_lea.vmem %s10, 6
        %v2422 = vld [vmem:[%s2421] sm:$0x1]
        %v2424 = vperm.slane %v2408, 0
        %2426 = vmatpush.msra.mxu0 0.0
        %2427 = vmatpush.msra.mxu0 0.0
        %2428 = vmatpush.msra.mxu0 0.0
        %2429 = vmatpush.msra.mxu0 0.0
        %2430 = vmatpush.msra.mxu0 0.0
        %2431 = vmatpush.msra.mxu0 0.0
        %2432 = vmatpush.msra.mxu0 0.0
        %2433 = vmatpush.msra.mxu0 0.0
        %2434 = vmatpush.msra.mxu0 0.0
        %2435 = vmatpush.msra.mxu0 0.0
        %2436 = vmatpush.msra.mxu0 0.0
        %2437 = vmatpush.msra.mxu0 0.0
        %2438 = vmatpush.msra.mxu0 %v2406
        %2439 = vmatpush.msra.mxu0 %v2405
        %2440 = vmatpush.msra.mxu0 %v2404
        %2441 = vmatpush.msra.mxu0 %v2403
        %2442 = vmatmul.f32.gmra.mxu0 %v1672
        %v2443 = vpop.f32.mrf.mxu0
        %v2444 = vadd.f32 %v2424, %v2443
        %2445 = vmatmul.f32.gmra.mxu0 %v1675
        %v2446 = vpop.f32.mrf.mxu0
        %v2447 = vadd.f32 %v2424, %v2446
        %2448 = vmatmul.f32.gmra.mxu0 %v1678
        %v2449 = vpop.f32.mrf.mxu0
        %v2450 = vadd.f32 %v2424, %v2449
        %2451 = vmatmul.f32.gmra.mxu0 %v1681
        %v2452 = vpop.f32.mrf.mxu0
        %v2453 = vadd.f32 %v2424, %v2452
        %2454 = vdwg.mxu0
        %v2456 = vperm.slane %v2415, 0
        %v2459 = vsel %vm690, %v2401, 0
        %2461 = vmatpush.msra.mxu0 0.0
        %2462 = vmatpush.msra.mxu0 0.0
        %2463 = vmatpush.msra.mxu0 0.0
        %2464 = vmatpush.msra.mxu0 0.0
        %2465 = vmatpush.msra.mxu0 0.0
        %2466 = vmatpush.msra.mxu0 0.0
        %2467 = vmatpush.msra.mxu0 0.0
        %2468 = vmatpush.msra.mxu0 0.0
        %2469 = vmatpush.msra.mxu0 0.0
        %2470 = vmatpush.msra.mxu0 0.0
        %2471 = vmatpush.msra.mxu0 0.0
        %2472 = vmatpush.msra.mxu0 0.0
        %2473 = vmatpush.msra.mxu0 %v2413
        %2474 = vmatpush.msra.mxu0 %v2412
        %2475 = vmatpush.msra.mxu0 %v2411
        %2476 = vmatpush.msra.mxu0 %v2410
        %2477 = vmatmul.f32.gmra.mxu0 %v2459
        %v2478 = vpop.f32.mrf.mxu0
        %v2479 = vadd.f32 %v2456, %v2478
        %2480 = vdwg.mxu0
        %v2482 = vsel %vm690, %v2444, 0
        %v2485 = vsel %vm690, %v2447, 0
        %v2488 = vsel %vm690, %v2450, 0
        %v2491 = vsel %vm690, %v2453, 0
        %v2494 = vsel %vm690, %v2479, 0
        %2496 = vmatpush.xpose.msra.mxu0 0.0
        %2497 = vmatpush.xpose.msra.mxu0 0.0
        %2498 = vmatpush.xpose.msra.mxu0 0.0
        %2499 = vmatpush.xpose.msra.mxu0 0.0
        %2500 = vmatpush.xpose.msra.mxu0 0.0
        %2501 = vmatpush.xpose.msra.mxu0 0.0
        %2502 = vmatpush.xpose.msra.mxu0 0.0
        %2503 = vmatpush.xpose.msra.mxu0 0.0
        %2504 = vmatpush.xpose.msra.mxu0 0.0
        %2505 = vmatpush.xpose.msra.mxu0 0.0
        %2506 = vmatpush.xpose.msra.mxu0 0.0
        %2507 = vmatpush.xpose.msra.mxu0 0.0
        %2508 = vmatpush.xpose.msra.mxu0 0.0
        %2509 = vmatpush.xpose.msra.mxu0 0.0
        %2510 = vmatpush.xpose.msra.mxu0 0.0
        %2511 = vmatpush.xpose.msra.mxu0 %v2494
        %2512 = vmatmul.f32.gmra.mxu0 %v2482
        %v2513 = vpop.f32.mrf.mxu0
        %v2514 = vadd.f32 0.0, %v2513
        %2515 = vmatmul.f32.gmra.mxu0 %v2485
        %v2516 = vpop.f32.mrf.mxu0
        %v2517 = vadd.f32 0.0, %v2516
        %2518 = vmatmul.f32.gmra.mxu0 %v2488
        %v2519 = vpop.f32.mrf.mxu0
        %v2520 = vadd.f32 0.0, %v2519
        %2521 = vmatmul.f32.gmra.mxu0 %v2491
        %v2522 = vpop.f32.mrf.mxu0
        %v2523 = vadd.f32 0.0, %v2522
        %2524 = vdwg.mxu0
        %v2525 = vsel %vm775, %v2514, -inf
        %2526 = vmax.xlane.f32.xlu0 %v2525
        %v2527 = vpop.xlane.xlu0 %2526
        %v2528 = vsel %vm775, %v2517, -inf
        %2529 = vmax.xlane.f32.xlu0 %v2528
        %v2530 = vpop.xlane.xlu0 %2529
        %v2531 = vsel %vm775, %v2520, -inf
        %2532 = vmax.xlane.f32.xlu0 %v2531
        %v2533 = vpop.xlane.xlu0 %2532
        %v2534 = vsel %vm1342, %v2523, -inf
        %2535 = vmax.xlane.f32.xlu0 %v2534
        %v2536 = vpop.xlane.xlu0 %2535
        %v2537 = vsub.f32 %v2514, %v2527
        %v2538 = vsub.f32 %v2517, %v2530
        %v2539 = vsub.f32 %v2520, %v2533
        %v2540 = vsub.f32 %v2523, %v2536
        %v2541 = vmul.f32 %v2537, 1.442695
        %v2542 = vpow.pop %v2541
        %v2543 = vmul.f32 %v2538, 1.442695
        %v2544 = vpow.pop %v2543
        %v2545 = vmul.f32 %v2539, 1.442695
        %v2546 = vpow.pop %v2545
        %v2547 = vmul.f32 %v2540, 1.442695
        %v2548 = vpow.pop %v2547
        %v2549 = vsel %vm775, %v2542, 0.0
        %2550 = vadd.xlane.f32.xlu0 %v2549
        %v2551 = vpop.xlane.xlu0 %2550
        %v2552 = vsel %vm775, %v2544, 0.0
        %2553 = vadd.xlane.f32.xlu0 %v2552
        %v2554 = vpop.xlane.xlu0 %2553
        %v2555 = vsel %vm775, %v2546, 0.0
        %2556 = vadd.xlane.f32.xlu0 %v2555
        %v2557 = vpop.xlane.xlu0 %2556
        %v2558 = vsel %vm1342, %v2548, 0.0
        %2559 = vadd.xlane.f32.xlu0 %v2558
        %v2560 = vpop.xlane.xlu0 %2559
        %2561 = vrot.lane.b32.xlu0 %v2479, 96
        %v2562 = vpop.permute.xlu0 %2561
        %v2564 = vsel %vm775, %v2542, 0
        %v2567 = vsel %vm775, %v2544, 0
        %v2570 = vsel %vm775, %v2546, 0
        %v2573 = vsel %vm775, %v2548, 0
        %v2575 = vsel %vm779, %v2562, 0
        %2577 = vmatpush.msra.mxu0 0.0
        %2578 = vmatpush.msra.mxu0 0.0
        %2579 = vmatpush.msra.mxu0 0.0
        %2580 = vmatpush.msra.mxu0 0.0
        %2581 = vmatpush.msra.mxu0 0.0
        %2582 = vmatpush.msra.mxu0 0.0
        %2583 = vmatpush.msra.mxu0 0.0
        %2584 = vmatpush.msra.mxu0 0.0
        %2585 = vmatpush.msra.mxu0 0.0
        %2586 = vmatpush.msra.mxu0 0.0
        %2587 = vmatpush.msra.mxu0 0.0
        %2588 = vmatpush.msra.mxu0 0.0
        %2589 = vmatpush.msra.mxu0 0.0
        %2590 = vmatpush.msra.mxu0 0.0
        %2591 = vmatpush.msra.mxu0 0.0
        %2592 = vmatpush.msra.mxu0 %v2575
        %2593 = vmatmul.f32.gmra.mxu0 %v2564
        %v2594 = vpop.f32.mrf.mxu0
        %v2595 = vadd.f32 0.0, %v2594
        %2596 = vmatmul.f32.gmra.mxu0 %v2567
        %v2597 = vpop.f32.mrf.mxu0
        %v2598 = vadd.f32 0.0, %v2597
        %2599 = vmatmul.f32.gmra.mxu0 %v2570
        %v2600 = vpop.f32.mrf.mxu0
        %v2601 = vadd.f32 0.0, %v2600
        %2602 = vmatmul.f32.gmra.mxu0 %v2573
        %v2603 = vpop.f32.mrf.mxu0
        %v2604 = vadd.f32 0.0, %v2603
        %2605 = vdwg.mxu0
        %v2606 = vrcp.pop %v2551
        %v2607 = vrcp.pop %v2554
        %v2608 = vrcp.pop %v2557
        %v2609 = vrcp.pop %v2560
        %v2610 = vmul.f32 %v2595, %v2606
        %v2611 = vmul.f32 %v2598, %v2607
        %v2612 = vmul.f32 %v2601, %v2608
        %v2613 = vmul.f32 %v2604, %v2609
        %v2615 = vperm.slane %v2422, 0
        %v2618 = vsel %vm690, %v2610, 0
        %v2621 = vsel %vm690, %v2611, 0
        %v2624 = vsel %vm690, %v2612, 0
        %v2627 = vsel %vm690, %v2613, 0
        %2629 = vmatpush.msra.mxu0 0.0
        %2630 = vmatpush.msra.mxu0 0.0
        %2631 = vmatpush.msra.mxu0 0.0
        %2632 = vmatpush.msra.mxu0 0.0
        %2633 = vmatpush.msra.mxu0 0.0
        %2634 = vmatpush.msra.mxu0 0.0
        %2635 = vmatpush.msra.mxu0 0.0
        %2636 = vmatpush.msra.mxu0 0.0
        %2637 = vmatpush.msra.mxu0 0.0
        %2638 = vmatpush.msra.mxu0 0.0
        %2639 = vmatpush.msra.mxu0 0.0
        %2640 = vmatpush.msra.mxu0 0.0
        %2641 = vmatpush.msra.mxu0 %v2420
        %2642 = vmatpush.msra.mxu0 %v2419
        %2643 = vmatpush.msra.mxu0 %v2418
        %2644 = vmatpush.msra.mxu0 %v2417
        %2645 = vmatmul.f32.gmra.mxu0 %v2618
        %v2646 = vpop.f32.mrf.mxu0
        %v2647 = vadd.f32 %v2615, %v2646
        %2648 = vmatmul.f32.gmra.mxu0 %v2621
        %v2649 = vpop.f32.mrf.mxu0
        %v2650 = vadd.f32 %v2615, %v2649
        %2651 = vmatmul.f32.gmra.mxu0 %v2624
        %v2652 = vpop.f32.mrf.mxu0
        %v2653 = vadd.f32 %v2615, %v2652
        %2654 = vmatmul.f32.gmra.mxu0 %v2627
        %v2655 = vpop.f32.mrf.mxu0
        %v2656 = vadd.f32 %v2615, %v2655
        %2657 = vdwg.mxu0
        %v2658 = vadd.f32 %v1574, %v2647
        %v2659 = vadd.f32 %v1575, %v2650
        %v2660 = vadd.f32 %v1576, %v2653
        %v2661 = vadd.f32 %v1577, %v2656
        %v2662 = vsel %vm690, %v2658, 0.0
        %2663 = vadd.xlane.f32.xlu0 %v2662
        %v2664 = vpop.xlane.xlu0 %2663
        %v2665 = vsel %vm690, %v2659, 0.0
        %2666 = vadd.xlane.f32.xlu0 %v2665
        %v2667 = vpop.xlane.xlu0 %2666
        %v2668 = vsel %vm690, %v2660, 0.0
        %2669 = vadd.xlane.f32.xlu0 %v2668
        %v2670 = vpop.xlane.xlu0 %2669
        %v2671 = vsel %vm1480, %v2661, 0.0
        %2672 = vadd.xlane.f32.xlu0 %v2671
        %v2673 = vpop.xlane.xlu0 %2672
        %v2674 = vmul.f32 %v2664, %v840
        %v2675 = vmul.f32 %v2667, %v840
        %v2676 = vmul.f32 %v2670, %v840
        %v2677 = vmul.f32 %v2673, %v840
        %v2678 = vsub.f32 %v2658, %v2674
        %v2679 = vsub.f32 %v2659, %v2675
        %v2680 = vsub.f32 %v2660, %v2676
        %v2681 = vsub.f32 %v2661, %v2677
        %v2682 = vmul.f32 %v2678, %v2678
        %v2683 = vmul.f32 %v2679, %v2679
        %v2684 = vmul.f32 %v2680, %v2680
        %v2685 = vmul.f32 %v2681, %v2681
        %v2686 = vsel %vm690, %v2682, 0.0
        %2687 = vadd.xlane.f32.xlu0 %v2686
        %v2688 = vpop.xlane.xlu0 %2687
        %v2689 = vsel %vm690, %v2683, 0.0
        %2690 = vadd.xlane.f32.xlu0 %v2689
        %v2691 = vpop.xlane.xlu0 %2690
        %v2692 = vsel %vm690, %v2684, 0.0
        %2693 = vadd.xlane.f32.xlu0 %v2692
        %v2694 = vpop.xlane.xlu0 %2693
        %v2695 = vsel %vm1480, %v2685, 0.0
        %2696 = vadd.xlane.f32.xlu0 %v2695
        %v2697 = vpop.xlane.xlu0 %2696
        %v2698 = vmul.f32 %v2688, %v840
        %v2699 = vmul.f32 %v2691, %v840
        %v2700 = vmul.f32 %v2694, %v840
        %v2701 = vmul.f32 %v2697, %v840
        %v2702 = vadd.f32 %v2698, 1e-05
        %v2703 = vadd.f32 %v2699, 1e-05
        %v2704 = vadd.f32 %v2700, 1e-05
        %v2705 = vadd.f32 %v2701, 1e-05
        %v2706 = vrsqrt.pop %v2702
        %v2707 = vmul.f32 %v2706, %v2702
        %v2708 = vmul.f32 %v2707, %v2706
        %v2709 = vmul.f32 0.5, %v2708
        %v2710 = vsub.f32 1.5, %v2709
        %v2711 = vmul.f32 %v2706, %v2710
        %vm2712 = vweird.f32 %v2702
        %vm2713 = vweird.f32 %v2706
        %vm2714 = vmor %vm2712, %vm2713
        %v2715 = vsel %vm2714, %v2706, %v2711
        %v2716 = vrsqrt.pop %v2703
        %v2717 = vmul.f32 %v2716, %v2703
        %v2718 = vmul.f32 %v2717, %v2716
        %v2719 = vmul.f32 0.5, %v2718
        %v2720 = vsub.f32 1.5, %v2719
        %v2721 = vmul.f32 %v2716, %v2720
        %vm2722 = vweird.f32 %v2703
        %vm2723 = vweird.f32 %v2716
        %vm2724 = vmor %vm2722, %vm2723
        %v2725 = vsel %vm2724, %v2716, %v2721
        %v2726 = vrsqrt.pop %v2704
        %v2727 = vmul.f32 %v2726, %v2704
        %v2728 = vmul.f32 %v2727, %v2726
        %v2729 = vmul.f32 0.5, %v2728
        %v2730 = vsub.f32 1.5, %v2729
        %v2731 = vmul.f32 %v2726, %v2730
        %vm2732 = vweird.f32 %v2704
        %vm2733 = vweird.f32 %v2726
        %vm2734 = vmor %vm2732, %vm2733
        %v2735 = vsel %vm2734, %v2726, %v2731
        %v2736 = vrsqrt.pop %v2705
        %v2737 = vmul.f32 %v2736, %v2705
        %v2738 = vmul.f32 %v2737, %v2736
        %v2739 = vmul.f32 0.5, %v2738
        %v2740 = vsub.f32 1.5, %v2739
        %v2741 = vmul.f32 %v2736, %v2740
        %vm2742 = vweird.f32 %v2705
        %vm2743 = vweird.f32 %v2736
        %vm2744 = vmor %vm2742, %vm2743
        %v2745 = vsel %vm2744, %v2736, %v2741
        %v2746 = vmul.f32 %v2678, %v2715
        %v2747 = vmul.f32 %v2679, %v2725
        %v2748 = vmul.f32 %v2680, %v2735
        %v2749 = vmul.f32 %v2681, %v2745
        %s2750 = scalar_lea.vmem %s11, 8
        %v2751 = vld [vmem:[%s2750] sm:$0x1]
        %v2753 = vperm.slane %v2751, 0
        %v2755 = vmul.f32 %v2746, %v2753
        %v2756 = vmul.f32 %v2747, %v2753
        %v2757 = vmul.f32 %v2748, %v2753
        %v2758 = vmul.f32 %v2749, %v2753
        %s2759 = scalar_lea.vmem %s12, 8
        %v2760 = vld [vmem:[%s2759] sm:$0x1]
        %v2762 = vperm.slane %v2760, 0
        %v2764 = vadd.f32 %v2755, %v2762
        %v2765 = vadd.f32 %v2756, %v2762
        %v2766 = vadd.f32 %v2757, %v2762
        %v2767 = vadd.f32 %v2758, %v2762
        %s2768 = scalar_lea.vmem %s5, 224
        %v2769 = vld [vmem:[%s2768] sm:$0xff]
        %v2770 = vld [vmem:[%s2768 + $0x8] sm:$0xff]
        %v2771 = vld [vmem:[%s2768 + $0x10] sm:$0xff]
        %v2772 = vld [vmem:[%s2768 + $0x18] sm:$0xff]
        %s2773 = scalar_lea.vmem %s6, 7
        %v2774 = vld [vmem:[%s2773] sm:$0x1]
        %s2775 = scalar_lea.vmem %s7, 224
        %v2776 = vld [vmem:[%s2775] sm:$0xff]
        %v2777 = vld [vmem:[%s2775 + $0x8] sm:$0xff]
        %v2778 = vld [vmem:[%s2775 + $0x10] sm:$0xff]
        %v2779 = vld [vmem:[%s2775 + $0x18] sm:$0xff]
        %s2780 = scalar_lea.vmem %s8, 7
        %v2781 = vld [vmem:[%s2780] sm:$0x1]
        %s2782 = scalar_lea.vmem %s9, 224
        %v2783 = vld [vmem:[%s2782] sm:$0xff]
        %v2784 = vld [vmem:[%s2782 + $0x8] sm:$0xff]
        %v2785 = vld [vmem:[%s2782 + $0x10] sm:$0xff]
        %v2786 = vld [vmem:[%s2782 + $0x18] sm:$0xff]
        %s2787 = scalar_lea.vmem %s10, 7
        %v2788 = vld [vmem:[%s2787] sm:$0x1]
        %v2790 = vsel %vm690, %v1882, 0
        %2792 = vmatpush.msra.mxu0 0.0
        %2793 = vmatpush.msra.mxu0 0.0
        %2794 = vmatpush.msra.mxu0 0.0
        %2795 = vmatpush.msra.mxu0 0.0
        %2796 = vmatpush.msra.mxu0 0.0
        %2797 = vmatpush.msra.mxu0 0.0
        %2798 = vmatpush.msra.mxu0 0.0
        %2799 = vmatpush.msra.mxu0 0.0
        %2800 = vmatpush.msra.mxu0 0.0
        %2801 = vmatpush.msra.mxu0 0.0
        %2802 = vmatpush.msra.mxu0 0.0
        %2803 = vmatpush.msra.mxu0 0.0
        %2804 = vmatpush.msra.mxu0 %v2772
        %2805 = vmatpush.msra.mxu0 %v2771
        %2806 = vmatpush.msra.mxu0 %v2770
        %2807 = vmatpush.msra.mxu0 %v2769
        %2808 = vmatmul.f32.gmra.mxu0 %v2790
        %v2809 = vpop.f32.mrf.mxu0
        %v2810 = vadd.f32 %v2774, %v2809
        %2811 = vdwg.mxu0
        %v2813 = vperm.slane %v2781, 0
        %2815 = vmatpush.msra.mxu0 0.0
        %2816 = vmatpush.msra.mxu0 0.0
        %2817 = vmatpush.msra.mxu0 0.0
        %2818 = vmatpush.msra.mxu0 0.0
        %2819 = vmatpush.msra.mxu0 0.0
        %2820 = vmatpush.msra.mxu0 0.0
        %2821 = vmatpush.msra.mxu0 0.0
        %2822 = vmatpush.msra.mxu0 0.0
        %2823 = vmatpush.msra.mxu0 0.0
        %2824 = vmatpush.msra.mxu0 0.0
        %2825 = vmatpush.msra.mxu0 0.0
        %2826 = vmatpush.msra.mxu0 0.0
        %2827 = vmatpush.msra.mxu0 %v2779
        %2828 = vmatpush.msra.mxu0 %v2778
        %2829 = vmatpush.msra.mxu0 %v2777
        %2830 = vmatpush.msra.mxu0 %v2776
        %2831 = vmatmul.f32.gmra.mxu0 %v2459
        %v2832 = vpop.f32.mrf.mxu0
        %v2833 = vadd.f32 %v2813, %v2832
        %2834 = vdwg.mxu0
        %v2836 = vsel %vm690, %v2810, 0
        %v2839 = vsel %vm690, %v2833, 0
        %2841 = vmatpush.xpose.msra.mxu0 0.0
        %2842 = vmatpush.xpose.msra.mxu0 0.0
        %2843 = vmatpush.xpose.msra.mxu0 0.0
        %2844 = vmatpush.xpose.msra.mxu0 0.0
        %2845 = vmatpush.xpose.msra.mxu0 0.0
        %2846 = vmatpush.xpose.msra.mxu0 0.0
        %2847 = vmatpush.xpose.msra.mxu0 0.0
        %2848 = vmatpush.xpose.msra.mxu0 0.0
        %2849 = vmatpush.xpose.msra.mxu0 0.0
        %2850 = vmatpush.xpose.msra.mxu0 0.0
        %2851 = vmatpush.xpose.msra.mxu0 0.0
        %2852 = vmatpush.xpose.msra.mxu0 0.0
        %2853 = vmatpush.xpose.msra.mxu0 0.0
        %2854 = vmatpush.xpose.msra.mxu0 0.0
        %2855 = vmatpush.xpose.msra.mxu0 0.0
        %2856 = vmatpush.xpose.msra.mxu0 %v2839
        %2857 = vmatmul.f32.gmra.mxu0 %v2836
        %v2858 = vpop.f32.mrf.mxu0
        %v2859 = vadd.f32 0.0, %v2858
        %2860 = vdwg.mxu0
        %v2862 = vsel %vm690, %v2764, 0
        %v2865 = vsel %vm690, %v2765, 0
        %v2868 = vsel %vm690, %v2766, 0
        %v2871 = vsel %vm690, %v2767, 0
        %2873 = vmatpush.msra.mxu0 0.0
        %2874 = vmatpush.msra.mxu0 0.0
        %2875 = vmatpush.msra.mxu0 0.0
        %2876 = vmatpush.msra.mxu0 0.0
        %2877 = vmatpush.msra.mxu0 0.0
        %2878 = vmatpush.msra.mxu0 0.0
        %2879 = vmatpush.msra.mxu0 0.0
        %2880 = vmatpush.msra.mxu0 0.0
        %2881 = vmatpush.msra.mxu0 0.0
        %2882 = vmatpush.msra.mxu0 0.0
        %2883 = vmatpush.msra.mxu0 0.0
        %2884 = vmatpush.msra.mxu0 0.0
        %2885 = vmatpush.msra.mxu0 %v2779
        %2886 = vmatpush.msra.mxu0 %v2778
        %2887 = vmatpush.msra.mxu0 %v2777
        %2888 = vmatpush.msra.mxu0 %v2776
        %2889 = vmatmul.f32.gmra.mxu0 %v2862
        %v2890 = vpop.f32.mrf.mxu0
        %v2891 = vadd.f32 %v2813, %v2890
        %2892 = vmatmul.f32.gmra.mxu0 %v2865
        %v2893 = vpop.f32.mrf.mxu0
        %v2894 = vadd.f32 %v2813, %v2893
        %2895 = vmatmul.f32.gmra.mxu0 %v2868
        %v2896 = vpop.f32.mrf.mxu0
        %v2897 = vadd.f32 %v2813, %v2896
        %2898 = vmatmul.f32.gmra.mxu0 %v2871
        %v2899 = vpop.f32.mrf.mxu0
        %v2900 = vadd.f32 %v2813, %v2899
        %2901 = vdwg.mxu0
        %v2903 = vsel %vm690, %v2891, 0
        %v2906 = vsel %vm690, %v2894, 0
        %v2909 = vsel %vm690, %v2897, 0
        %v2912 = vsel %vm690, %v2900, 0
        %2914 = vmatpush.xpose.msra.mxu0 0.0
        %2915 = vmatpush.xpose.msra.mxu0 0.0
        %2916 = vmatpush.xpose.msra.mxu0 0.0
        %2917 = vmatpush.xpose.msra.mxu0 0.0
        %2918 = vmatpush.xpose.msra.mxu0 0.0
        %2919 = vmatpush.xpose.msra.mxu0 0.0
        %2920 = vmatpush.xpose.msra.mxu0 0.0
        %2921 = vmatpush.xpose.msra.mxu0 0.0
        %2922 = vmatpush.xpose.msra.mxu0 0.0
        %2923 = vmatpush.xpose.msra.mxu0 0.0
        %2924 = vmatpush.xpose.msra.mxu0 0.0
        %2925 = vmatpush.xpose.msra.mxu0 0.0
        %2926 = vmatpush.xpose.msra.mxu0 %v2912
        %2927 = vmatpush.xpose.msra.mxu0 %v2909
        %2928 = vmatpush.xpose.msra.mxu0 %v2906
        %2929 = vmatpush.xpose.msra.mxu0 %v2903
        %2930 = vmatmul.f32.gmra.mxu0 %v2836
        %v2931 = vpop.f32.mrf.mxu0
        %v2932 = vadd.f32 0.0, %v2931
        %2933 = vdwg.mxu0
        %v2934 = vsel %vm1744, %v2859, -inf
        %2935 = vmax.xlane.f32.xlu0 %v2934
        %v2936 = vpop.xlane.xlu0 %2935
        %v2937 = vsel %vm1748, %v2932, -inf
        %2938 = vmax.xlane.f32.xlu0 %v2937
        %v2939 = vpop.xlane.xlu0 %2938
        %v2940 = vmax.f32 %v2936, %v2939
        %v2941 = vsub.f32 %v2859, %v2940
        %v2942 = vmul.f32 %v2941, 1.442695
        %v2943 = vpow.pop %v2942
        %v2944 = vsel %vm1744, %v2943, 0.0
        %2945 = vadd.xlane.f32.xlu0 %v2944
        %v2946 = vpop.xlane.xlu0 %2945
        %v2947 = vsub.f32 %v2932, %v2940
        %v2948 = vmul.f32 %v2947, 1.442695
        %v2949 = vpow.pop %v2948
        %v2950 = vsel %vm1748, %v2949, 0.0
        %2951 = vadd.xlane.f32.xlu0 %v2950
        %v2952 = vpop.xlane.xlu0 %2951
        %2953 = vrot.lane.b32.xlu0 %v2891, 96
        %v2954 = vpop.permute.xlu0 %2953
        %2955 = vrot.lane.b32.xlu0 %v2894, 96
        %v2956 = vpop.permute.xlu0 %2955
        %2957 = vrot.lane.b32.xlu0 %v2897, 96
        %v2958 = vpop.permute.xlu0 %2957
        %2959 = vrot.lane.b32.xlu0 %v2900, 96
        %v2960 = vpop.permute.xlu0 %2959
        %v2965 = vsel %vm1017, %v2949, 0
        %v2967 = vsel %vm1021, %v2960, 0
        %2969 = vmatpush.msra.mxu0 0.0
        %2970 = vmatpush.msra.mxu0 0.0
        %2971 = vmatpush.msra.mxu0 0.0
        %2972 = vmatpush.msra.mxu0 0.0
        %2973 = vmatpush.msra.mxu0 0.0
        %2974 = vmatpush.msra.mxu0 0.0
        %2975 = vmatpush.msra.mxu0 0.0
        %2976 = vmatpush.msra.mxu0 0.0
        %2977 = vmatpush.msra.mxu0 0.0
        %2978 = vmatpush.msra.mxu0 0.0
        %2979 = vmatpush.msra.mxu0 0.0
        %2980 = vmatpush.msra.mxu0 0.0
        %2981 = vmatpush.msra.mxu0 %v2967
        %2982 = vmatpush.msra.mxu0 %v2958
        %2983 = vmatpush.msra.mxu0 %v2956
        %2984 = vmatpush.msra.mxu0 %v2954
        %2985 = vmatmul.f32.gmra.mxu0 %v2965
        %v2986 = vpop.f32.mrf.mxu0
        %v2987 = vadd.f32 0.0, %v2986
        %2988 = vdwg.mxu0
        %2989 = vrot.lane.b32.xlu0 %v2833, 96
        %v2990 = vpop.permute.xlu0 %2989
        %v2992 = vsel %vm775, %v2943, 0
        %v2994 = vsel %vm779, %v2990, 0
        %2996 = vmatpush.msra.mxu0 0.0
        %2997 = vmatpush.msra.mxu0 0.0
        %2998 = vmatpush.msra.mxu0 0.0
        %2999 = vmatpush.msra.mxu0 0.0
        %3000 = vmatpush.msra.mxu0 0.0
        %3001 = vmatpush.msra.mxu0 0.0
        %3002 = vmatpush.msra.mxu0 0.0
        %3003 = vmatpush.msra.mxu0 0.0
        %3004 = vmatpush.msra.mxu0 0.0
        %3005 = vmatpush.msra.mxu0 0.0
        %3006 = vmatpush.msra.mxu0 0.0
        %3007 = vmatpush.msra.mxu0 0.0
        %3008 = vmatpush.msra.mxu0 0.0
        %3009 = vmatpush.msra.mxu0 0.0
        %3010 = vmatpush.msra.mxu0 0.0
        %3011 = vmatpush.msra.mxu0 %v2994
        %3012 = vmatmul.f32.gmra.mxu0 %v2992
        %v3013 = vpop.f32.mrf.mxu0
        %v3014 = vadd.f32 %v2987, %v3013
        %3015 = vdwg.mxu0
        %v3016 = vadd.f32 %v2946, %v2952
        %v3017 = vrcp.pop %v3016
        %v3018 = vmul.f32 %v3014, %v3017
        %v3020 = vsel %vm690, %v3018, 0
        %3022 = vmatpush.msra.mxu0 0.0
        %3023 = vmatpush.msra.mxu0 0.0
        %3024 = vmatpush.msra.mxu0 0.0
        %3025 = vmatpush.msra.mxu0 0.0
        %3026 = vmatpush.msra.mxu0 0.0
        %3027 = vmatpush.msra.mxu0 0.0
        %3028 = vmatpush.msra.mxu0 0.0
        %3029 = vmatpush.msra.mxu0 0.0
        %3030 = vmatpush.msra.mxu0 0.0
        %3031 = vmatpush.msra.mxu0 0.0
        %3032 = vmatpush.msra.mxu0 0.0
        %3033 = vmatpush.msra.mxu0 0.0
        %3034 = vmatpush.msra.mxu0 %v2786
        %3035 = vmatpush.msra.mxu0 %v2785
        %3036 = vmatpush.msra.mxu0 %v2784
        %3037 = vmatpush.msra.mxu0 %v2783
        %3038 = vmatmul.f32.gmra.mxu0 %v3020
        %v3039 = vpop.f32.mrf.mxu0
        %v3040 = vadd.f32 %v2788, %v3039
        %3041 = vdwg.mxu0
        %v3042 = vsel %vm1854, %v3040, 0.0
        %3043 = vadd.xlane.f32.xlu0 %v3042
        %v3044 = vpop.xlane.xlu0 %3043
        %v3045 = vmul.f32 %v3044, %v840
        %v3046 = vsub.f32 %v3040, %v3045
        %v3047 = vmul.f32 %v3046, %v3046
        %v3048 = vsel %vm1854, %v3047, 0.0
        %3049 = vadd.xlane.f32.xlu0 %v3048
        %v3050 = vpop.xlane.xlu0 %3049
        %v3051 = vmul.f32 %v3050, %v840
        %v3052 = vadd.f32 %v3051, 1e-05
        %v3053 = vrsqrt.pop %v3052
        %v3054 = vmul.f32 %v3053, %v3052
        %v3055 = vmul.f32 %v3054, %v3053
        %v3056 = vmul.f32 0.5, %v3055
        %v3057 = vsub.f32 1.5, %v3056
        %v3058 = vmul.f32 %v3053, %v3057
        %vm3059 = vweird.f32 %v3052
        %vm3060 = vweird.f32 %v3053
        %vm3061 = vmor %vm3059, %vm3060
        %v3062 = vsel %vm3061, %v3053, %v3058
        %v3063 = vmul.f32 %v3046, %v3062
        %s3064 = scalar_lea.vmem %s11, 9
        %v3065 = vld [vmem:[%s3064] sm:$0x1]
        %v3066 = vmul.f32 %v3063, %v3065
        %s3067 = scalar_lea.vmem %s12, 9
        %v3068 = vld [vmem:[%s3067] sm:$0x1]
        %v3069 = vadd.f32 %v3066, %v3068
        %v3070 = vld [vmem:[%s17] sm:$0xff]
        %v3071 = vld [vmem:[%s17 + $0x8] sm:$0xff]
        %v3072 = vld [vmem:[%s17 + $0x10] sm:$0xff]
        %v3073 = vld [vmem:[%s17 + $0x18] sm:$0xff]
        %v3074 = vld [vmem:[%s18] sm:$0x1]
        %v3076 = vsel %vm690, %v3069, 0
        %3078 = vmatpush.msra.mxu0 0.0
        %3079 = vmatpush.msra.mxu0 0.0
        %3080 = vmatpush.msra.mxu0 0.0
        %3081 = vmatpush.msra.mxu0 0.0
        %3082 = vmatpush.msra.mxu0 0.0
        %3083 = vmatpush.msra.mxu0 0.0
        %3084 = vmatpush.msra.mxu0 0.0
        %3085 = vmatpush.msra.mxu0 0.0
        %3086 = vmatpush.msra.mxu0 0.0
        %3087 = vmatpush.msra.mxu0 0.0
        %3088 = vmatpush.msra.mxu0 0.0
        %3089 = vmatpush.msra.mxu0 0.0
        %3090 = vmatpush.msra.mxu0 %v3073
        %3091 = vmatpush.msra.mxu0 %v3072
        %3092 = vmatpush.msra.mxu0 %v3071
        %3093 = vmatpush.msra.mxu0 %v3070
        %3094 = vmatmul.f32.gmra.mxu0 %v3076
        %v3095 = vpop.f32.mrf.mxu0
        %v3096 = vadd.f32 %v3074, %v3095
        %3097 = vdwg.mxu0
        %vm3098 = vcmask 16384
        %3099 = vst.msk [vmem:[%s607] sm:$0x1] %vm3098, %v3096
        %s3100 = sand.u32 %s450, 1
        %s3101 = scalar_lea.sflag [#allocation3], %s3100
        %s3102 = sand.u32 %s450, 1
        %s3103 = scalar_lea.vmem [#allocation2], %s3102
        // Predicated region
        $region97: #{two_way_transformer.1} parent=95 // pred_check
          %p3104 = pneg %p460
        $region98: #{two_way_transformer.1} parent=95 // pred_check_branch
          %3106 = sbr.rel (%p3104) target = $region100
        $region99: #{two_way_transformer.1} parent=95 // pred_region
          %3108 = vsyncadd %s3101, 0
          %s3109 = scalar_lea.hbm %s19, %s33
          %s3111 = sshll.u32 %s3103, 4
          %s3112 = int_to_ptr.vmem [resolvable:$true] %s3111
          %s3113 = sshll.u32 %s3109, 4
          %s3114 = int_to_ptr.hbm [resolvable:$true] %s3113
          %3116 = dma.vmem_to_hbm [thread:$0]  %s3112, 16, %s3114, %s3101
        $region100: #{two_way_transformer.1} parent=95 // pred_fallthru
          _
      $region96: #{two_way_transformer.1} parent=5 // pred_fallthru
        _
      %p3117 = scmp.le.s32.totalorder 2, %s28
      // Predicated region
      $region101: #{two_way_transformer.1} parent=5 // pred_check
        %p3118 = pneg %p3117
      $region102: #{two_way_transformer.1} parent=5 // pred_check_branch
        %3120 = sbr.rel (%p3118) target = $region104
      $region103: #{two_way_transformer.1} parent=5 // pred_region
        %s3121 = ssub.s32 %s28, 2
        // Predicated region
        $region105: #{two_way_transformer.1} parent=103 // pred_check
          %p3122 = pneg %p466
        $region106: #{two_way_transformer.1} parent=103 // pred_check_branch
          %3124 = sbr.rel (%p3122) target = $region108
        $region107: #{two_way_transformer.1} parent=103 // pred_region
          %s3125 = sand.u32 %s451, 1
          %s3126 = scalar_lea.sflag [#allocation3], %s3125
          %s3127 = sand.u32 %s451, 1
          %s3128 = scalar_lea.vmem [#allocation2], %s3127
          %3130 = dma.done %s3126, 16
        $region108: #{two_way_transformer.1} parent=103 // pred_fallthru
          _
      $region104: #{two_way_transformer.1} parent=5 // pred_fallthru
        _
    $region6: #{two_way_transformer.1} parent=1 // loop_footer
      %s32 = sadd.s32 1, %s28
    $region7: #{two_way_transformer.1} parent=1 // loop_footer_branch
      %27 = sbr.rel target = $region3
    $region8: #{two_way_transformer.1} parent=1 // loop_exit
      _
    %3131 = vsyncpa [#allocation3], 1
    %s3132 = scalar_lea.sflag [#allocation3], 1
    %3133 = vsyncpa %s3132, 1

</llo_original>
